<compile_context>
chip_gen: v7x
topology: tpu7x:2x2x1
jax: 0.10.0
libtpu: 0.0.40
codegen_flags: <defaults>
</compile_context>

<pallas_src>
import math
import functools

import jax
import jax.numpy as jnp
from jax.experimental import pallas as pl
from jax.experimental.pallas import tpu as pltpu


# ----------------------------- Pallas kernels -------------------------------

def encoder_stack_kernel(x_ref, wqkv_ref, wo_ref, w1_ref, w2_ref, vec_ref,
                         o_ref, ctx_scr, *, nhead):
    """Full nn.TransformerEncoder stack for one batch block.

    grid = (batch_blocks, num_layers).  o_ref is the layer-carried activation
    (same output block index across the layer axis => VMEM resident); per-layer
    weights are streamed in via BlockSpec.
    """
    layer = pl.program_id(1)

    @pl.when(layer == 0)
    def _():
        o_ref[...] = x_ref[...]

    x = o_ref[...]                                     # (tB, S, D) f32 carry
    _, S, D = x.shape
    FF = w1_ref.shape[-1]
    hd = D // nhead

    # packed per-layer vectors: [bqkv, bo, ln1g, ln1b, b1, b2, ln2g, ln2b]
    vecs = vec_ref[...]                                # (8, max(3D, FF)) f32
    bqkv = vecs[0:1, :3 * D]
    bo   = vecs[1:2, :D]
    ln1g = vecs[2:3, :D]
    ln1b = vecs[3:4, :D]
    b1   = vecs[4:5, :FF]
    b2   = vecs[5:6, :D]
    ln2g = vecs[6:7, :D]
    ln2b = vecs[7:8, :D]

    x_bf = x.astype(jnp.bfloat16)

    # --- fused QKV projection (1/sqrt(head_dim) already folded into Q) ---
    qkv = jnp.einsum('bsd,de->bse', x_bf, wqkv_ref[...],
                     preferred_element_type=jnp.float32) + bqkv    # (tB, S, 3D)

    # --- attention: static head loop over 128-wide lane-aligned slices; each
    #     head's PV goes straight into a lane slice of the ctx accumulator ---
    for h in range(nhead):
        qh = qkv[:, :, 0 * D + h * hd: 0 * D + (h + 1) * hd].astype(jnp.bfloat16)
        kh = qkv[:, :, 1 * D + h * hd: 1 * D + (h + 1) * hd].astype(jnp.bfloat16)
        vh = qkv[:, :, 2 * D + h * hd: 2 * D + (h + 1) * hd].astype(jnp.bfloat16)
        s = jnp.einsum('bqe,bke->bqk', qh, kh,
                       preferred_element_type=jnp.float32)         # (tB, S, S)
        m = jnp.max(s, axis=-1, keepdims=True)
        e = jnp.exp(s - m)
        inv = pl.reciprocal(jnp.sum(e, axis=-1, keepdims=True), approx=True)
        p = (e * inv).astype(jnp.bfloat16)
        ctx_scr[:, :, h * hd:(h + 1) * hd] = jnp.einsum(
            'bqk,bke->bqe', p, vh, preferred_element_type=jnp.float32)

    # --- out_proj: single full-width K=D matmul ---
    attn = jnp.einsum('bsd,de->bse', ctx_scr[...].astype(jnp.bfloat16),
                      wo_ref[...], preferred_element_type=jnp.float32) + bo

    # --- residual + LayerNorm 1 (post-norm, eps=1e-5, biased variance, f32) ---
    y = x + attn
    mu = jnp.mean(y, axis=-1, keepdims=True)
    var = jnp.mean(jnp.square(y - mu), axis=-1, keepdims=True)
    y = (y - mu) * jax.lax.rsqrt(var + 1e-5) * ln1g + ln1b

    # --- feed forward: relu(y @ W1 + b1) @ W2 + b2 (bf16 matmuls, f32 acc) ---
    h1 = jnp.einsum('bsd,df->bsf', y.astype(jnp.bfloat16), w1_ref[...],
                    preferred_element_type=jnp.float32) + b1
    h1 = jnp.maximum(h1, 0.0)
    ff = jnp.einsum('bsf,fd->bsd', h1.astype(jnp.bfloat16), w2_ref[...],
                    preferred_element_type=jnp.float32) + b2

    # --- residual + LayerNorm 2 ---
    z = y + ff
    mu2 = jnp.mean(z, axis=-1, keepdims=True)
    var2 = jnp.mean(jnp.square(z - mu2), axis=-1, keepdims=True)
    z = (z - mu2) * jax.lax.rsqrt(var2 + 1e-5) * ln2g + ln2b

    o_ref[...] = z                                     # carry to next layer


def projection_kernel(x_ref, w_ref, b_ref, o_ref):
    """Final nn.Linear(dim, vocab): (tm, D) @ (D, V) block, bf16 in / f32 acc."""
    o_ref[...] = (jnp.dot(x_ref[...].astype(jnp.bfloat16), w_ref[...],
                          preferred_element_type=jnp.float32) + b_ref[...])


# ------------------------------- wrappers ------------------------------------

def _parallel_cores():
    """TensorCores addressable by a 'parallel' grid axis on this chip."""
    try:
        kind = jax.devices()[0].device_kind.lower()
    except Exception:
        return 1
    if "v7" in kind or "v4" in kind or "v5p" in kind:
        return 2                       # dual-TC (v7x) / megacore (v4, v5p)
    return 1                           # v5e / v6e: one TC per chip


def encoder_stack(x, lp, nhead):
    B, S, D = x.shape
    L, _, FF = lp['w1'].shape
    P = lp['vec'].shape[-1]

    cores = _parallel_cores()
    block_b = B // cores if (cores > 1 and B % cores == 0) else B
    assert B % block_b == 0

    def w_spec(shape):
        # stacked per-layer parameter: pick this layer's slab, squeeze layer dim
        return pl.BlockSpec((None,) + shape, lambda b, l: (l, 0, 0))

    in_specs = [
        pl.BlockSpec((block_b, S, D), lambda b, l: (b, 0, 0)),   # x: fetched once per b
        w_spec((D, 3 * D)),                                      # wqkv
        w_spec((D, D)),                                          # wo
        w_spec((D, FF)),                                         # w1
        w_spec((FF, D)),                                         # w2
        w_spec((8, P)),                                          # packed biases / LN params
    ]
    out_spec = pl.BlockSpec((block_b, S, D), lambda b, l: (b, 0, 0))

    args = (x, lp['wqkv'], lp['wo'], lp['w1'], lp['w2'], lp['vec'])

    flops = L * B * S * (2 * D * 3 * D + 2 * D * D + 4 * D * FF + 4 * S * D)
    trans = L * B * S * (nhead * S + 4)
    w_bytes_layer = (D * 3 * D + D * D + 2 * D * FF) * 2 + 8 * P * 4
    bytes_acc = (B // block_b) * L * w_bytes_layer + 2 * B * S * D * 4

    # VMEM budget: double-buffered weight blocks + x/out blocks + ctx scratch.
    blk_bytes = block_b * S * D * 4
    est = 2 * w_bytes_layer + 3 * blk_bytes
    vmem_limit = int(min(48 * 2**20, max(32 * 2**20, 2 * est)))

    return pl.pallas_call(
        functools.partial(encoder_stack_kernel, nhead=nhead),
        grid=(B // block_b, L),
        in_specs=in_specs,
        out_specs=out_spec,
        out_shape=jax.ShapeDtypeStruct((B, S, D), jnp.float32),
        scratch_shapes=[pltpu.VMEM((block_b, S, D), jnp.float32)],   # ctx accumulator
        compiler_params=pltpu.CompilerParams(
            dimension_semantics=("parallel", "arbitrary"),
            vmem_limit_bytes=vmem_limit),
        cost_estimate=pl.CostEstimate(flops=int(flops), transcendentals=int(trans),
                                      bytes_accessed=int(bytes_acc)),
    )(*args)


def project(x2d, w, b):
    M, D = x2d.shape
    V = w.shape[1]
    assert V % 128 == 0

    cores = _parallel_cores()
    block_m = M
    if cores > 1 and M % (8 * cores) == 0:
        block_m = M // cores            # keep both TCs busy on v7x / megacore
    while block_m > 1024 and block_m % 16 == 0:
        block_m //= 2                   # cap block size for large M
    block_n = V                         # single lane-dense vocab block (unmasked vst)

    flops = 2 * M * D * V
    bytes_acc = M * D * 4 + D * V * 2 + V * 4 + M * V * 4
    est = 2 * (block_m * D * 4 + D * block_n * 2 + block_n * 4 + block_m * block_n * 4)
    vmem_limit = int(min(48 * 2**20, max(32 * 2**20, 2 * est)))

    return pl.pallas_call(
        projection_kernel,
        grid=(M // block_m,),
        in_specs=[pl.BlockSpec((block_m, D), lambda i: (i, 0)),
                  pl.BlockSpec((D, block_n), lambda i: (0, 0)),
                  pl.BlockSpec((1, block_n), lambda i: (0, 0))],
        out_specs=pl.BlockSpec((block_m, block_n), lambda i: (i, 0)),
        out_shape=jax.ShapeDtypeStruct((M, V), jnp.float32),
        compiler_params=pltpu.CompilerParams(
            dimension_semantics=("parallel",),
            vmem_limit_bytes=vmem_limit),
        cost_estimate=pl.CostEstimate(flops=int(flops), transcendentals=0,
                                      bytes_accessed=int(bytes_acc)),
    )(x2d, w, b)


def transformer_forward(token_indices, params, *, nhead):
    S, B = token_indices.shape
    # Embedding gathers stay in XLA glue.  Build the batch-major (B, S, D)
    # layout directly from the tiny (S, B) index matrix — no activation-sized
    # transpose around the encoder kernel.
    x = params['token_embed'][token_indices.T] \
        + params['position_embed'][jnp.arange(S)][None, :, :]        # (B, S, D)
    x = encoder_stack(x, params['layers'], nhead)                     # (B, S, D)
    D = x.shape[-1]
    logits = project(x.reshape(B * S, D), params['proj_w'], params['proj_b'])
    return logits.reshape(B, S, -1).transpose(1, 0, 2)                # (S, B, V)


# ------------------------- deterministic parameters ---------------------------

def init_params(key, vocab_size, max_len, dim, num_layers, nhead, dim_ff):
    assert dim % 128 == 0 and dim_ff % 128 == 0 and vocab_size % 128 == 0
    assert dim % nhead == 0
    hd = dim // nhead
    scale = 1.0 / math.sqrt(hd)
    P = max(3 * dim, dim_ff)

    keys = jax.random.split(key, 3 + num_layers)
    params = {
        'token_embed': 0.02 * jax.random.normal(keys[0], (vocab_size, dim), jnp.float32),
        'position_embed': 0.02 * jax.random.normal(keys[1], (max_len, dim), jnp.float32),
        # stored pre-transposed (D, V), bf16 for the MXU
        'proj_w': (0.02 * jax.random.normal(keys[2], (dim, vocab_size), jnp.float32)
                   ).astype(jnp.bfloat16),
        'proj_b': jnp.zeros((1, vocab_size), jnp.float32),
    }

    def pad_row(v):
        return jnp.pad(v, (0, P - v.shape[0]))

    wqkv, wo, w1, w2, vec = [], [], [], [], []
    for i in range(num_layers):
        lk = jax.random.split(keys[3 + i], 4)
        w_qkv = 0.02 * jax.random.normal(lk[0], (dim, 3 * dim), jnp.float32)
        b_qkv = jnp.zeros((3 * dim,), jnp.float32)
        # fold the 1/sqrt(head_dim) attention scale into the Q projection
        w_qkv = w_qkv.at[:, :dim].multiply(scale)
        b_qkv = b_qkv.at[:dim].multiply(scale)
        wqkv.append(w_qkv)                                           # (D, 3D) = in_proj.T
        wo.append(0.02 * jax.random.normal(lk[1], (dim, dim), jnp.float32))
        w1.append(0.02 * jax.random.normal(lk[2], (dim, dim_ff), jnp.float32))
        w2.append(0.02 * jax.random.normal(lk[3], (dim_ff, dim), jnp.float32))
        # packed small per-layer vectors: one DMA per layer instead of eight
        vec.append(jnp.stack([
            pad_row(b_qkv),                                  # row 0: bqkv (scaled Q part)
            pad_row(jnp.zeros((dim,), jnp.float32)),         # row 1: out_proj bias
            pad_row(jnp.ones((dim,), jnp.float32)),          # row 2: ln1 gamma
            pad_row(jnp.zeros((dim,), jnp.float32)),         # row 3: ln1 beta
            pad_row(jnp.zeros((dim_ff,), jnp.float32)),      # row 4: linear1 bias
            pad_row(jnp.zeros((dim,), jnp.float32)),         # row 5: linear2 bias
            pad_row(jnp.ones((dim,), jnp.float32)),          # row 6: ln2 gamma
            pad_row(jnp.zeros((dim,), jnp.float32)),         # row 7: ln2 beta
        ]))

    params['layers'] = dict(
        wqkv=jnp.stack(wqkv).astype(jnp.bfloat16),           # (L, D, 3D)
        wo=jnp.stack(wo).astype(jnp.bfloat16),               # (L, D, D)  = out_proj.weight.T
        w1=jnp.stack(w1).astype(jnp.bfloat16),               # (L, D, FF) = linear1.weight.T
        w2=jnp.stack(w2).astype(jnp.bfloat16),               # (L, FF, D) = linear2.weight.T
        vec=jnp.stack(vec),                                  # (L, 8, max(3D, FF)) f32
    )
    return params


# ---------------------------------- main --------------------------------------

if __name__ == "__main__":
    # Small but hardware-friendly shapes: D, FF, V multiples of 128; head_dim=128.
    VOCAB, MAX_LEN, DIM, NLAYERS, NHEAD, DIM_FF = 256, 32, 256, 2, 2, 512
    SEQ, BATCH = 16, 4

    key = jax.random.PRNGKey(0)
    pkey, tkey = jax.random.split(key)
    params = init_params(pkey, VOCAB, MAX_LEN, DIM, NLAYERS, NHEAD, DIM_FF)

    token_indices = jax.random.randint(tkey, (SEQ, BATCH), 0, VOCAB, dtype=jnp.int32)

    fwd = jax.jit(functools.partial(transformer_forward, nhead=NHEAD))
    logits = jax.block_until_ready(fwd(token_indices, params))

    assert logits.shape == (SEQ, BATCH, VOCAB), logits.shape
    assert logits.dtype == jnp.float32
    assert bool(jnp.all(jnp.isfinite(logits)))
    print("KERNEL_OK")
</pallas_src>

<mosaic_0001>
module attributes {stable_mosaic.version = 11 : i64} {
  func.func @encoder_stack_kernel(%arg0: i32, %arg1: i32, %arg2: memref<4x16x256xf32, #tpu.memory_space<vmem>>, %arg3: memref<1x256x768xbf16, #tpu.memory_space<vmem>>, %arg4: memref<1x256x256xbf16, #tpu.memory_space<vmem>>, %arg5: memref<1x256x512xbf16, #tpu.memory_space<vmem>>, %arg6: memref<1x512x256xbf16, #tpu.memory_space<vmem>>, %arg7: memref<1x8x768xf32, #tpu.memory_space<vmem>>, %arg8: memref<4x16x256xf32, #tpu.memory_space<vmem>>, %arg9: memref<4x16x256xf32, #tpu.memory_space<vmem>>) attributes {dimension_semantics = [#tpu.dimension_semantics<parallel>, #tpu.dimension_semantics<arbitrary>], iteration_bounds = array<i64: 1, 2>, scalar_prefetch = 0 : i64, scratch_operands = 1 : i64, tpu.core_type = #tpu.core_type<tc>, window_params = [{transform_indices = @transform_0, window_bounds = array<i64: 4, 16, 256>}, {transform_indices = @transform_1, window_bounds = array<i64: 1, 256, 768>}, {transform_indices = @transform_2, window_bounds = array<i64: 1, 256, 256>}, {transform_indices = @transform_3, window_bounds = array<i64: 1, 256, 512>}, {transform_indices = @transform_4, window_bounds = array<i64: 1, 512, 256>}, {transform_indices = @transform_5, window_bounds = array<i64: 1, 8, 768>}, {transform_indices = @transform_6, window_bounds = array<i64: 4, 16, 256>}]} {
    %c0_i32 = arith.constant 0 : i32
    %0 = arith.cmpi eq, %arg1, %c0_i32 : i32
    %1 = arith.extui %0 : i1 to i32
    %c0_i32_0 = arith.constant 0 : i32
    %2 = arith.cmpi ne, %1, %c0_i32_0 : i32
    scf.if %2 {
      %c0_51 = arith.constant 0 : index
      %c0_52 = arith.constant 0 : index
      %c0_53 = arith.constant 0 : index
      %136 = vector.load %arg2[%c0_51, %c0_52, %c0_53] : memref<4x16x256xf32, #tpu.memory_space<vmem>>, vector<4x16x256xf32>
      %c0_54 = arith.constant 0 : index
      %c0_55 = arith.constant 0 : index
      %c0_56 = arith.constant 0 : index
      %137 = vector.load %arg8[%c0_54, %c0_55, %c0_56] : memref<4x16x256xf32, #tpu.memory_space<vmem>>, vector<4x16x256xf32>
      tpu.vector_store %arg8[%c0_54, %c0_55, %c0_56], %136 {strides = array<i32>} : memref<4x16x256xf32, #tpu.memory_space<vmem>>, vector<4x16x256xf32>,
    } else {
    }
    %c0 = arith.constant 0 : index
    %c0_1 = arith.constant 0 : index
    %c0_2 = arith.constant 0 : index
    %3 = vector.load %arg8[%c0, %c0_1, %c0_2] : memref<4x16x256xf32, #tpu.memory_space<vmem>>, vector<4x16x256xf32>
    %c0_3 = arith.constant 0 : index
    %c0_4 = arith.constant 0 : index
    %c0_5 = arith.constant 0 : index
    %4 = vector.load %arg7[%c0_3, %c0_4, %c0_5] : memref<1x8x768xf32, #tpu.memory_space<vmem>>, vector<1x8x768xf32>
    %5 = vector.shape_cast %4 : vector<1x8x768xf32> to vector<8x768xf32>
    %6 = vector.extract_strided_slice %5 {offsets = [0, 0], sizes = [1, 768], strides = [1, 1]} : vector<8x768xf32> to vector<1x768xf32>
    %7 = vector.extract_strided_slice %5 {offsets = [1, 0], sizes = [1, 256], strides = [1, 1]} : vector<8x768xf32> to vector<1x256xf32>
    %8 = vector.extract_strided_slice %5 {offsets = [2, 0], sizes = [1, 256], strides = [1, 1]} : vector<8x768xf32> to vector<1x256xf32>
    %9 = vector.extract_strided_slice %5 {offsets = [3, 0], sizes = [1, 256], strides = [1, 1]} : vector<8x768xf32> to vector<1x256xf32>
    %10 = vector.extract_strided_slice %5 {offsets = [4, 0], sizes = [1, 512], strides = [1, 1]} : vector<8x768xf32> to vector<1x512xf32>
    %11 = vector.extract_strided_slice %5 {offsets = [5, 0], sizes = [1, 256], strides = [1, 1]} : vector<8x768xf32> to vector<1x256xf32>
    %12 = vector.extract_strided_slice %5 {offsets = [6, 0], sizes = [1, 256], strides = [1, 1]} : vector<8x768xf32> to vector<1x256xf32>
    %13 = vector.extract_strided_slice %5 {offsets = [7, 0], sizes = [1, 256], strides = [1, 1]} : vector<8x768xf32> to vector<1x256xf32>
    %14 = arith.truncf %3 : vector<4x16x256xf32> to vector<4x16x256xbf16>
    %c0_6 = arith.constant 0 : index
    %c0_7 = arith.constant 0 : index
    %c0_8 = arith.constant 0 : index
    %15 = vector.load %arg3[%c0_6, %c0_7, %c0_8] : memref<1x256x768xbf16, #tpu.memory_space<vmem>>, vector<1x256x768xbf16>
    %16 = vector.shape_cast %15 : vector<1x256x768xbf16> to vector<256x768xbf16>
    "tpu.trace_start"() <{level = 10 : i32, message = "bsd,de->bse"}> : () -> ()
    %cst = arith.constant dense<0.000000e+00> : vector<4x16x768xf32>
    %17 = tpu.matmul %14, %16, %cst {dimension_numbers = #tpu.dot_dimension_numbers<[2], [0], [0, 1], [1], [0, 0, 0, 1, 1, 1], [], []>} : vector<4x16x256xbf16>, vector<256x768xbf16>, vector<4x16x768xf32> -> vector<4x16x768xf32>
    "tpu.trace_stop"() : () -> ()
    %18 = vector.shape_cast %6 : vector<1x768xf32> to vector<1x1x768xf32>
    %19 = vector.broadcast %18 : vector<1x1x768xf32> to vector<4x16x768xf32>
    %20 = arith.addf %17, %19 : vector<4x16x768xf32>
    %21 = vector.extract_strided_slice %20 {offsets = [0, 0, 0], sizes = [4, 16, 128], strides = [1, 1, 1]} : vector<4x16x768xf32> to vector<4x16x128xf32>
    %22 = arith.truncf %21 : vector<4x16x128xf32> to vector<4x16x128xbf16>
    %23 = vector.extract_strided_slice %20 {offsets = [0, 0, 256], sizes = [4, 16, 128], strides = [1, 1, 1]} : vector<4x16x768xf32> to vector<4x16x128xf32>
    %24 = arith.truncf %23 : vector<4x16x128xf32> to vector<4x16x128xbf16>
    %25 = vector.extract_strided_slice %20 {offsets = [0, 0, 512], sizes = [4, 16, 128], strides = [1, 1, 1]} : vector<4x16x768xf32> to vector<4x16x128xf32>
    %26 = arith.truncf %25 : vector<4x16x128xf32> to vector<4x16x128xbf16>
    "tpu.trace_start"() <{level = 10 : i32, message = "bqe,bke->bqk"}> : () -> ()
    %cst_9 = arith.constant dense<0.000000e+00> : vector<4x16x16xf32>
    %27 = tpu.matmul %22, %24, %cst_9 {dimension_numbers = #tpu.dot_dimension_numbers<[2], [2], [1], [1], [0, 0, 0, 1, 1, 1], [0], [0]>} : vector<4x16x128xbf16>, vector<4x16x128xbf16>, vector<4x16x16xf32> -> vector<4x16x16xf32>
    "tpu.trace_stop"() : () -> ()
    %cst_10 = arith.constant dense<0xFF800000> : vector<4x16xf32>
    %28 = vector.multi_reduction <maximumf>, %27, %cst_10 [2] : vector<4x16x16xf32> to vector<4x16xf32>
    %29 = vector.shape_cast %28 : vector<4x16xf32> to vector<4x16x1xf32>
    %30 = vector.broadcast %29 : vector<4x16x1xf32> to vector<4x16x16xf32>
    %31 = arith.subf %27, %30 : vector<4x16x16xf32>
    %32 = math.exp %31 : vector<4x16x16xf32>
    %cst_11 = arith.constant dense<0.000000e+00> : vector<4x16xf32>
    %33 = vector.multi_reduction <add>, %32, %cst_11 [2] : vector<4x16x16xf32> to vector<4x16xf32>
    %34 = vector.shape_cast %33 : vector<4x16xf32> to vector<4x16x1xf32>
    %35 = tpu.reciprocal %34 {approx = true} : vector<4x16x1xf32> -> vector<4x16x1xf32>
    %36 = vector.broadcast %35 : vector<4x16x1xf32> to vector<4x16x16xf32>
    %37 = arith.mulf %32, %36 : vector<4x16x16xf32>
    %38 = arith.truncf %37 : vector<4x16x16xf32> to vector<4x16x16xbf16>
    "tpu.trace_start"() <{level = 10 : i32, message = "bqk,bke->bqe"}> : () -> ()
    %cst_12 = arith.constant dense<0.000000e+00> : vector<4x16x128xf32>
    %39 = tpu.matmul %38, %26, %cst_12 {dimension_numbers = #tpu.dot_dimension_numbers<[2], [1], [1], [2], [0, 0, 0, 1, 1, 2], [0], [0]>} : vector<4x16x16xbf16>, vector<4x16x128xbf16>, vector<4x16x128xf32> -> vector<4x16x128xf32>
    "tpu.trace_stop"() : () -> ()
    %c0_13 = arith.constant 0 : index
    %c0_14 = arith.constant 0 : index
    %c0_15 = arith.constant 0 : index
    %40 = vector.load %arg9[%c0_13, %c0_14, %c0_15] : memref<4x16x256xf32, #tpu.memory_space<vmem>>, vector<4x16x128xf32>
    tpu.vector_store %arg9[%c0_13, %c0_14, %c0_15], %39 {strides = array<i32>} : memref<4x16x256xf32, #tpu.memory_space<vmem>>, vector<4x16x128xf32>,
    %41 = vector.extract_strided_slice %20 {offsets = [0, 0, 128], sizes = [4, 16, 128], strides = [1, 1, 1]} : vector<4x16x768xf32> to vector<4x16x128xf32>
    %42 = arith.truncf %41 : vector<4x16x128xf32> to vector<4x16x128xbf16>
    %43 = vector.extract_strided_slice %20 {offsets = [0, 0, 384], sizes = [4, 16, 128], strides = [1, 1, 1]} : vector<4x16x768xf32> to vector<4x16x128xf32>
    %44 = arith.truncf %43 : vector<4x16x128xf32> to vector<4x16x128xbf16>
    %45 = vector.extract_strided_slice %20 {offsets = [0, 0, 640], sizes = [4, 16, 128], strides = [1, 1, 1]} : vector<4x16x768xf32> to vector<4x16x128xf32>
    %46 = arith.truncf %45 : vector<4x16x128xf32> to vector<4x16x128xbf16>
    "tpu.trace_start"() <{level = 10 : i32, message = "bqe,bke->bqk"}> : () -> ()
    %cst_16 = arith.constant dense<0.000000e+00> : vector<4x16x16xf32>
    %47 = tpu.matmul %42, %44, %cst_16 {dimension_numbers = #tpu.dot_dimension_numbers<[2], [2], [1], [1], [0, 0, 0, 1, 1, 1], [0], [0]>} : vector<4x16x128xbf16>, vector<4x16x128xbf16>, vector<4x16x16xf32> -> vector<4x16x16xf32>
    "tpu.trace_stop"() : () -> ()
    %cst_17 = arith.constant dense<0xFF800000> : vector<4x16xf32>
    %48 = vector.multi_reduction <maximumf>, %47, %cst_17 [2] : vector<4x16x16xf32> to vector<4x16xf32>
    %49 = vector.shape_cast %48 : vector<4x16xf32> to vector<4x16x1xf32>
    %50 = vector.broadcast %49 : vector<4x16x1xf32> to vector<4x16x16xf32>
    %51 = arith.subf %47, %50 : vector<4x16x16xf32>
    %52 = math.exp %51 : vector<4x16x16xf32>
    %cst_18 = arith.constant dense<0.000000e+00> : vector<4x16xf32>
    %53 = vector.multi_reduction <add>, %52, %cst_18 [2] : vector<4x16x16xf32> to vector<4x16xf32>
    %54 = vector.shape_cast %53 : vector<4x16xf32> to vector<4x16x1xf32>
    %55 = tpu.reciprocal %54 {approx = true} : vector<4x16x1xf32> -> vector<4x16x1xf32>
    %56 = vector.broadcast %55 : vector<4x16x1xf32> to vector<4x16x16xf32>
    %57 = arith.mulf %52, %56 : vector<4x16x16xf32>
    %58 = arith.truncf %57 : vector<4x16x16xf32> to vector<4x16x16xbf16>
    "tpu.trace_start"() <{level = 10 : i32, message = "bqk,bke->bqe"}> : () -> ()
    %cst_19 = arith.constant dense<0.000000e+00> : vector<4x16x128xf32>
    %59 = tpu.matmul %58, %46, %cst_19 {dimension_numbers = #tpu.dot_dimension_numbers<[2], [1], [1], [2], [0, 0, 0, 1, 1, 2], [0], [0]>} : vector<4x16x16xbf16>, vector<4x16x128xbf16>, vector<4x16x128xf32> -> vector<4x16x128xf32>
    "tpu.trace_stop"() : () -> ()
    %c0_20 = arith.constant 0 : index
    %c0_21 = arith.constant 0 : index
    %c128 = arith.constant 128 : index
    %60 = vector.load %arg9[%c0_20, %c0_21, %c128] : memref<4x16x256xf32, #tpu.memory_space<vmem>>, vector<4x16x128xf32>
    tpu.vector_store %arg9[%c0_20, %c0_21, %c128], %59 {strides = array<i32>} : memref<4x16x256xf32, #tpu.memory_space<vmem>>, vector<4x16x128xf32>,
    %c0_22 = arith.constant 0 : index
    %c0_23 = arith.constant 0 : index
    %c0_24 = arith.constant 0 : index
    %61 = vector.load %arg9[%c0_22, %c0_23, %c0_24] : memref<4x16x256xf32, #tpu.memory_space<vmem>>, vector<4x16x256xf32>
    %62 = arith.truncf %61 : vector<4x16x256xf32> to vector<4x16x256xbf16>
    %c0_25 = arith.constant 0 : index
    %c0_26 = arith.constant 0 : index
    %c0_27 = arith.constant 0 : index
    %63 = vector.load %arg4[%c0_25, %c0_26, %c0_27] : memref<1x256x256xbf16, #tpu.memory_space<vmem>>, vector<1x256x256xbf16>
    %64 = vector.shape_cast %63 : vector<1x256x256xbf16> to vector<256x256xbf16>
    "tpu.trace_start"() <{level = 10 : i32, message = "bsd,de->bse"}> : () -> ()
    %cst_28 = arith.constant dense<0.000000e+00> : vector<4x16x256xf32>
    %65 = tpu.matmul %62, %64, %cst_28 {dimension_numbers = #tpu.dot_dimension_numbers<[2], [0], [0, 1], [1], [0, 0, 0, 1, 1, 1], [], []>} : vector<4x16x256xbf16>, vector<256x256xbf16>, vector<4x16x256xf32> -> vector<4x16x256xf32>
    "tpu.trace_stop"() : () -> ()
    %66 = vector.shape_cast %7 : vector<1x256xf32> to vector<1x1x256xf32>
    %67 = vector.broadcast %66 : vector<1x1x256xf32> to vector<4x16x256xf32>
    %68 = arith.addf %65, %67 : vector<4x16x256xf32>
    %69 = arith.addf %3, %68 : vector<4x16x256xf32>
    %cst_29 = arith.constant dense<0.000000e+00> : vector<4x16xf32>
    %70 = vector.multi_reduction <add>, %69, %cst_29 [2] : vector<4x16x256xf32> to vector<4x16xf32>
    %71 = vector.shape_cast %70 : vector<4x16xf32> to vector<4x16x1xf32>
    %cst_30 = arith.constant 2.560000e+02 : f32
    %72 = vector.broadcast %cst_30 : f32 to vector<4x16x1xf32>
    %73 = arith.divf %71, %72 : vector<4x16x1xf32>
    %74 = vector.broadcast %73 : vector<4x16x1xf32> to vector<4x16x256xf32>
    %75 = arith.subf %69, %74 : vector<4x16x256xf32>
    %76 = arith.mulf %75, %75 : vector<4x16x256xf32>
    %cst_31 = arith.constant dense<0.000000e+00> : vector<4x16xf32>
    %77 = vector.multi_reduction <add>, %76, %cst_31 [2] : vector<4x16x256xf32> to vector<4x16xf32>
    %78 = vector.shape_cast %77 : vector<4x16xf32> to vector<4x16x1xf32>
    %cst_32 = arith.constant 2.560000e+02 : f32
    %79 = vector.broadcast %cst_32 : f32 to vector<4x16x1xf32>
    %80 = arith.divf %78, %79 : vector<4x16x1xf32>
    %81 = vector.broadcast %73 : vector<4x16x1xf32> to vector<4x16x256xf32>
    %82 = arith.subf %69, %81 : vector<4x16x256xf32>
    %cst_33 = arith.constant 9.99999974E-6 : f32
    %83 = vector.broadcast %cst_33 : f32 to vector<4x16x1xf32>
    %84 = arith.addf %80, %83 : vector<4x16x1xf32>
    %85 = math.rsqrt %84 : vector<4x16x1xf32>
    %86 = vector.broadcast %85 : vector<4x16x1xf32> to vector<4x16x256xf32>
    %87 = arith.mulf %82, %86 : vector<4x16x256xf32>
    %88 = vector.shape_cast %8 : vector<1x256xf32> to vector<1x1x256xf32>
    %89 = vector.broadcast %88 : vector<1x1x256xf32> to vector<4x16x256xf32>
    %90 = arith.mulf %87, %89 : vector<4x16x256xf32>
    %91 = vector.shape_cast %9 : vector<1x256xf32> to vector<1x1x256xf32>
    %92 = vector.broadcast %91 : vector<1x1x256xf32> to vector<4x16x256xf32>
    %93 = arith.addf %90, %92 : vector<4x16x256xf32>
    %94 = arith.truncf %93 : vector<4x16x256xf32> to vector<4x16x256xbf16>
    %c0_34 = arith.constant 0 : index
    %c0_35 = arith.constant 0 : index
    %c0_36 = arith.constant 0 : index
    %95 = vector.load %arg5[%c0_34, %c0_35, %c0_36] : memref<1x256x512xbf16, #tpu.memory_space<vmem>>, vector<1x256x512xbf16>
    %96 = vector.shape_cast %95 : vector<1x256x512xbf16> to vector<256x512xbf16>
    "tpu.trace_start"() <{level = 10 : i32, message = "bsd,df->bsf"}> : () -> ()
    %cst_37 = arith.constant dense<0.000000e+00> : vector<4x16x512xf32>
    %97 = tpu.matmul %94, %96, %cst_37 {dimension_numbers = #tpu.dot_dimension_numbers<[2], [0], [0, 1], [1], [0, 0, 0, 1, 1, 1], [], []>} : vector<4x16x256xbf16>, vector<256x512xbf16>, vector<4x16x512xf32> -> vector<4x16x512xf32>
    "tpu.trace_stop"() : () -> ()
    %98 = vector.shape_cast %10 : vector<1x512xf32> to vector<1x1x512xf32>
    %99 = vector.broadcast %98 : vector<1x1x512xf32> to vector<4x16x512xf32>
    %100 = arith.addf %97, %99 : vector<4x16x512xf32>
    %cst_38 = arith.constant 0.000000e+00 : f32
    %101 = vector.broadcast %cst_38 : f32 to vector<4x16x512xf32>
    %102 = arith.maximumf %100, %101 : vector<4x16x512xf32>
    %103 = arith.truncf %102 : vector<4x16x512xf32> to vector<4x16x512xbf16>
    %c0_39 = arith.constant 0 : index
    %c0_40 = arith.constant 0 : index
    %c0_41 = arith.constant 0 : index
    %104 = vector.load %arg6[%c0_39, %c0_40, %c0_41] : memref<1x512x256xbf16, #tpu.memory_space<vmem>>, vector<1x512x256xbf16>
    %105 = vector.shape_cast %104 : vector<1x512x256xbf16> to vector<512x256xbf16>
    "tpu.trace_start"() <{level = 10 : i32, message = "bsf,fd->bsd"}> : () -> ()
    %cst_42 = arith.constant dense<0.000000e+00> : vector<4x16x256xf32>
    %106 = tpu.matmul %103, %105, %cst_42 {dimension_numbers = #tpu.dot_dimension_numbers<[2], [0], [0, 1], [1], [0, 0, 0, 1, 1, 1], [], []>} : vector<4x16x512xbf16>, vector<512x256xbf16>, vector<4x16x256xf32> -> vector<4x16x256xf32>
    "tpu.trace_stop"() : () -> ()
    %107 = vector.shape_cast %11 : vector<1x256xf32> to vector<1x1x256xf32>
    %108 = vector.broadcast %107 : vector<1x1x256xf32> to vector<4x16x256xf32>
    %109 = arith.addf %106, %108 : vector<4x16x256xf32>
    %110 = arith.addf %93, %109 : vector<4x16x256xf32>
    %cst_43 = arith.constant dense<0.000000e+00> : vector<4x16xf32>
    %111 = vector.multi_reduction <add>, %110, %cst_43 [2] : vector<4x16x256xf32> to vector<4x16xf32>
    %112 = vector.shape_cast %111 : vector<4x16xf32> to vector<4x16x1xf32>
    %cst_44 = arith.constant 2.560000e+02 : f32
    %113 = vector.broadcast %cst_44 : f32 to vector<4x16x1xf32>
    %114 = arith.divf %112, %113 : vector<4x16x1xf32>
    %115 = vector.broadcast %114 : vector<4x16x1xf32> to vector<4x16x256xf32>
    %116 = arith.subf %110, %115 : vector<4x16x256xf32>
    %117 = arith.mulf %116, %116 : vector<4x16x256xf32>
    %cst_45 = arith.constant dense<0.000000e+00> : vector<4x16xf32>
    %118 = vector.multi_reduction <add>, %117, %cst_45 [2] : vector<4x16x256xf32> to vector<4x16xf32>
    %119 = vector.shape_cast %118 : vector<4x16xf32> to vector<4x16x1xf32>
    %cst_46 = arith.constant 2.560000e+02 : f32
    %120 = vector.broadcast %cst_46 : f32 to vector<4x16x1xf32>
    %121 = arith.divf %119, %120 : vector<4x16x1xf32>
    %122 = vector.broadcast %114 : vector<4x16x1xf32> to vector<4x16x256xf32>
    %123 = arith.subf %110, %122 : vector<4x16x256xf32>
    %cst_47 = arith.constant 9.99999974E-6 : f32
    %124 = vector.broadcast %cst_47 : f32 to vector<4x16x1xf32>
    %125 = arith.addf %121, %124 : vector<4x16x1xf32>
    %126 = math.rsqrt %125 : vector<4x16x1xf32>
    %127 = vector.broadcast %126 : vector<4x16x1xf32> to vector<4x16x256xf32>
    %128 = arith.mulf %123, %127 : vector<4x16x256xf32>
    %129 = vector.shape_cast %12 : vector<1x256xf32> to vector<1x1x256xf32>
    %130 = vector.broadcast %129 : vector<1x1x256xf32> to vector<4x16x256xf32>
    %131 = arith.mulf %128, %130 : vector<4x16x256xf32>
    %132 = vector.shape_cast %13 : vector<1x256xf32> to vector<1x1x256xf32>
    %133 = vector.broadcast %132 : vector<1x1x256xf32> to vector<4x16x256xf32>
    %134 = arith.addf %131, %133 : vector<4x16x256xf32>
    %c0_48 = arith.constant 0 : index
    %c0_49 = arith.constant 0 : index
    %c0_50 = arith.constant 0 : index
    %135 = vector.load %arg8[%c0_48, %c0_49, %c0_50] : memref<4x16x256xf32, #tpu.memory_space<vmem>>, vector<4x16x256xf32>
    tpu.vector_store %arg8[%c0_48, %c0_49, %c0_50], %134 {strides = array<i32>} : memref<4x16x256xf32, #tpu.memory_space<vmem>>, vector<4x16x256xf32>,
    return
  }
  func.func @transform_0(%arg0: i32, %arg1: i32) -> (i32, i32, i32) {
    %c0_i32 = arith.constant 0 : i32
    %c0_i32_0 = arith.constant 0 : i32
    %c0_i32_1 = arith.constant 0 : i32
    return %arg0, %c0_i32, %c0_i32_0 : i32, i32, i32
  }
  func.func @transform_1(%arg0: i32, %arg1: i32) -> (i32, i32, i32) {
    %c0_i32 = arith.constant 0 : i32
    %c0_i32_0 = arith.constant 0 : i32
    %c0_i32_1 = arith.constant 0 : i32
    return %arg1, %c0_i32, %c0_i32_0 : i32, i32, i32
  }
  func.func @transform_2(%arg0: i32, %arg1: i32) -> (i32, i32, i32) {
    %c0_i32 = arith.constant 0 : i32
    %c0_i32_0 = arith.constant 0 : i32
    %c0_i32_1 = arith.constant 0 : i32
    return %arg1, %c0_i32, %c0_i32_0 : i32, i32, i32
  }
  func.func @transform_3(%arg0: i32, %arg1: i32) -> (i32, i32, i32) {
    %c0_i32 = arith.constant 0 : i32
    %c0_i32_0 = arith.constant 0 : i32
    %c0_i32_1 = arith.constant 0 : i32
    return %arg1, %c0_i32, %c0_i32_0 : i32, i32, i32
  }
  func.func @transform_4(%arg0: i32, %arg1: i32) -> (i32, i32, i32) {
    %c0_i32 = arith.constant 0 : i32
    %c0_i32_0 = arith.constant 0 : i32
    %c0_i32_1 = arith.constant 0 : i32
    return %arg1, %c0_i32, %c0_i32_0 : i32, i32, i32
  }
  func.func @transform_5(%arg0: i32, %arg1: i32) -> (i32, i32, i32) {
    %c0_i32 = arith.constant 0 : i32
    %c0_i32_0 = arith.constant 0 : i32
    %c0_i32_1 = arith.constant 0 : i32
    return %arg1, %c0_i32, %c0_i32_0 : i32, i32, i32
  }
  func.func @transform_6(%arg0: i32, %arg1: i32) -> (i32, i32, i32) {
    %c0_i32 = arith.constant 0 : i32
    %c0_i32_0 = arith.constant 0 : i32
    %c0_i32_1 = arith.constant 0 : i32
    return %arg0, %c0_i32, %c0_i32_0 : i32, i32, i32
  }
}

module attributes {stable_mosaic.version = 11 : i64} {
  func.func @projection_kernel(%arg0: i32, %arg1: memref<64x256xf32, #tpu.memory_space<vmem>>, %arg2: memref<256x256xbf16, #tpu.memory_space<vmem>>, %arg3: memref<1x256xf32, #tpu.memory_space<vmem>>, %arg4: memref<64x256xf32, #tpu.memory_space<vmem>>) attributes {dimension_semantics = [#tpu.dimension_semantics<parallel>], iteration_bounds = array<i64: 1>, scalar_prefetch = 0 : i64, scratch_operands = 0 : i64, tpu.core_type = #tpu.core_type<tc>, window_params = [{transform_indices = @transform_0, window_bounds = array<i64: 64, 256>}, {pipeline_mode = #tpu.pipeline_mode<synchronous>, transform_indices = @transform_1, window_bounds = array<i64: 256, 256>}, {pipeline_mode = #tpu.pipeline_mode<synchronous>, transform_indices = @transform_2, window_bounds = array<i64: 1, 256>}, {transform_indices = @transform_3, window_bounds = array<i64: 64, 256>}]} {
    %c0 = arith.constant 0 : index
    %c0_0 = arith.constant 0 : index
    %0 = vector.load %arg1[%c0, %c0_0] : memref<64x256xf32, #tpu.memory_space<vmem>>, vector<64x256xf32>
    %1 = arith.truncf %0 : vector<64x256xf32> to vector<64x256xbf16>
    %c0_1 = arith.constant 0 : index
    %c0_2 = arith.constant 0 : index
    %2 = vector.load %arg2[%c0_1, %c0_2] : memref<256x256xbf16, #tpu.memory_space<vmem>>, vector<256x256xbf16>
    %cst = arith.constant dense<0.000000e+00> : vector<64x256xf32>
    %3 = tpu.matmul %1, %2, %cst {dimension_numbers = #tpu.dot_dimension_numbers<[1], [0], [0], [1], [0, 0, 1, 1], [], []>} : vector<64x256xbf16>, vector<256x256xbf16>, vector<64x256xf32> -> vector<64x256xf32>
    %c0_3 = arith.constant 0 : index
    %c0_4 = arith.constant 0 : index
    %4 = vector.load %arg3[%c0_3, %c0_4] : memref<1x256xf32, #tpu.memory_space<vmem>>, vector<1x256xf32>
    %5 = vector.broadcast %4 : vector<1x256xf32> to vector<64x256xf32>
    %6 = arith.addf %3, %5 : vector<64x256xf32>
    %c0_5 = arith.constant 0 : index
    %c0_6 = arith.constant 0 : index
    %7 = vector.load %arg4[%c0_5, %c0_6] : memref<64x256xf32, #tpu.memory_space<vmem>>, vector<64x256xf32>
    tpu.vector_store %arg4[%c0_5, %c0_6], %6 {strides = array<i32>} : memref<64x256xf32, #tpu.memory_space<vmem>>, vector<64x256xf32>,
    return
  }
  func.func @transform_0(%arg0: i32) -> (i32, i32) {
    %c0_i32 = arith.constant 0 : i32
    %c0_i32_0 = arith.constant 0 : i32
    return %arg0, %c0_i32 : i32, i32
  }
  func.func @transform_1(%arg0: i32) -> (i32, i32) {
    %c0_i32 = arith.constant 0 : i32
    %c0_i32_0 = arith.constant 0 : i32
    %c0_i32_1 = arith.constant 0 : i32
    return %c0_i32, %c0_i32_0 : i32, i32
  }
  func.func @transform_2(%arg0: i32) -> (i32, i32) {
    %c0_i32 = arith.constant 0 : i32
    %c0_i32_0 = arith.constant 0 : i32
    %c0_i32_1 = arith.constant 0 : i32
    return %c0_i32, %c0_i32_0 : i32, i32
  }
  func.func @transform_3(%arg0: i32) -> (i32, i32) {
    %c0_i32 = arith.constant 0 : i32
    %c0_i32_0 = arith.constant 0 : i32
    return %arg0, %c0_i32 : i32, i32
  }
}

</mosaic_0001>

<llo_original>
// kernel: transformer_forward.3
$region0: #{transformer_forward.3}
  #allocation0 [shape = 'u32[]', space=smem, size = 0x4, offset = 0x4, fixed_abs, tag = 'smem constant byte address 0x4 - core index']
  #allocation1 [shape = 'u32[144,128]{1,0:T(1,128)}', space=vmem, size = 0x12000, scoped, tag = 'internal scratch']
  %s0 = inlined_call_operand.vmem [shape: f32[64,256], index: 0, kind: input, shape index: {}]
  %s1 = inlined_call_operand.vmem [shape: bf16[256,256], index: 1, kind: input, shape index: {}]
  %s2 = inlined_call_operand.vmem [shape: f32[1,256], index: 2, kind: input, shape index: {}]
  %s3 = inlined_call_operand.vmem [shape: f32[64,256], index: 3, kind: output, shape index: {}]
  %s4 = sld [smem:[#allocation0]]
  $region22: #{transformer_forward.3} parent=0
    _
  %s6 = ssub.s32 1, %s4
  %s7 = scalar_select 0, %s6, %s4
  // Predicated region
  $region2: #{transformer_forward.3} parent=0 // pred_check
    _
  $region3: #{transformer_forward.3} parent=0 // pred_check_branch
    %9 = sbr.rel (0) target = $region5
  $region4: #{transformer_forward.3} parent=0 // pred_region
    _
  $region5: #{transformer_forward.3} parent=0 // pred_fallthru
    _
  // Predicated region
  $region6: #{transformer_forward.3} parent=0 // pred_check
    _
  $region7: #{transformer_forward.3} parent=0 // pred_check_branch
    %11 = sbr.rel (0) target = $region9
  $region8: #{transformer_forward.3} parent=0 // pred_region
    _
  $region9: #{transformer_forward.3} parent=0 // pred_fallthru
    _
  // Predicated region
  $region10: #{transformer_forward.3} parent=0 // pred_check
    _
  $region11: #{transformer_forward.3} parent=0 // pred_check_branch
    %13 = sbr.rel (0) target = $region13
  $region12: #{transformer_forward.3} parent=0 // pred_region
    _
  $region13: #{transformer_forward.3} parent=0 // pred_fallthru
    _
  %v14 = vld [vmem:[%s0] sm:$0xff]
  %v15 = vld [vmem:[%s0 + $0x8] sm:$0xff]
  %v16 = vld [vmem:[%s0 + $0x10] sm:$0xff]
  %v17 = vld [vmem:[%s0 + $0x18] sm:$0xff]
  %v18 = vld [vmem:[%s0 + $0x20] sm:$0xff]
  %v19 = vld [vmem:[%s0 + $0x28] sm:$0xff]
  %v20 = vld [vmem:[%s0 + $0x30] sm:$0xff]
  %v21 = vld [vmem:[%s0 + $0x38] sm:$0xff]
  %v22 = vld [vmem:[%s0 + $0x40] sm:$0xff]
  %v23 = vld [vmem:[%s0 + $0x48] sm:$0xff]
  %v24 = vld [vmem:[%s0 + $0x50] sm:$0xff]
  %v25 = vld [vmem:[%s0 + $0x58] sm:$0xff]
  %v26 = vld [vmem:[%s0 + $0x60] sm:$0xff]
  %v27 = vld [vmem:[%s0 + $0x68] sm:$0xff]
  %v28 = vld [vmem:[%s0 + $0x70] sm:$0xff]
  %v29 = vld [vmem:[%s0 + $0x78] sm:$0xff]
  %v30 = vpack.c.bf16 %v16, %v14
  %v31 = vpack.c.bf16 %v17, %v15
  %v32 = vpack.c.bf16 %v20, %v18
  %v33 = vpack.c.bf16 %v21, %v19
  %v34 = vpack.c.bf16 %v24, %v22
  %v35 = vpack.c.bf16 %v25, %v23
  %v36 = vpack.c.bf16 %v28, %v26
  %v37 = vpack.c.bf16 %v29, %v27
  %v38 = vld [vmem:[%s1] sm:$0xff]
  %v39 = vld [vmem:[%s1 + $0x8] sm:$0xff]
  %v40 = vld [vmem:[%s1 + $0x10] sm:$0xff]
  %v41 = vld [vmem:[%s1 + $0x18] sm:$0xff]
  %v42 = vld [vmem:[%s1 + $0x20] sm:$0xff]
  %v43 = vld [vmem:[%s1 + $0x28] sm:$0xff]
  %v44 = vld [vmem:[%s1 + $0x30] sm:$0xff]
  %v45 = vld [vmem:[%s1 + $0x38] sm:$0xff]
  %v46 = vld [vmem:[%s1 + $0x40] sm:$0xff]
  %v47 = vld [vmem:[%s1 + $0x48] sm:$0xff]
  %v48 = vld [vmem:[%s1 + $0x50] sm:$0xff]
  %v49 = vld [vmem:[%s1 + $0x58] sm:$0xff]
  %v50 = vld [vmem:[%s1 + $0x60] sm:$0xff]
  %v51 = vld [vmem:[%s1 + $0x68] sm:$0xff]
  %v52 = vld [vmem:[%s1 + $0x70] sm:$0xff]
  %v53 = vld [vmem:[%s1 + $0x78] sm:$0xff]
  %v54 = vld [vmem:[%s1 + $0x80] sm:$0xff]
  %v55 = vld [vmem:[%s1 + $0x88] sm:$0xff]
  %v56 = vld [vmem:[%s1 + $0x90] sm:$0xff]
  %v57 = vld [vmem:[%s1 + $0x98] sm:$0xff]
  %v58 = vld [vmem:[%s1 + $0xa0] sm:$0xff]
  %v59 = vld [vmem:[%s1 + $0xa8] sm:$0xff]
  %v60 = vld [vmem:[%s1 + $0xb0] sm:$0xff]
  %v61 = vld [vmem:[%s1 + $0xb8] sm:$0xff]
  %v62 = vld [vmem:[%s1 + $0xc0] sm:$0xff]
  %v63 = vld [vmem:[%s1 + $0xc8] sm:$0xff]
  %v64 = vld [vmem:[%s1 + $0xd0] sm:$0xff]
  %v65 = vld [vmem:[%s1 + $0xd8] sm:$0xff]
  %v66 = vld [vmem:[%s1 + $0xe0] sm:$0xff]
  %v67 = vld [vmem:[%s1 + $0xe8] sm:$0xff]
  %v68 = vld [vmem:[%s1 + $0xf0] sm:$0xff]
  %v69 = vld [vmem:[%s1 + $0xf8] sm:$0xff]
  %v70 = vld [vmem:[%s2] sm:$0x3]
  %v72 = vlaneseq
  %v73 = vshrl.u32 %v72, 7
  %v74 = vsub.s32 0, %v73
  %v75 = vrot.slane %v70, %v74
  %v76 = vlaneseq
  %v77 = vshrl.u32 %v76, 7
  %v78 = vsub.s32 1, %v77
  %v79 = vrot.slane %v70, %v78
  %v114 = vunpack.c.l.b16 %v38
  %v115 = vunpack.c.h.b16 %v38
  %v116 = vunpack.c.l.b16 %v39
  %v117 = vunpack.c.h.b16 %v39
  %v118 = vunpack.c.l.b16 %v40
  %v119 = vunpack.c.h.b16 %v40
  %v120 = vunpack.c.l.b16 %v41
  %v121 = vunpack.c.h.b16 %v41
  %v122 = vunpack.c.l.b16 %v42
  %v123 = vunpack.c.h.b16 %v42
  %v124 = vunpack.c.l.b16 %v43
  %v125 = vunpack.c.h.b16 %v43
  %v126 = vunpack.c.l.b16 %v44
  %v127 = vunpack.c.h.b16 %v44
  %v128 = vunpack.c.l.b16 %v45
  %v129 = vunpack.c.h.b16 %v45
  %v130 = vunpack.c.l.b16 %v46
  %v131 = vunpack.c.h.b16 %v46
  %v132 = vunpack.c.l.b16 %v47
  %v133 = vunpack.c.h.b16 %v47
  %v134 = vunpack.c.l.b16 %v48
  %v135 = vunpack.c.h.b16 %v48
  %v136 = vunpack.c.l.b16 %v49
  %v137 = vunpack.c.h.b16 %v49
  %v138 = vunpack.c.l.b16 %v50
  %v139 = vunpack.c.h.b16 %v50
  %v140 = vunpack.c.l.b16 %v51
  %v141 = vunpack.c.h.b16 %v51
  %v142 = vunpack.c.l.b16 %v52
  %v143 = vunpack.c.h.b16 %v52
  %v144 = vunpack.c.l.b16 %v53
  %v145 = vunpack.c.h.b16 %v53
  %v146 = vunpack.c.l.b16 %v54
  %v147 = vunpack.c.h.b16 %v54
  %v148 = vunpack.c.l.b16 %v55
  %v149 = vunpack.c.h.b16 %v55
  %v150 = vunpack.c.l.b16 %v56
  %v151 = vunpack.c.h.b16 %v56
  %v152 = vunpack.c.l.b16 %v57
  %v153 = vunpack.c.h.b16 %v57
  %v154 = vunpack.c.l.b16 %v58
  %v155 = vunpack.c.h.b16 %v58
  %v156 = vunpack.c.l.b16 %v59
  %v157 = vunpack.c.h.b16 %v59
  %v158 = vunpack.c.l.b16 %v60
  %v159 = vunpack.c.h.b16 %v60
  %v160 = vunpack.c.l.b16 %v61
  %v161 = vunpack.c.h.b16 %v61
  %v162 = vunpack.c.l.b16 %v62
  %v163 = vunpack.c.h.b16 %v62
  %v164 = vunpack.c.l.b16 %v63
  %v165 = vunpack.c.h.b16 %v63
  %v166 = vunpack.c.l.b16 %v64
  %v167 = vunpack.c.h.b16 %v64
  %v168 = vunpack.c.l.b16 %v65
  %v169 = vunpack.c.h.b16 %v65
  %v170 = vunpack.c.l.b16 %v66
  %v171 = vunpack.c.h.b16 %v66
  %v172 = vunpack.c.l.b16 %v67
  %v173 = vunpack.c.h.b16 %v67
  %v174 = vunpack.c.l.b16 %v68
  %v175 = vunpack.c.h.b16 %v68
  %v176 = vunpack.c.l.b16 %v69
  %v177 = vunpack.c.h.b16 %v69
  %v178 = vpack.c.b16 %v116, %v114
  %v179 = vpack.c.b16 %v117, %v115
  %v180 = vpack.c.b16 %v120, %v118
  %v181 = vpack.c.b16 %v121, %v119
  %v182 = vpack.c.b16 %v124, %v122
  %v183 = vpack.c.b16 %v125, %v123
  %v184 = vpack.c.b16 %v128, %v126
  %v185 = vpack.c.b16 %v129, %v127
  %v186 = vpack.c.b16 %v132, %v130
  %v187 = vpack.c.b16 %v133, %v131
  %v188 = vpack.c.b16 %v136, %v134
  %v189 = vpack.c.b16 %v137, %v135
  %v190 = vpack.c.b16 %v140, %v138
  %v191 = vpack.c.b16 %v141, %v139
  %v192 = vpack.c.b16 %v144, %v142
  %v193 = vpack.c.b16 %v145, %v143
  %v194 = vpack.c.b16 %v148, %v146
  %v195 = vpack.c.b16 %v149, %v147
  %v196 = vpack.c.b16 %v152, %v150
  %v197 = vpack.c.b16 %v153, %v151
  %v198 = vpack.c.b16 %v156, %v154
  %v199 = vpack.c.b16 %v157, %v155
  %v200 = vpack.c.b16 %v160, %v158
  %v201 = vpack.c.b16 %v161, %v159
  %v202 = vpack.c.b16 %v164, %v162
  %v203 = vpack.c.b16 %v165, %v163
  %v204 = vpack.c.b16 %v168, %v166
  %v205 = vpack.c.b16 %v169, %v167
  %v206 = vpack.c.b16 %v172, %v170
  %v207 = vpack.c.b16 %v173, %v171
  %v208 = vpack.c.b16 %v176, %v174
  %v209 = vpack.c.b16 %v177, %v175
  %242 = vmatprep.subr.bf16.mxu0 %v179
  %243 = vmatpush1.bf16.msra.mxu0 %v178
  %244 = vmatprep.subr.bf16.mxu0 %v181
  %245 = vmatpush1.bf16.msra.mxu0 %v180
  %246 = vmatprep.subr.bf16.mxu0 %v183
  %247 = vmatpush1.bf16.msra.mxu0 %v182
  %248 = vmatprep.subr.bf16.mxu0 %v185
  %249 = vmatpush1.bf16.msra.mxu0 %v184
  %250 = vmatprep.subr.bf16.mxu0 %v187
  %251 = vmatpush1.bf16.msra.mxu0 %v186
  %252 = vmatprep.subr.bf16.mxu0 %v189
  %253 = vmatpush1.bf16.msra.mxu0 %v188
  %254 = vmatprep.subr.bf16.mxu0 %v191
  %255 = vmatpush1.bf16.msra.mxu0 %v190
  %256 = vmatprep.subr.bf16.mxu0 %v193
  %257 = vmatpush1.bf16.msra.mxu0 %v192
  %258 = vmatprep.subr.bf16.mxu0 %v195
  %259 = vmatpush1.bf16.msra.mxu0 %v194
  %260 = vmatprep.subr.bf16.mxu0 %v197
  %261 = vmatpush1.bf16.msra.mxu0 %v196
  %262 = vmatprep.subr.bf16.mxu0 %v199
  %263 = vmatpush1.bf16.msra.mxu0 %v198
  %264 = vmatprep.subr.bf16.mxu0 %v201
  %265 = vmatpush1.bf16.msra.mxu0 %v200
  %266 = vmatprep.subr.bf16.mxu0 %v203
  %267 = vmatpush1.bf16.msra.mxu0 %v202
  %268 = vmatprep.subr.bf16.mxu0 %v205
  %269 = vmatpush1.bf16.msra.mxu0 %v204
  %270 = vmatprep.subr.bf16.mxu0 %v207
  %271 = vmatpush1.bf16.msra.mxu0 %v206
  %272 = vmatprep.subr.bf16.mxu0 %v209
  %273 = vmatpush1.bf16.msra.mxu0 %v208
  %274 = vmatprep.mubr.bf16.mxu0 %v31
  %275 = vmatmul.mubr.bf16.gmra.mrb[0].mxu0 %v30
  %v276 = vpop.f32.mrb[0].mxu0
  %v277 = vadd.f32 %v75, %v276
  %v278 = vpop.f32.mrb[0].mxu0
  %v279 = vadd.f32 %v79, %v278
  %v280 = vpop.f32.mrb[0].mxu0
  %v281 = vadd.f32 %v75, %v280
  %v282 = vpop.f32.mrb[0].mxu0
  %v283 = vadd.f32 %v79, %v282
  %284 = vmatprep.mubr.bf16.mxu0 %v33
  %285 = vmatmul.mubr.bf16.gmra.mrb[0].mxu0 %v32
  %v286 = vpop.f32.mrb[0].mxu0
  %v287 = vadd.f32 %v75, %v286
  %v288 = vpop.f32.mrb[0].mxu0
  %v289 = vadd.f32 %v79, %v288
  %v290 = vpop.f32.mrb[0].mxu0
  %v291 = vadd.f32 %v75, %v290
  %v292 = vpop.f32.mrb[0].mxu0
  %v293 = vadd.f32 %v79, %v292
  %294 = vmatprep.mubr.bf16.mxu0 %v35
  %295 = vmatmul.mubr.bf16.gmra.mrb[0].mxu0 %v34
  %v296 = vpop.f32.mrb[0].mxu0
  %v297 = vadd.f32 %v75, %v296
  %v298 = vpop.f32.mrb[0].mxu0
  %v299 = vadd.f32 %v79, %v298
  %v300 = vpop.f32.mrb[0].mxu0
  %v301 = vadd.f32 %v75, %v300
  %v302 = vpop.f32.mrb[0].mxu0
  %v303 = vadd.f32 %v79, %v302
  %304 = vmatprep.mubr.bf16.mxu0 %v37
  %305 = vmatmul.mubr.bf16.gmra.mrb[0].mxu0 %v36
  %v306 = vpop.f32.mrb[0].mxu0
  %v307 = vadd.f32 %v75, %v306
  %v308 = vpop.f32.mrb[0].mxu0
  %v309 = vadd.f32 %v79, %v308
  %v310 = vpop.f32.mrb[0].mxu0
  %v311 = vadd.f32 %v75, %v310
  %v312 = vpop.f32.mrb[0].mxu0
  %v313 = vadd.f32 %v79, %v312
  %314 = vdwg.mxu0
  %315 = vst [vmem:[%s3] sm:$0xff] %v277
  %316 = vst [vmem:[%s3 + $0x8] sm:$0xff] %v279
  %317 = vst [vmem:[%s3 + $0x10] sm:$0xff] %v281
  %318 = vst [vmem:[%s3 + $0x18] sm:$0xff] %v283
  %319 = vst [vmem:[%s3 + $0x20] sm:$0xff] %v287
  %320 = vst [vmem:[%s3 + $0x28] sm:$0xff] %v289
  %321 = vst [vmem:[%s3 + $0x30] sm:$0xff] %v291
  %322 = vst [vmem:[%s3 + $0x38] sm:$0xff] %v293
  %323 = vst [vmem:[%s3 + $0x40] sm:$0xff] %v297
  %324 = vst [vmem:[%s3 + $0x48] sm:$0xff] %v299
  %325 = vst [vmem:[%s3 + $0x50] sm:$0xff] %v301
  %326 = vst [vmem:[%s3 + $0x58] sm:$0xff] %v303
  %327 = vst [vmem:[%s3 + $0x60] sm:$0xff] %v307
  %328 = vst [vmem:[%s3 + $0x68] sm:$0xff] %v309
  %329 = vst [vmem:[%s3 + $0x70] sm:$0xff] %v311
  %330 = vst [vmem:[%s3 + $0x78] sm:$0xff] %v313
  // Predicated region
  $region14: #{transformer_forward.3} parent=0 // pred_check
    _
  $region15: #{transformer_forward.3} parent=0 // pred_check_branch
    %332 = sbr.rel (0) target = $region17
  $region16: #{transformer_forward.3} parent=0 // pred_region
    _
  $region17: #{transformer_forward.3} parent=0 // pred_fallthru
    _
  // Predicated region
  $region18: #{transformer_forward.3} parent=0 // pred_check
    _
  $region19: #{transformer_forward.3} parent=0 // pred_check_branch
    %334 = sbr.rel (0) target = $region21
  $region20: #{transformer_forward.3} parent=0 // pred_region
    _
  $region21: #{transformer_forward.3} parent=0 // pred_fallthru
    _

// kernel: transformer_forward.2
$region0: #{transformer_forward.2}
  #allocation0 [shape = 'u32[]', space=smem, size = 0x4, offset = 0x4, fixed_abs, tag = 'smem constant byte address 0x4 - core index']
  #allocation1 [shape = 'u32[144,128]{1,0:T(1,128)}', space=vmem, size = 0x12000, scoped, tag = 'internal scratch']
  #allocation2 [shape = 'f32[4,16,256]{2,1,0:T(8,128)}', space=vmem, size = 0x10000, scoped, tag = 'scratch operand']
  %s0 = inlined_call_operand.vmem [shape: f32[4,16,256], index: 0, kind: input, shape index: {}]
  %s1 = inlined_call_operand.vmem [shape: bf16[2,256,768], index: 1, kind: input, shape index: {}]
  %s2 = inlined_call_operand.hbm [shape: bf16[2,256,256], index: 2, kind: input, shape index: {}]
  %s3 = inlined_call_operand.hbm [shape: bf16[2,256,512], index: 3, kind: input, shape index: {}]
  %s4 = inlined_call_operand.hbm [shape: bf16[2,512,256], index: 4, kind: input, shape index: {}]
  %s5 = inlined_call_operand.vmem [shape: f32[2,8,768], index: 5, kind: input, shape index: {}]
  %s6 = inlined_call_operand.vmem [shape: f32[4,16,256], index: 6, kind: output, shape index: {}]
  %s7 = sld [smem:[#allocation0]]
  $region73: #{transformer_forward.2} parent=0
    _
  %s9 = ssub.s32 1, %s7
  %s10 = scalar_select 0, %s9, %s7
  $region1: #{transformer_forward.2} parent=0
    #allocation3 [shape = 'u8[262144]{0}', space=vmem, size = 0x40000, scoped, tag = 'input window, operand 2']
    #allocation4 [shape = 's32[2]{0}', space=sflag, size = 0x8, scoped, tag = 'scoped memory for transformer_forward.2']
    #allocation5 [shape = 'u8[524288]{0}', space=vmem, size = 0x80000, scoped, tag = 'input window, operand 3']
    #allocation6 [shape = 's32[2]{0}', space=sflag, size = 0x8, scoped, tag = 'scoped memory for transformer_forward.2']
    #allocation7 [shape = 'u8[524288]{0}', space=vmem, size = 0x80000, scoped, tag = 'input window, operand 4']
    %11 = vsyncpa [#allocation4], 0
    %s12 = scalar_lea.sflag [#allocation4], 1
    %13 = vsyncpa %s12, 0
    %14 = vsyncpa [#allocation6], 0
    %s15 = scalar_lea.sflag [#allocation6], 1
    %16 = vsyncpa %s15, 0
    loop: start=0, step=1, limit=4
    $region2: #{transformer_forward.2} parent=1 // loop_pre_header
      _
    $region3: #{transformer_forward.2} parent=1 // loop_header
      %s18 = sphi 0, %s22
      %p19 = scmp.ge.s32.totalorder %s18, 4
      %s25 = sphi 0, %s37
      %s26 = sphi 0, %s33
      %s27 = sphi 0, %s25
      %s28 = sphi 0, %s26
      %s29 = sphi 0, %s27
      %s30 = sphi 0, %s28
      %s40 = sphi 0, %s42
      %s43 = sphi 0, %s40
      %s44 = sphi 0, %s43
      %s60 = sphi 0, %s44
      %s66 = sphi 0, %s68
      %s69 = sphi 0, %s66
      %s70 = sphi 0, %s69
      %s86 = sphi 0, %s70
      %s92 = sphi 0, %s94
      %s95 = sphi 0, %s92
      %s96 = sphi 0, %s95
      %s112 = sphi 0, %s96
      %s118 = sphi 0, %s120
      %s121 = sphi 0, %s118
      %s122 = sphi 0, %s121
      %s138 = sphi 0, %s122
      %s144 = sphi 0, %s146
      %s147 = sphi 0, %s144
      %s148 = sphi 0, %s147
      %s164 = sphi 0, %s148
      %s170 = sphi 0, %s172
      %s173 = sphi 0, %s170
      %s174 = sphi 0, %s173
      %s190 = sphi 0, %s174
      %s196 = sphi 0, %s198
      %s199 = sphi 0, %s196
      %s200 = sphi 0, %s199
      %s216 = sphi 0, %s200
    $region4: #{transformer_forward.2} parent=1 // loop_header_branch
      %21 = sbr.rel (%p19) target = $region8
    $region5: #{transformer_forward.2} parent=1 // loop_body
      %s23 = ssub.s32 %s18, 1
      %s24 = ssub.s32 %s18, 2
      %s31 = sadd.s32 1, %s26
      %p32 = scmp.ge.s32.totalorder %s31, 2
      %s33 = scalar_select %p32, 0, %s31
      %s34 = sadd.s32 1, %s25
      %s35 = scalar_select %p32, %s34, %s25
      %p36 = scmp.ge.s32.totalorder %s35, 1
      %s37 = scalar_select %p36, 0, %s35
      %s38 = ssub.s32 %s25, %s37
      %p39 = scmp.eq.s32.totalorder %s38, 0
      %s41 = sadd.s32 %s40, 1
      %s42 = scalar_select %p39, %s40, %s41
      %p45 = pneg %p39
      %p46 = scmp.eq.s32.totalorder %s18, 1
      %p47 = por %p45, %p46
      %p48 = scmp.ne.s32.totalorder %s40, %s43
      %p49 = scmp.eq.s32.totalorder %s18, 0
      %p50 = por %p48, %p49
      %p51 = scmp.ne.s32.totalorder %s40, %s43
      %p52 = scmp.eq.s32.totalorder %s23, 1
      %p53 = por %p51, %p52
      %p54 = scmp.ne.s32.totalorder %s43, %s44
      %p55 = scmp.eq.s32.totalorder %s23, 0
      %p56 = por %p54, %p55
      %p57 = scmp.ne.s32.totalorder %s43, %s44
      %p58 = scmp.eq.s32.totalorder %s24, 1
      %p59 = por %p57, %p58
      %p61 = scmp.ne.s32.totalorder %s44, %s60
      %p62 = scmp.eq.s32.totalorder %s24, 0
      %p63 = por %p61, %p62
      %s64 = ssub.s32 %s26, %s33
      %p65 = scmp.eq.s32.totalorder %s64, 0
      %s67 = sadd.s32 %s66, 1
      %s68 = scalar_select %p65, %s66, %s67
      %p71 = pneg %p65
      %p72 = scmp.eq.s32.totalorder %s18, 1
      %p73 = por %p71, %p72
      %p74 = scmp.ne.s32.totalorder %s66, %s69
      %p75 = scmp.eq.s32.totalorder %s18, 0
      %p76 = por %p74, %p75
      %p77 = scmp.ne.s32.totalorder %s66, %s69
      %p78 = scmp.eq.s32.totalorder %s23, 1
      %p79 = por %p77, %p78
      %p80 = scmp.ne.s32.totalorder %s69, %s70
      %p81 = scmp.eq.s32.totalorder %s23, 0
      %p82 = por %p80, %p81
      %p83 = scmp.ne.s32.totalorder %s69, %s70
      %p84 = scmp.eq.s32.totalorder %s24, 1
      %p85 = por %p83, %p84
      %p87 = scmp.ne.s32.totalorder %s70, %s86
      %p88 = scmp.eq.s32.totalorder %s24, 0
      %p89 = por %p87, %p88
      %s90 = ssub.s32 %s26, %s33
      %p91 = scmp.eq.s32.totalorder %s90, 0
      %s93 = sadd.s32 %s92, 1
      %s94 = scalar_select %p91, %s92, %s93
      %p97 = pneg %p91
      %p98 = scmp.eq.s32.totalorder %s18, 1
      %p99 = por %p97, %p98
      %p100 = scmp.ne.s32.totalorder %s92, %s95
      %p101 = scmp.eq.s32.totalorder %s18, 0
      %p102 = por %p100, %p101
      %p103 = scmp.ne.s32.totalorder %s92, %s95
      %p104 = scmp.eq.s32.totalorder %s23, 1
      %p105 = por %p103, %p104
      %p106 = scmp.ne.s32.totalorder %s95, %s96
      %p107 = scmp.eq.s32.totalorder %s23, 0
      %p108 = por %p106, %p107
      %p109 = scmp.ne.s32.totalorder %s95, %s96
      %p110 = scmp.eq.s32.totalorder %s24, 1
      %p111 = por %p109, %p110
      %p113 = scmp.ne.s32.totalorder %s96, %s112
      %p114 = scmp.eq.s32.totalorder %s24, 0
      %p115 = por %p113, %p114
      %s116 = ssub.s32 %s26, %s33
      %p117 = scmp.eq.s32.totalorder %s116, 0
      %s119 = sadd.s32 %s118, 1
      %s120 = scalar_select %p117, %s118, %s119
      %p123 = pneg %p117
      %p124 = scmp.eq.s32.totalorder %s18, 1
      %p125 = por %p123, %p124
      %p126 = scmp.ne.s32.totalorder %s118, %s121
      %p127 = scmp.eq.s32.totalorder %s18, 0
      %p128 = por %p126, %p127
      %p129 = scmp.ne.s32.totalorder %s118, %s121
      %p130 = scmp.eq.s32.totalorder %s23, 1
      %p131 = por %p129, %p130
      %p132 = scmp.ne.s32.totalorder %s121, %s122
      %p133 = scmp.eq.s32.totalorder %s23, 0
      %p134 = por %p132, %p133
      %p135 = scmp.ne.s32.totalorder %s121, %s122
      %p136 = scmp.eq.s32.totalorder %s24, 1
      %p137 = por %p135, %p136
      %p139 = scmp.ne.s32.totalorder %s122, %s138
      %p140 = scmp.eq.s32.totalorder %s24, 0
      %p141 = por %p139, %p140
      %s142 = ssub.s32 %s26, %s33
      %p143 = scmp.eq.s32.totalorder %s142, 0
      %s145 = sadd.s32 %s144, 1
      %s146 = scalar_select %p143, %s144, %s145
      %p149 = pneg %p143
      %p150 = scmp.eq.s32.totalorder %s18, 1
      %p151 = por %p149, %p150
      %p152 = scmp.ne.s32.totalorder %s144, %s147
      %p153 = scmp.eq.s32.totalorder %s18, 0
      %p154 = por %p152, %p153
      %p155 = scmp.ne.s32.totalorder %s144, %s147
      %p156 = scmp.eq.s32.totalorder %s23, 1
      %p157 = por %p155, %p156
      %p158 = scmp.ne.s32.totalorder %s147, %s148
      %p159 = scmp.eq.s32.totalorder %s23, 0
      %p160 = por %p158, %p159
      %p161 = scmp.ne.s32.totalorder %s147, %s148
      %p162 = scmp.eq.s32.totalorder %s24, 1
      %p163 = por %p161, %p162
      %p165 = scmp.ne.s32.totalorder %s148, %s164
      %p166 = scmp.eq.s32.totalorder %s24, 0
      %p167 = por %p165, %p166
      %s168 = ssub.s32 %s26, %s33
      %p169 = scmp.eq.s32.totalorder %s168, 0
      %s171 = sadd.s32 %s170, 1
      %s172 = scalar_select %p169, %s170, %s171
      %p175 = pneg %p169
      %p176 = scmp.eq.s32.totalorder %s18, 1
      %p177 = por %p175, %p176
      %p178 = scmp.ne.s32.totalorder %s170, %s173
      %p179 = scmp.eq.s32.totalorder %s18, 0
      %p180 = por %p178, %p179
      %p181 = scmp.ne.s32.totalorder %s170, %s173
      %p182 = scmp.eq.s32.totalorder %s23, 1
      %p183 = por %p181, %p182
      %p184 = scmp.ne.s32.totalorder %s173, %s174
      %p185 = scmp.eq.s32.totalorder %s23, 0
      %p186 = por %p184, %p185
      %p187 = scmp.ne.s32.totalorder %s173, %s174
      %p188 = scmp.eq.s32.totalorder %s24, 1
      %p189 = por %p187, %p188
      %p191 = scmp.ne.s32.totalorder %s174, %s190
      %p192 = scmp.eq.s32.totalorder %s24, 0
      %p193 = por %p191, %p192
      %s194 = ssub.s32 %s25, %s37
      %p195 = scmp.eq.s32.totalorder %s194, 0
      %s197 = sadd.s32 %s196, 1
      %s198 = scalar_select %p195, %s196, %s197
      %p201 = pneg %p195
      %p202 = scmp.eq.s32.totalorder %s18, 1
      %p203 = por %p201, %p202
      %p204 = scmp.ne.s32.totalorder %s196, %s199
      %p205 = scmp.eq.s32.totalorder %s18, 0
      %p206 = por %p204, %p205
      %p207 = scmp.ne.s32.totalorder %s196, %s199
      %p208 = scmp.eq.s32.totalorder %s23, 1
      %p209 = por %p207, %p208
      %p210 = scmp.ne.s32.totalorder %s199, %s200
      %p211 = scmp.eq.s32.totalorder %s23, 0
      %p212 = por %p210, %p211
      %p213 = scmp.ne.s32.totalorder %s199, %s200
      %p214 = scmp.eq.s32.totalorder %s24, 1
      %p215 = por %p213, %p214
      %p217 = scmp.ne.s32.totalorder %s200, %s216
      %p218 = scmp.eq.s32.totalorder %s24, 0
      %p219 = por %p217, %p218
      %p220 = scmp.le.s32.totalorder 1, %s18
      %p221 = scmp.lt.s32.totalorder %s18, 3
      %p222 = pnand %p220, %p221
      %p223 = pneg %p222
      // Predicated region
      $region9: #{transformer_forward.2} parent=5 // pred_check
        _
      $region10: #{transformer_forward.2} parent=5 // pred_check_branch
        %225 = sbr.rel (%p222) target = $region12
      $region11: #{transformer_forward.2} parent=5 // pred_region
        %s226 = ssub.s32 %s18, 1
        // Predicated region
        $region13: #{transformer_forward.2} parent=11 // pred_check
          %p227 = pneg %p56
        $region14: #{transformer_forward.2} parent=11 // pred_check_branch
          %229 = sbr.rel (%p227) target = $region16
        $region15: #{transformer_forward.2} parent=11 // pred_region
          %s230 = smul.u32 4, %s27
          %p231 = scmp.lt.s32.totalorder %s230, 3
          %s232 = scalar_select %p231, %s230, 3
          %s233 = smul.addr %s232, 4
          %s234 = smul.addr %s233, 8
          %s235 = scalar_lea.vmem %s0, %s234
          %s236 = smul.u32 4, %s27
        $region16: #{transformer_forward.2} parent=11 // pred_fallthru
          _
      $region12: #{transformer_forward.2} parent=5 // pred_fallthru
        _
      %p237 = scmp.lt.s32.totalorder %s18, 2
      // Predicated region
      $region17: #{transformer_forward.2} parent=5 // pred_check
        %p238 = pneg %p237
      $region18: #{transformer_forward.2} parent=5 // pred_check_branch
        %240 = sbr.rel (%p238) target = $region20
      $region19: #{transformer_forward.2} parent=5 // pred_region
        // Predicated region
        $region21: #{transformer_forward.2} parent=19 // pred_check
          %p241 = pneg %p76
        $region22: #{transformer_forward.2} parent=19 // pred_check_branch
          %243 = sbr.rel (%p241) target = $region24
        $region23: #{transformer_forward.2} parent=19 // pred_region
          %p244 = scmp.lt.s32.totalorder %s26, 1
          %s245 = scalar_select %p244, %s26, 1
          %s246 = smul.addr %s245, 192
          %s247 = smul.addr %s246, 4
          %s248 = scalar_lea.vmem %s1, %s247
        $region24: #{transformer_forward.2} parent=19 // pred_fallthru
          _
        // Predicated region
        $region25: #{transformer_forward.2} parent=19 // pred_check
          %p249 = pneg %p102
        $region26: #{transformer_forward.2} parent=19 // pred_check_branch
          %251 = sbr.rel (%p249) target = $region28
        $region27: #{transformer_forward.2} parent=19 // pred_region
          %s252 = sand.u32 %s92, 1
          %s253 = scalar_lea.sflag [#allocation4], %s252
          %s254 = sand.u32 %s92, 1
          %s255 = smul.addr %s254, 256
          %s256 = scalar_lea.vmem [#allocation3], %s255
          %s258 = ssub.s32 4096, 4096
          %259 = vsyncadd %s253, %s258
          %s260 = smul.addr %s26, 64
          %s261 = smul.addr %s260, 64
          %s262 = scalar_lea.hbm %s2, %s261
          %s263 = sshll.u32 %s256, 4
          %s264 = int_to_ptr.vmem [resolvable:$true] %s263
          %269 = dma.hbm_to_vmem [thread:$0]  %s262, 4096, %s264, %s253, 128, 128, 8
        $region28: #{transformer_forward.2} parent=19 // pred_fallthru
          _
        // Predicated region
        $region29: #{transformer_forward.2} parent=19 // pred_check
          %p270 = pneg %p128
        $region30: #{transformer_forward.2} parent=19 // pred_check_branch
          %272 = sbr.rel (%p270) target = $region32
        $region31: #{transformer_forward.2} parent=19 // pred_region
          %s273 = sand.u32 %s18, 1
          %s274 = scalar_lea.sflag [#allocation6], %s273
          %s275 = sand.u32 %s118, 1
          %s276 = smul.addr %s275, 512
          %s277 = scalar_lea.vmem [#allocation5], %s276
          %s279 = ssub.s32 8192, 8192
          %280 = vsyncadd %s274, %s279
          %s281 = smul.addr %s26, 128
          %s282 = smul.addr %s281, 64
          %s283 = scalar_lea.hbm %s3, %s282
          %s284 = sshll.u32 %s277, 4
          %s285 = int_to_ptr.vmem [resolvable:$true] %s284
          %290 = dma.hbm_to_vmem [thread:$0]  %s283, 8192, %s285, %s274, 256, 256, 16
        $region32: #{transformer_forward.2} parent=19 // pred_fallthru
          _
        // Predicated region
        $region33: #{transformer_forward.2} parent=19 // pred_check
          %p291 = pneg %p154
        $region34: #{transformer_forward.2} parent=19 // pred_check_branch
          %293 = sbr.rel (%p291) target = $region36
        $region35: #{transformer_forward.2} parent=19 // pred_region
          %s294 = sand.u32 %s18, 1
          %s295 = scalar_lea.sflag [#allocation6], %s294
          %s296 = sand.u32 %s144, 1
          %s297 = smul.addr %s296, 512
          %s298 = scalar_lea.vmem [#allocation7], %s297
          %s300 = ssub.s32 8192, 8192
          %301 = vsyncadd %s295, %s300
          %s302 = smul.addr %s26, 128
          %s303 = smul.addr %s302, 64
          %s304 = scalar_lea.hbm %s4, %s303
          %s305 = sshll.u32 %s298, 4
          %s306 = int_to_ptr.vmem [resolvable:$true] %s305
          %311 = dma.hbm_to_vmem [thread:$0]  %s304, 8192, %s306, %s295, 128, 128, 8
        $region36: #{transformer_forward.2} parent=19 // pred_fallthru
          _
        // Predicated region
        $region37: #{transformer_forward.2} parent=19 // pred_check
          %p312 = pneg %p180
        $region38: #{transformer_forward.2} parent=19 // pred_check_branch
          %314 = sbr.rel (%p312) target = $region40
        $region39: #{transformer_forward.2} parent=19 // pred_region
          %p315 = scmp.lt.s32.totalorder %s26, 1
          %s316 = scalar_select %p315, %s26, 1
          %s317 = smul.addr %s316, 6
          %s318 = smul.addr %s317, 8
          %s319 = scalar_lea.vmem %s5, %s318
        $region40: #{transformer_forward.2} parent=19 // pred_fallthru
          _
      $region20: #{transformer_forward.2} parent=5 // pred_fallthru
        _
      %p320 = scmp.le.s32.totalorder 1, %s18
      %p321 = scmp.lt.s32.totalorder %s18, 3
      %p322 = pnand %p320, %p321
      %p323 = pneg %p322
      // Predicated region
      $region41: #{transformer_forward.2} parent=5 // pred_check
        _
      $region42: #{transformer_forward.2} parent=5 // pred_check_branch
        %325 = sbr.rel (%p322) target = $region44
      $region43: #{transformer_forward.2} parent=5 // pred_region
        %s326 = ssub.s32 %s18, 1
        %s327 = sand.u32 %s95, 1
        %s328 = scalar_lea.sflag [#allocation4], %s327
        %s329 = sand.u32 %s95, 1
        %s330 = smul.addr %s329, 256
        %s331 = scalar_lea.vmem [#allocation3], %s330
        // Predicated region
        $region45: #{transformer_forward.2} parent=43 // pred_check
          %p332 = pneg %p108
        $region46: #{transformer_forward.2} parent=43 // pred_check_branch
          %334 = sbr.rel (%p332) target = $region48
        $region47: #{transformer_forward.2} parent=43 // pred_region
          %335 = dma.done %s328, 4096
        $region48: #{transformer_forward.2} parent=43 // pred_fallthru
          _
        %s336 = sand.u32 %s23, 1
        %s337 = scalar_lea.sflag [#allocation6], %s336
        %s338 = sand.u32 %s121, 1
        %s339 = smul.addr %s338, 512
        %s340 = scalar_lea.vmem [#allocation5], %s339
        // Predicated region
        $region49: #{transformer_forward.2} parent=43 // pred_check
          %p341 = pneg %p134
        $region50: #{transformer_forward.2} parent=43 // pred_check_branch
          %343 = sbr.rel (%p341) target = $region52
        $region51: #{transformer_forward.2} parent=43 // pred_region
          %344 = dma.done %s337, 8192
        $region52: #{transformer_forward.2} parent=43 // pred_fallthru
          _
        %s345 = sand.u32 %s23, 1
        %s346 = scalar_lea.sflag [#allocation6], %s345
        %s347 = sand.u32 %s147, 1
        %s348 = smul.addr %s347, 512
        %s349 = scalar_lea.vmem [#allocation7], %s348
        // Predicated region
        $region53: #{transformer_forward.2} parent=43 // pred_check
          %p350 = pneg %p160
        $region54: #{transformer_forward.2} parent=43 // pred_check_branch
          %352 = sbr.rel (%p350) target = $region56
        $region55: #{transformer_forward.2} parent=43 // pred_region
          %353 = dma.done %s346, 8192
        $region56: #{transformer_forward.2} parent=43 // pred_fallthru
          _
        %s354 = smul.u32 4, %s27
        %p355 = scmp.lt.s32.totalorder %s354, 3
        %s356 = scalar_select %p355, %s354, 3
        %s357 = smul.addr %s356, 4
        %s358 = smul.addr %s357, 8
        %s359 = scalar_lea.vmem %s0, %s358
        %p360 = pneg %p56
        %p361 = pneg %p53
        %p362 = scmp.lt.s32.totalorder %s28, 1
        %s363 = scalar_select %p362, %s28, 1
        %s364 = smul.addr %s363, 192
        %s365 = smul.addr %s364, 4
        %s366 = scalar_lea.vmem %s1, %s365
        %p367 = pneg %p82
        %p368 = pneg %p79
        %s369 = sand.u32 %s95, 1
        %s370 = scalar_lea.sflag [#allocation4], %s369
        %s371 = sand.u32 %s95, 1
        %s372 = smul.addr %s371, 256
        %s373 = scalar_lea.vmem [#allocation3], %s372
        %p374 = pneg %p108
        %p375 = pneg %p105
        %s376 = sand.u32 %s23, 1
        %s377 = scalar_lea.sflag [#allocation6], %s376
        %s378 = sand.u32 %s121, 1
        %s379 = smul.addr %s378, 512
        %s380 = scalar_lea.vmem [#allocation5], %s379
        %p381 = pneg %p134
        %p382 = pneg %p131
        %s383 = sand.u32 %s23, 1
        %s384 = scalar_lea.sflag [#allocation6], %s383
        %s385 = sand.u32 %s147, 1
        %s386 = smul.addr %s385, 512
        %s387 = scalar_lea.vmem [#allocation7], %s386
        %p388 = pneg %p160
        %p389 = pneg %p157
        %p390 = scmp.lt.s32.totalorder %s28, 1
        %s391 = scalar_select %p390, %s28, 1
        %s392 = smul.addr %s391, 6
        %s393 = smul.addr %s392, 8
        %s394 = scalar_lea.vmem %s5, %s393
        %p395 = pneg %p186
        %p396 = pneg %p183
        %p397 = pneg %p212
        %p398 = pneg %p209
        %s399 = smul.u32 4, %s27
        %p400 = scmp.lt.s32.totalorder %s399, 3
        %s401 = scalar_select %p400, %s399, 3
        %s402 = smul.addr %s401, 4
        %s403 = smul.addr %s402, 8
        %s404 = scalar_lea.vmem %s6, %s403
        %s405 = smul.u32 4, %s27
        %p406 = scmp.lt.s32.totalorder %s405, 3
        %s407 = scalar_select %p406, %s405, 3
        %s408 = smul.addr %s407, 4
        %s409 = smul.addr %s408, 8
        %s410 = scalar_lea.vmem %s0, %s409
        %s411 = smul.u32 4, %s27
        %p412 = scmp.lt.s32.totalorder %s28, 1
        %s413 = scalar_select %p412, %s28, 1
        %s414 = smul.addr %s413, 192
        %s415 = smul.addr %s414, 4
        %s416 = scalar_lea.vmem %s1, %s415
        %p417 = scmp.lt.s32.totalorder %s28, 1
        %s418 = scalar_select %p417, %s28, 1
        %s419 = smul.addr %s418, 6
        %s420 = smul.addr %s419, 8
        %s421 = scalar_lea.vmem %s5, %s420
        %s422 = smul.u32 4, %s27
        %p423 = scmp.lt.s32.totalorder %s422, 3
        %s424 = scalar_select %p423, %s422, 3
        %s425 = smul.addr %s424, 4
        %s426 = smul.addr %s425, 8
        %s427 = scalar_lea.vmem %s6, %s426
        %s428 = smul.u32 4, %s27
        %p430 = scmp.eq.s32.totalorder %s28, 0
        // Predicated region
        $region57: #{transformer_forward.2} parent=43 // pred_check
          %p431 = pneg %p430
        $region58: #{transformer_forward.2} parent=43 // pred_check_branch
          %433 = sbr.rel (%p431) target = $region60
        $region59: #{transformer_forward.2} parent=43 // pred_region
          %v434 = vld [vmem:[%s410] sm:$0xff]
          %v435 = vld [vmem:[%s410 + $0x8] sm:$0xff]
          %v436 = vld [vmem:[%s410 + $0x10] sm:$0xff]
          %v437 = vld [vmem:[%s410 + $0x18] sm:$0xff]
          %v438 = vld [vmem:[%s410 + $0x20] sm:$0xff]
          %v439 = vld [vmem:[%s410 + $0x28] sm:$0xff]
          %v440 = vld [vmem:[%s410 + $0x30] sm:$0xff]
          %v441 = vld [vmem:[%s410 + $0x38] sm:$0xff]
          %v442 = vld [vmem:[%s410 + $0x40] sm:$0xff]
          %v443 = vld [vmem:[%s410 + $0x48] sm:$0xff]
          %v444 = vld [vmem:[%s410 + $0x50] sm:$0xff]
          %v445 = vld [vmem:[%s410 + $0x58] sm:$0xff]
          %v446 = vld [vmem:[%s410 + $0x60] sm:$0xff]
          %v447 = vld [vmem:[%s410 + $0x68] sm:$0xff]
          %v448 = vld [vmem:[%s410 + $0x70] sm:$0xff]
          %v449 = vld [vmem:[%s410 + $0x78] sm:$0xff]
          %450 = vst [vmem:[%s427] sm:$0xff] %v434
          %451 = vst [vmem:[%s427 + $0x8] sm:$0xff] %v435
          %452 = vst [vmem:[%s427 + $0x10] sm:$0xff] %v436
          %453 = vst [vmem:[%s427 + $0x18] sm:$0xff] %v437
          %454 = vst [vmem:[%s427 + $0x20] sm:$0xff] %v438
          %455 = vst [vmem:[%s427 + $0x28] sm:$0xff] %v439
          %456 = vst [vmem:[%s427 + $0x30] sm:$0xff] %v440
          %457 = vst [vmem:[%s427 + $0x38] sm:$0xff] %v441
          %458 = vst [vmem:[%s427 + $0x40] sm:$0xff] %v442
          %459 = vst [vmem:[%s427 + $0x48] sm:$0xff] %v443
          %460 = vst [vmem:[%s427 + $0x50] sm:$0xff] %v444
          %461 = vst [vmem:[%s427 + $0x58] sm:$0xff] %v445
          %462 = vst [vmem:[%s427 + $0x60] sm:$0xff] %v446
          %463 = vst [vmem:[%s427 + $0x68] sm:$0xff] %v447
          %464 = vst [vmem:[%s427 + $0x70] sm:$0xff] %v448
          %465 = vst [vmem:[%s427 + $0x78] sm:$0xff] %v449
        $region60: #{transformer_forward.2} parent=43 // pred_fallthru
          _
        %v466 = vld [vmem:[%s427] sm:$0xff]
        %v467 = vld [vmem:[%s427 + $0x8] sm:$0xff]
        %v468 = vld [vmem:[%s427 + $0x10] sm:$0xff]
        %v469 = vld [vmem:[%s427 + $0x18] sm:$0xff]
        %v470 = vld [vmem:[%s427 + $0x20] sm:$0xff]
        %v471 = vld [vmem:[%s427 + $0x28] sm:$0xff]
        %v472 = vld [vmem:[%s427 + $0x30] sm:$0xff]
        %v473 = vld [vmem:[%s427 + $0x38] sm:$0xff]
        %v474 = vld [vmem:[%s427 + $0x40] sm:$0xff]
        %v475 = vld [vmem:[%s427 + $0x48] sm:$0xff]
        %v476 = vld [vmem:[%s427 + $0x50] sm:$0xff]
        %v477 = vld [vmem:[%s427 + $0x58] sm:$0xff]
        %v478 = vld [vmem:[%s427 + $0x60] sm:$0xff]
        %v479 = vld [vmem:[%s427 + $0x68] sm:$0xff]
        %v480 = vld [vmem:[%s427 + $0x70] sm:$0xff]
        %v481 = vld [vmem:[%s427 + $0x78] sm:$0xff]
        %v482 = vld [vmem:[%s421] sm:$0xff]
        %v483 = vld [vmem:[%s421 + $0x8] sm:$0xff]
        %v484 = vld [vmem:[%s421 + $0x10] sm:$0xff]
        %v485 = vld [vmem:[%s421 + $0x18] sm:$0xff]
        %v486 = vld [vmem:[%s421 + $0x20] sm:$0xff]
        %v487 = vld [vmem:[%s421 + $0x28] sm:$0xff]
        %v488 = vpack.c.bf16 %v468, %v466
        %v489 = vpack.c.bf16 %v469, %v467
        %v490 = vpack.c.bf16 %v472, %v470
        %v491 = vpack.c.bf16 %v473, %v471
        %v492 = vpack.c.bf16 %v476, %v474
        %v493 = vpack.c.bf16 %v477, %v475
        %v494 = vpack.c.bf16 %v480, %v478
        %v495 = vpack.c.bf16 %v481, %v479
        %v496 = vld [vmem:[%s416] sm:$0xff]
        %v497 = vld [vmem:[%s416 + $0x8] sm:$0xff]
        %v498 = vld [vmem:[%s416 + $0x10] sm:$0xff]
        %v499 = vld [vmem:[%s416 + $0x18] sm:$0xff]
        %v500 = vld [vmem:[%s416 + $0x20] sm:$0xff]
        %v501 = vld [vmem:[%s416 + $0x28] sm:$0xff]
        %v502 = vld [vmem:[%s416 + $0x30] sm:$0xff]
        %v503 = vld [vmem:[%s416 + $0x38] sm:$0xff]
        %v504 = vld [vmem:[%s416 + $0x40] sm:$0xff]
        %v505 = vld [vmem:[%s416 + $0x48] sm:$0xff]
        %v506 = vld [vmem:[%s416 + $0x50] sm:$0xff]
        %v507 = vld [vmem:[%s416 + $0x58] sm:$0xff]
        %v508 = vld [vmem:[%s416 + $0x60] sm:$0xff]
        %v509 = vld [vmem:[%s416 + $0x68] sm:$0xff]
        %v510 = vld [vmem:[%s416 + $0x70] sm:$0xff]
        %v511 = vld [vmem:[%s416 + $0x78] sm:$0xff]
        %v512 = vld [vmem:[%s416 + $0x80] sm:$0xff]
        %v513 = vld [vmem:[%s416 + $0x88] sm:$0xff]
        %v514 = vld [vmem:[%s416 + $0x90] sm:$0xff]
        %v515 = vld [vmem:[%s416 + $0x98] sm:$0xff]
        %v516 = vld [vmem:[%s416 + $0xa0] sm:$0xff]
        %v517 = vld [vmem:[%s416 + $0xa8] sm:$0xff]
        %v518 = vld [vmem:[%s416 + $0xb0] sm:$0xff]
        %v519 = vld [vmem:[%s416 + $0xb8] sm:$0xff]
        %v520 = vld [vmem:[%s416 + $0xc0] sm:$0xff]
        %v521 = vld [vmem:[%s416 + $0xc8] sm:$0xff]
        %v522 = vld [vmem:[%s416 + $0xd0] sm:$0xff]
        %v523 = vld [vmem:[%s416 + $0xd8] sm:$0xff]
        %v524 = vld [vmem:[%s416 + $0xe0] sm:$0xff]
        %v525 = vld [vmem:[%s416 + $0xe8] sm:$0xff]
        %v526 = vld [vmem:[%s416 + $0xf0] sm:$0xff]
        %v527 = vld [vmem:[%s416 + $0xf8] sm:$0xff]
        %v528 = vld [vmem:[%s416 + $0x100] sm:$0xff]
        %v529 = vld [vmem:[%s416 + $0x108] sm:$0xff]
        %v530 = vld [vmem:[%s416 + $0x110] sm:$0xff]
        %v531 = vld [vmem:[%s416 + $0x118] sm:$0xff]
        %v532 = vld [vmem:[%s416 + $0x120] sm:$0xff]
        %v533 = vld [vmem:[%s416 + $0x128] sm:$0xff]
        %v534 = vld [vmem:[%s416 + $0x130] sm:$0xff]
        %v535 = vld [vmem:[%s416 + $0x138] sm:$0xff]
        %v536 = vld [vmem:[%s416 + $0x140] sm:$0xff]
        %v537 = vld [vmem:[%s416 + $0x148] sm:$0xff]
        %v538 = vld [vmem:[%s416 + $0x150] sm:$0xff]
        %v539 = vld [vmem:[%s416 + $0x158] sm:$0xff]
        %v540 = vld [vmem:[%s416 + $0x160] sm:$0xff]
        %v541 = vld [vmem:[%s416 + $0x168] sm:$0xff]
        %v542 = vld [vmem:[%s416 + $0x170] sm:$0xff]
        %v543 = vld [vmem:[%s416 + $0x178] sm:$0xff]
        %v544 = vld [vmem:[%s416 + $0x180] sm:$0xff]
        %v545 = vld [vmem:[%s416 + $0x188] sm:$0xff]
        %v546 = vld [vmem:[%s416 + $0x190] sm:$0xff]
        %v547 = vld [vmem:[%s416 + $0x198] sm:$0xff]
        %v548 = vld [vmem:[%s416 + $0x1a0] sm:$0xff]
        %v549 = vld [vmem:[%s416 + $0x1a8] sm:$0xff]
        %v550 = vld [vmem:[%s416 + $0x1b0] sm:$0xff]
        %v551 = vld [vmem:[%s416 + $0x1b8] sm:$0xff]
        %v552 = vld [vmem:[%s416 + $0x1c0] sm:$0xff]
        %v553 = vld [vmem:[%s416 + $0x1c8] sm:$0xff]
        %v554 = vld [vmem:[%s416 + $0x1d0] sm:$0xff]
        %v555 = vld [vmem:[%s416 + $0x1d8] sm:$0xff]
        %v556 = vld [vmem:[%s416 + $0x1e0] sm:$0xff]
        %v557 = vld [vmem:[%s416 + $0x1e8] sm:$0xff]
        %v558 = vld [vmem:[%s416 + $0x1f0] sm:$0xff]
        %v559 = vld [vmem:[%s416 + $0x1f8] sm:$0xff]
        %v560 = vld [vmem:[%s416 + $0x200] sm:$0xff]
        %v561 = vld [vmem:[%s416 + $0x208] sm:$0xff]
        %v562 = vld [vmem:[%s416 + $0x210] sm:$0xff]
        %v563 = vld [vmem:[%s416 + $0x218] sm:$0xff]
        %v564 = vld [vmem:[%s416 + $0x220] sm:$0xff]
        %v565 = vld [vmem:[%s416 + $0x228] sm:$0xff]
        %v566 = vld [vmem:[%s416 + $0x230] sm:$0xff]
        %v567 = vld [vmem:[%s416 + $0x238] sm:$0xff]
        %v568 = vld [vmem:[%s416 + $0x240] sm:$0xff]
        %v569 = vld [vmem:[%s416 + $0x248] sm:$0xff]
        %v570 = vld [vmem:[%s416 + $0x250] sm:$0xff]
        %v571 = vld [vmem:[%s416 + $0x258] sm:$0xff]
        %v572 = vld [vmem:[%s416 + $0x260] sm:$0xff]
        %v573 = vld [vmem:[%s416 + $0x268] sm:$0xff]
        %v574 = vld [vmem:[%s416 + $0x270] sm:$0xff]
        %v575 = vld [vmem:[%s416 + $0x278] sm:$0xff]
        %v576 = vld [vmem:[%s416 + $0x280] sm:$0xff]
        %v577 = vld [vmem:[%s416 + $0x288] sm:$0xff]
        %v578 = vld [vmem:[%s416 + $0x290] sm:$0xff]
        %v579 = vld [vmem:[%s416 + $0x298] sm:$0xff]
        %v580 = vld [vmem:[%s416 + $0x2a0] sm:$0xff]
        %v581 = vld [vmem:[%s416 + $0x2a8] sm:$0xff]
        %v582 = vld [vmem:[%s416 + $0x2b0] sm:$0xff]
        %v583 = vld [vmem:[%s416 + $0x2b8] sm:$0xff]
        %v584 = vld [vmem:[%s416 + $0x2c0] sm:$0xff]
        %v585 = vld [vmem:[%s416 + $0x2c8] sm:$0xff]
        %v586 = vld [vmem:[%s416 + $0x2d0] sm:$0xff]
        %v587 = vld [vmem:[%s416 + $0x2d8] sm:$0xff]
        %v588 = vld [vmem:[%s416 + $0x2e0] sm:$0xff]
        %v589 = vld [vmem:[%s416 + $0x2e8] sm:$0xff]
        %v590 = vld [vmem:[%s416 + $0x2f0] sm:$0xff]
        %v591 = vld [vmem:[%s416 + $0x2f8] sm:$0xff]
        %v592 = vlaneseq
        %v593 = vshrl.u32 %v592, 7
        %v594 = vsub.s32 0, %v593
        %v595 = vrot.slane %v482, %v594
        %v596 = vlaneseq
        %v597 = vshrl.u32 %v596, 7
        %v598 = vsub.s32 0, %v597
        %v599 = vrot.slane %v483, %v598
        %v600 = vlaneseq
        %v601 = vshrl.u32 %v600, 7
        %v602 = vsub.s32 0, %v601
        %v603 = vrot.slane %v484, %v602
        %v604 = vlaneseq
        %v605 = vshrl.u32 %v604, 7
        %v606 = vsub.s32 0, %v605
        %v607 = vrot.slane %v485, %v606
        %v608 = vlaneseq
        %v609 = vshrl.u32 %v608, 7
        %v610 = vsub.s32 0, %v609
        %v611 = vrot.slane %v486, %v610
        %v612 = vlaneseq
        %v613 = vshrl.u32 %v612, 7
        %v614 = vsub.s32 0, %v613
        %v615 = vrot.slane %v487, %v614
        %v712 = vunpack.c.l.b16 %v496
        %v713 = vunpack.c.h.b16 %v496
        %v714 = vunpack.c.l.b16 %v497
        %v715 = vunpack.c.h.b16 %v497
        %v716 = vunpack.c.l.b16 %v498
        %v717 = vunpack.c.h.b16 %v498
        %v718 = vunpack.c.l.b16 %v499
        %v719 = vunpack.c.h.b16 %v499
        %v720 = vunpack.c.l.b16 %v500
        %v721 = vunpack.c.h.b16 %v500
        %v722 = vunpack.c.l.b16 %v501
        %v723 = vunpack.c.h.b16 %v501
        %v724 = vunpack.c.l.b16 %v502
        %v725 = vunpack.c.h.b16 %v502
        %v726 = vunpack.c.l.b16 %v503
        %v727 = vunpack.c.h.b16 %v503
        %v728 = vunpack.c.l.b16 %v504
        %v729 = vunpack.c.h.b16 %v504
        %v730 = vunpack.c.l.b16 %v505
        %v731 = vunpack.c.h.b16 %v505
        %v732 = vunpack.c.l.b16 %v506
        %v733 = vunpack.c.h.b16 %v506
        %v734 = vunpack.c.l.b16 %v507
        %v735 = vunpack.c.h.b16 %v507
        %v736 = vunpack.c.l.b16 %v508
        %v737 = vunpack.c.h.b16 %v508
        %v738 = vunpack.c.l.b16 %v509
        %v739 = vunpack.c.h.b16 %v509
        %v740 = vunpack.c.l.b16 %v510
        %v741 = vunpack.c.h.b16 %v510
        %v742 = vunpack.c.l.b16 %v511
        %v743 = vunpack.c.h.b16 %v511
        %v744 = vunpack.c.l.b16 %v512
        %v745 = vunpack.c.h.b16 %v512
        %v746 = vunpack.c.l.b16 %v513
        %v747 = vunpack.c.h.b16 %v513
        %v748 = vunpack.c.l.b16 %v514
        %v749 = vunpack.c.h.b16 %v514
        %v750 = vunpack.c.l.b16 %v515
        %v751 = vunpack.c.h.b16 %v515
        %v752 = vunpack.c.l.b16 %v516
        %v753 = vunpack.c.h.b16 %v516
        %v754 = vunpack.c.l.b16 %v517
        %v755 = vunpack.c.h.b16 %v517
        %v756 = vunpack.c.l.b16 %v518
        %v757 = vunpack.c.h.b16 %v518
        %v758 = vunpack.c.l.b16 %v519
        %v759 = vunpack.c.h.b16 %v519
        %v760 = vunpack.c.l.b16 %v520
        %v761 = vunpack.c.h.b16 %v520
        %v762 = vunpack.c.l.b16 %v521
        %v763 = vunpack.c.h.b16 %v521
        %v764 = vunpack.c.l.b16 %v522
        %v765 = vunpack.c.h.b16 %v522
        %v766 = vunpack.c.l.b16 %v523
        %v767 = vunpack.c.h.b16 %v523
        %v768 = vunpack.c.l.b16 %v524
        %v769 = vunpack.c.h.b16 %v524
        %v770 = vunpack.c.l.b16 %v525
        %v771 = vunpack.c.h.b16 %v525
        %v772 = vunpack.c.l.b16 %v526
        %v773 = vunpack.c.h.b16 %v526
        %v774 = vunpack.c.l.b16 %v527
        %v775 = vunpack.c.h.b16 %v527
        %v776 = vunpack.c.l.b16 %v528
        %v777 = vunpack.c.h.b16 %v528
        %v778 = vunpack.c.l.b16 %v529
        %v779 = vunpack.c.h.b16 %v529
        %v780 = vunpack.c.l.b16 %v530
        %v781 = vunpack.c.h.b16 %v530
        %v782 = vunpack.c.l.b16 %v531
        %v783 = vunpack.c.h.b16 %v531
        %v784 = vunpack.c.l.b16 %v532
        %v785 = vunpack.c.h.b16 %v532
        %v786 = vunpack.c.l.b16 %v533
        %v787 = vunpack.c.h.b16 %v533
        %v788 = vunpack.c.l.b16 %v534
        %v789 = vunpack.c.h.b16 %v534
        %v790 = vunpack.c.l.b16 %v535
        %v791 = vunpack.c.h.b16 %v535
        %v792 = vunpack.c.l.b16 %v536
        %v793 = vunpack.c.h.b16 %v536
        %v794 = vunpack.c.l.b16 %v537
        %v795 = vunpack.c.h.b16 %v537
        %v796 = vunpack.c.l.b16 %v538
        %v797 = vunpack.c.h.b16 %v538
        %v798 = vunpack.c.l.b16 %v539
        %v799 = vunpack.c.h.b16 %v539
        %v800 = vunpack.c.l.b16 %v540
        %v801 = vunpack.c.h.b16 %v540
        %v802 = vunpack.c.l.b16 %v541
        %v803 = vunpack.c.h.b16 %v541
        %v804 = vunpack.c.l.b16 %v542
        %v805 = vunpack.c.h.b16 %v542
        %v806 = vunpack.c.l.b16 %v543
        %v807 = vunpack.c.h.b16 %v543
        %v808 = vunpack.c.l.b16 %v544
        %v809 = vunpack.c.h.b16 %v544
        %v810 = vunpack.c.l.b16 %v545
        %v811 = vunpack.c.h.b16 %v545
        %v812 = vunpack.c.l.b16 %v546
        %v813 = vunpack.c.h.b16 %v546
        %v814 = vunpack.c.l.b16 %v547
        %v815 = vunpack.c.h.b16 %v547
        %v816 = vunpack.c.l.b16 %v548
        %v817 = vunpack.c.h.b16 %v548
        %v818 = vunpack.c.l.b16 %v549
        %v819 = vunpack.c.h.b16 %v549
        %v820 = vunpack.c.l.b16 %v550
        %v821 = vunpack.c.h.b16 %v550
        %v822 = vunpack.c.l.b16 %v551
        %v823 = vunpack.c.h.b16 %v551
        %v824 = vunpack.c.l.b16 %v552
        %v825 = vunpack.c.h.b16 %v552
        %v826 = vunpack.c.l.b16 %v553
        %v827 = vunpack.c.h.b16 %v553
        %v828 = vunpack.c.l.b16 %v554
        %v829 = vunpack.c.h.b16 %v554
        %v830 = vunpack.c.l.b16 %v555
        %v831 = vunpack.c.h.b16 %v555
        %v832 = vunpack.c.l.b16 %v556
        %v833 = vunpack.c.h.b16 %v556
        %v834 = vunpack.c.l.b16 %v557
        %v835 = vunpack.c.h.b16 %v557
        %v836 = vunpack.c.l.b16 %v558
        %v837 = vunpack.c.h.b16 %v558
        %v838 = vunpack.c.l.b16 %v559
        %v839 = vunpack.c.h.b16 %v559
        %v840 = vunpack.c.l.b16 %v560
        %v841 = vunpack.c.h.b16 %v560
        %v842 = vunpack.c.l.b16 %v561
        %v843 = vunpack.c.h.b16 %v561
        %v844 = vunpack.c.l.b16 %v562
        %v845 = vunpack.c.h.b16 %v562
        %v846 = vunpack.c.l.b16 %v563
        %v847 = vunpack.c.h.b16 %v563
        %v848 = vunpack.c.l.b16 %v564
        %v849 = vunpack.c.h.b16 %v564
        %v850 = vunpack.c.l.b16 %v565
        %v851 = vunpack.c.h.b16 %v565
        %v852 = vunpack.c.l.b16 %v566
        %v853 = vunpack.c.h.b16 %v566
        %v854 = vunpack.c.l.b16 %v567
        %v855 = vunpack.c.h.b16 %v567
        %v856 = vunpack.c.l.b16 %v568
        %v857 = vunpack.c.h.b16 %v568
        %v858 = vunpack.c.l.b16 %v569
        %v859 = vunpack.c.h.b16 %v569
        %v860 = vunpack.c.l.b16 %v570
        %v861 = vunpack.c.h.b16 %v570
        %v862 = vunpack.c.l.b16 %v571
        %v863 = vunpack.c.h.b16 %v571
        %v864 = vunpack.c.l.b16 %v572
        %v865 = vunpack.c.h.b16 %v572
        %v866 = vunpack.c.l.b16 %v573
        %v867 = vunpack.c.h.b16 %v573
        %v868 = vunpack.c.l.b16 %v574
        %v869 = vunpack.c.h.b16 %v574
        %v870 = vunpack.c.l.b16 %v575
        %v871 = vunpack.c.h.b16 %v575
        %v872 = vunpack.c.l.b16 %v576
        %v873 = vunpack.c.h.b16 %v576
        %v874 = vunpack.c.l.b16 %v577
        %v875 = vunpack.c.h.b16 %v577
        %v876 = vunpack.c.l.b16 %v578
        %v877 = vunpack.c.h.b16 %v578
        %v878 = vunpack.c.l.b16 %v579
        %v879 = vunpack.c.h.b16 %v579
        %v880 = vunpack.c.l.b16 %v580
        %v881 = vunpack.c.h.b16 %v580
        %v882 = vunpack.c.l.b16 %v581
        %v883 = vunpack.c.h.b16 %v581
        %v884 = vunpack.c.l.b16 %v582
        %v885 = vunpack.c.h.b16 %v582
        %v886 = vunpack.c.l.b16 %v583
        %v887 = vunpack.c.h.b16 %v583
        %v888 = vunpack.c.l.b16 %v584
        %v889 = vunpack.c.h.b16 %v584
        %v890 = vunpack.c.l.b16 %v585
        %v891 = vunpack.c.h.b16 %v585
        %v892 = vunpack.c.l.b16 %v586
        %v893 = vunpack.c.h.b16 %v586
        %v894 = vunpack.c.l.b16 %v587
        %v895 = vunpack.c.h.b16 %v587
        %v896 = vunpack.c.l.b16 %v588
        %v897 = vunpack.c.h.b16 %v588
        %v898 = vunpack.c.l.b16 %v589
        %v899 = vunpack.c.h.b16 %v589
        %v900 = vunpack.c.l.b16 %v590
        %v901 = vunpack.c.h.b16 %v590
        %v902 = vunpack.c.l.b16 %v591
        %v903 = vunpack.c.h.b16 %v591
        %v904 = vpack.c.b16 %v718, %v712
        %v905 = vpack.c.b16 %v719, %v713
        %v906 = vpack.c.b16 %v720, %v714
        %v907 = vpack.c.b16 %v721, %v715
        %v908 = vpack.c.b16 %v722, %v716
        %v909 = vpack.c.b16 %v723, %v717
        %v910 = vpack.c.b16 %v730, %v724
        %v911 = vpack.c.b16 %v731, %v725
        %v912 = vpack.c.b16 %v732, %v726
        %v913 = vpack.c.b16 %v733, %v727
        %v914 = vpack.c.b16 %v734, %v728
        %v915 = vpack.c.b16 %v735, %v729
        %v916 = vpack.c.b16 %v742, %v736
        %v917 = vpack.c.b16 %v743, %v737
        %v918 = vpack.c.b16 %v744, %v738
        %v919 = vpack.c.b16 %v745, %v739
        %v920 = vpack.c.b16 %v746, %v740
        %v921 = vpack.c.b16 %v747, %v741
        %v922 = vpack.c.b16 %v754, %v748
        %v923 = vpack.c.b16 %v755, %v749
        %v924 = vpack.c.b16 %v756, %v750
        %v925 = vpack.c.b16 %v757, %v751
        %v926 = vpack.c.b16 %v758, %v752
        %v927 = vpack.c.b16 %v759, %v753
        %v928 = vpack.c.b16 %v766, %v760
        %v929 = vpack.c.b16 %v767, %v761
        %v930 = vpack.c.b16 %v768, %v762
        %v931 = vpack.c.b16 %v769, %v763
        %v932 = vpack.c.b16 %v770, %v764
        %v933 = vpack.c.b16 %v771, %v765
        %v934 = vpack.c.b16 %v778, %v772
        %v935 = vpack.c.b16 %v779, %v773
        %v936 = vpack.c.b16 %v780, %v774
        %v937 = vpack.c.b16 %v781, %v775
        %v938 = vpack.c.b16 %v782, %v776
        %v939 = vpack.c.b16 %v783, %v777
        %v940 = vpack.c.b16 %v790, %v784
        %v941 = vpack.c.b16 %v791, %v785
        %v942 = vpack.c.b16 %v792, %v786
        %v943 = vpack.c.b16 %v793, %v787
        %v944 = vpack.c.b16 %v794, %v788
        %v945 = vpack.c.b16 %v795, %v789
        %v946 = vpack.c.b16 %v802, %v796
        %v947 = vpack.c.b16 %v803, %v797
        %v948 = vpack.c.b16 %v804, %v798
        %v949 = vpack.c.b16 %v805, %v799
        %v950 = vpack.c.b16 %v806, %v800
        %v951 = vpack.c.b16 %v807, %v801
        %v952 = vpack.c.b16 %v814, %v808
        %v953 = vpack.c.b16 %v815, %v809
        %v954 = vpack.c.b16 %v816, %v810
        %v955 = vpack.c.b16 %v817, %v811
        %v956 = vpack.c.b16 %v818, %v812
        %v957 = vpack.c.b16 %v819, %v813
        %v958 = vpack.c.b16 %v826, %v820
        %v959 = vpack.c.b16 %v827, %v821
        %v960 = vpack.c.b16 %v828, %v822
        %v961 = vpack.c.b16 %v829, %v823
        %v962 = vpack.c.b16 %v830, %v824
        %v963 = vpack.c.b16 %v831, %v825
        %v964 = vpack.c.b16 %v838, %v832
        %v965 = vpack.c.b16 %v839, %v833
        %v966 = vpack.c.b16 %v840, %v834
        %v967 = vpack.c.b16 %v841, %v835
        %v968 = vpack.c.b16 %v842, %v836
        %v969 = vpack.c.b16 %v843, %v837
        %v970 = vpack.c.b16 %v850, %v844
        %v971 = vpack.c.b16 %v851, %v845
        %v972 = vpack.c.b16 %v852, %v846
        %v973 = vpack.c.b16 %v853, %v847
        %v974 = vpack.c.b16 %v854, %v848
        %v975 = vpack.c.b16 %v855, %v849
        %v976 = vpack.c.b16 %v862, %v856
        %v977 = vpack.c.b16 %v863, %v857
        %v978 = vpack.c.b16 %v864, %v858
        %v979 = vpack.c.b16 %v865, %v859
        %v980 = vpack.c.b16 %v866, %v860
        %v981 = vpack.c.b16 %v867, %v861
        %v982 = vpack.c.b16 %v874, %v868
        %v983 = vpack.c.b16 %v875, %v869
        %v984 = vpack.c.b16 %v876, %v870
        %v985 = vpack.c.b16 %v877, %v871
        %v986 = vpack.c.b16 %v878, %v872
        %v987 = vpack.c.b16 %v879, %v873
        %v988 = vpack.c.b16 %v886, %v880
        %v989 = vpack.c.b16 %v887, %v881
        %v990 = vpack.c.b16 %v888, %v882
        %v991 = vpack.c.b16 %v889, %v883
        %v992 = vpack.c.b16 %v890, %v884
        %v993 = vpack.c.b16 %v891, %v885
        %v994 = vpack.c.b16 %v898, %v892
        %v995 = vpack.c.b16 %v899, %v893
        %v996 = vpack.c.b16 %v900, %v894
        %v997 = vpack.c.b16 %v901, %v895
        %v998 = vpack.c.b16 %v902, %v896
        %v999 = vpack.c.b16 %v903, %v897
        %1096 = vmatprep.subr.bf16.mxu0 %v905
        %1097 = vmatpush1.bf16.msra.mxu0 %v904
        %1098 = vmatprep.subr.bf16.mxu0 %v911
        %1099 = vmatpush1.bf16.msra.mxu0 %v910
        %1100 = vmatprep.subr.bf16.mxu0 %v917
        %1101 = vmatpush1.bf16.msra.mxu0 %v916
        %1102 = vmatprep.subr.bf16.mxu0 %v923
        %1103 = vmatpush1.bf16.msra.mxu0 %v922
        %1104 = vmatprep.subr.bf16.mxu0 %v929
        %1105 = vmatpush1.bf16.msra.mxu0 %v928
        %1106 = vmatprep.subr.bf16.mxu0 %v935
        %1107 = vmatpush1.bf16.msra.mxu0 %v934
        %1108 = vmatprep.subr.bf16.mxu0 %v941
        %1109 = vmatpush1.bf16.msra.mxu0 %v940
        %1110 = vmatprep.subr.bf16.mxu0 %v947
        %1111 = vmatpush1.bf16.msra.mxu0 %v946
        %1112 = vmatprep.subr.bf16.mxu0 %v953
        %1113 = vmatpush1.bf16.msra.mxu0 %v952
        %1114 = vmatprep.subr.bf16.mxu0 %v959
        %1115 = vmatpush1.bf16.msra.mxu0 %v958
        %1116 = vmatprep.subr.bf16.mxu0 %v965
        %1117 = vmatpush1.bf16.msra.mxu0 %v964
        %1118 = vmatprep.subr.bf16.mxu0 %v971
        %1119 = vmatpush1.bf16.msra.mxu0 %v970
        %1120 = vmatprep.subr.bf16.mxu0 %v977
        %1121 = vmatpush1.bf16.msra.mxu0 %v976
        %1122 = vmatprep.subr.bf16.mxu0 %v983
        %1123 = vmatpush1.bf16.msra.mxu0 %v982
        %1124 = vmatprep.subr.bf16.mxu0 %v989
        %1125 = vmatpush1.bf16.msra.mxu0 %v988
        %1126 = vmatprep.subr.bf16.mxu0 %v995
        %1127 = vmatpush1.bf16.msra.mxu0 %v994
        %1128 = vmatprep.mubr.bf16.mxu0 %v489
        %1129 = vmatmul.mubr.bf16.gmra.mrb[0].mxu0 %v488
        %v1130 = vpop.f32.mrb[0].mxu0
        %v1131 = vadd.f32 %v595, %v1130
        %v1132 = vpop.f32.mrb[0].mxu0
        %v1133 = vadd.f32 %v599, %v1132
        %v1134 = vpop.f32.mrb[0].mxu0
        %v1135 = vadd.f32 %v595, %v1134
        %v1136 = vpop.f32.mrb[0].mxu0
        %v1137 = vadd.f32 %v599, %v1136
        %1138 = vmatprep.mubr.bf16.mxu0 %v491
        %1139 = vmatmul.mubr.bf16.gmra.mrb[0].mxu0 %v490
        %v1140 = vpop.f32.mrb[0].mxu0
        %v1141 = vadd.f32 %v595, %v1140
        %v1142 = vpop.f32.mrb[0].mxu0
        %v1143 = vadd.f32 %v599, %v1142
        %v1144 = vpop.f32.mrb[0].mxu0
        %v1145 = vadd.f32 %v595, %v1144
        %v1146 = vpop.f32.mrb[0].mxu0
        %v1147 = vadd.f32 %v599, %v1146
        %1148 = vmatprep.mubr.bf16.mxu0 %v493
        %1149 = vmatmul.mubr.bf16.gmra.mrb[0].mxu0 %v492
        %v1150 = vpop.f32.mrb[0].mxu0
        %v1151 = vadd.f32 %v595, %v1150
        %v1152 = vpop.f32.mrb[0].mxu0
        %v1153 = vadd.f32 %v599, %v1152
        %v1154 = vpop.f32.mrb[0].mxu0
        %v1155 = vadd.f32 %v595, %v1154
        %v1156 = vpop.f32.mrb[0].mxu0
        %v1157 = vadd.f32 %v599, %v1156
        %1158 = vmatprep.mubr.bf16.mxu0 %v495
        %1159 = vmatmul.mubr.bf16.gmra.mrb[0].mxu0 %v494
        %v1160 = vpop.f32.mrb[0].mxu0
        %v1161 = vadd.f32 %v595, %v1160
        %v1162 = vpop.f32.mrb[0].mxu0
        %v1163 = vadd.f32 %v599, %v1162
        %v1164 = vpop.f32.mrb[0].mxu0
        %v1165 = vadd.f32 %v595, %v1164
        %v1166 = vpop.f32.mrb[0].mxu0
        %v1167 = vadd.f32 %v599, %v1166
        %1168 = vdwg.mxu0
        %1169 = vmatprep.subr.bf16.mxu0 %v907
        %1170 = vmatpush1.bf16.msra.mxu0 %v906
        %1171 = vmatprep.subr.bf16.mxu0 %v913
        %1172 = vmatpush1.bf16.msra.mxu0 %v912
        %1173 = vmatprep.subr.bf16.mxu0 %v919
        %1174 = vmatpush1.bf16.msra.mxu0 %v918
        %1175 = vmatprep.subr.bf16.mxu0 %v925
        %1176 = vmatpush1.bf16.msra.mxu0 %v924
        %1177 = vmatprep.subr.bf16.mxu0 %v931
        %1178 = vmatpush1.bf16.msra.mxu0 %v930
        %1179 = vmatprep.subr.bf16.mxu0 %v937
        %1180 = vmatpush1.bf16.msra.mxu0 %v936
        %1181 = vmatprep.subr.bf16.mxu0 %v943
        %1182 = vmatpush1.bf16.msra.mxu0 %v942
        %1183 = vmatprep.subr.bf16.mxu0 %v949
        %1184 = vmatpush1.bf16.msra.mxu0 %v948
        %1185 = vmatprep.subr.bf16.mxu0 %v955
        %1186 = vmatpush1.bf16.msra.mxu0 %v954
        %1187 = vmatprep.subr.bf16.mxu0 %v961
        %1188 = vmatpush1.bf16.msra.mxu0 %v960
        %1189 = vmatprep.subr.bf16.mxu0 %v967
        %1190 = vmatpush1.bf16.msra.mxu0 %v966
        %1191 = vmatprep.subr.bf16.mxu0 %v973
        %1192 = vmatpush1.bf16.msra.mxu0 %v972
        %1193 = vmatprep.subr.bf16.mxu0 %v979
        %1194 = vmatpush1.bf16.msra.mxu0 %v978
        %1195 = vmatprep.subr.bf16.mxu0 %v985
        %1196 = vmatpush1.bf16.msra.mxu0 %v984
        %1197 = vmatprep.subr.bf16.mxu0 %v991
        %1198 = vmatpush1.bf16.msra.mxu0 %v990
        %1199 = vmatprep.subr.bf16.mxu0 %v997
        %1200 = vmatpush1.bf16.msra.mxu0 %v996
        %1201 = vmatprep.mubr.bf16.mxu0 %v489
        %1202 = vmatmul.mubr.bf16.gmra.mrb[0].mxu0 %v488
        %v1203 = vpop.f32.mrb[0].mxu0
        %v1204 = vadd.f32 %v603, %v1203
        %v1205 = vpop.f32.mrb[0].mxu0
        %v1206 = vadd.f32 %v607, %v1205
        %v1207 = vpop.f32.mrb[0].mxu0
        %v1208 = vadd.f32 %v603, %v1207
        %v1209 = vpop.f32.mrb[0].mxu0
        %v1210 = vadd.f32 %v607, %v1209
        %1211 = vmatprep.mubr.bf16.mxu0 %v491
        %1212 = vmatmul.mubr.bf16.gmra.mrb[0].mxu0 %v490
        %v1213 = vpop.f32.mrb[0].mxu0
        %v1214 = vadd.f32 %v603, %v1213
        %v1215 = vpop.f32.mrb[0].mxu0
        %v1216 = vadd.f32 %v607, %v1215
        %v1217 = vpop.f32.mrb[0].mxu0
        %v1218 = vadd.f32 %v603, %v1217
        %v1219 = vpop.f32.mrb[0].mxu0
        %v1220 = vadd.f32 %v607, %v1219
        %1221 = vmatprep.mubr.bf16.mxu0 %v493
        %1222 = vmatmul.mubr.bf16.gmra.mrb[0].mxu0 %v492
        %v1223 = vpop.f32.mrb[0].mxu0
        %v1224 = vadd.f32 %v603, %v1223
        %v1225 = vpop.f32.mrb[0].mxu0
        %v1226 = vadd.f32 %v607, %v1225
        %v1227 = vpop.f32.mrb[0].mxu0
        %v1228 = vadd.f32 %v603, %v1227
        %v1229 = vpop.f32.mrb[0].mxu0
        %v1230 = vadd.f32 %v607, %v1229
        %1231 = vmatprep.mubr.bf16.mxu0 %v495
        %1232 = vmatmul.mubr.bf16.gmra.mrb[0].mxu0 %v494
        %v1233 = vpop.f32.mrb[0].mxu0
        %v1234 = vadd.f32 %v603, %v1233
        %v1235 = vpop.f32.mrb[0].mxu0
        %v1236 = vadd.f32 %v607, %v1235
        %v1237 = vpop.f32.mrb[0].mxu0
        %v1238 = vadd.f32 %v603, %v1237
        %v1239 = vpop.f32.mrb[0].mxu0
        %v1240 = vadd.f32 %v607, %v1239
        %1241 = vdwg.mxu0
        %1242 = vmatprep.subr.bf16.mxu0 %v909
        %1243 = vmatpush1.bf16.msra.mxu0 %v908
        %1244 = vmatprep.subr.bf16.mxu0 %v915
        %1245 = vmatpush1.bf16.msra.mxu0 %v914
        %1246 = vmatprep.subr.bf16.mxu0 %v921
        %1247 = vmatpush1.bf16.msra.mxu0 %v920
        %1248 = vmatprep.subr.bf16.mxu0 %v927
        %1249 = vmatpush1.bf16.msra.mxu0 %v926
        %1250 = vmatprep.subr.bf16.mxu0 %v933
        %1251 = vmatpush1.bf16.msra.mxu0 %v932
        %1252 = vmatprep.subr.bf16.mxu0 %v939
        %1253 = vmatpush1.bf16.msra.mxu0 %v938
        %1254 = vmatprep.subr.bf16.mxu0 %v945
        %1255 = vmatpush1.bf16.msra.mxu0 %v944
        %1256 = vmatprep.subr.bf16.mxu0 %v951
        %1257 = vmatpush1.bf16.msra.mxu0 %v950
        %1258 = vmatprep.subr.bf16.mxu0 %v957
        %1259 = vmatpush1.bf16.msra.mxu0 %v956
        %1260 = vmatprep.subr.bf16.mxu0 %v963
        %1261 = vmatpush1.bf16.msra.mxu0 %v962
        %1262 = vmatprep.subr.bf16.mxu0 %v969
        %1263 = vmatpush1.bf16.msra.mxu0 %v968
        %1264 = vmatprep.subr.bf16.mxu0 %v975
        %1265 = vmatpush1.bf16.msra.mxu0 %v974
        %1266 = vmatprep.subr.bf16.mxu0 %v981
        %1267 = vmatpush1.bf16.msra.mxu0 %v980
        %1268 = vmatprep.subr.bf16.mxu0 %v987
        %1269 = vmatpush1.bf16.msra.mxu0 %v986
        %1270 = vmatprep.subr.bf16.mxu0 %v993
        %1271 = vmatpush1.bf16.msra.mxu0 %v992
        %1272 = vmatprep.subr.bf16.mxu0 %v999
        %1273 = vmatpush1.bf16.msra.mxu0 %v998
        %1274 = vmatprep.mubr.bf16.mxu0 %v489
        %1275 = vmatmul.mubr.bf16.gmra.mrb[0].mxu0 %v488
        %v1276 = vpop.f32.mrb[0].mxu0
        %v1277 = vadd.f32 %v611, %v1276
        %v1278 = vpop.f32.mrb[0].mxu0
        %v1279 = vadd.f32 %v615, %v1278
        %v1280 = vpop.f32.mrb[0].mxu0
        %v1281 = vadd.f32 %v611, %v1280
        %v1282 = vpop.f32.mrb[0].mxu0
        %v1283 = vadd.f32 %v615, %v1282
        %1284 = vmatprep.mubr.bf16.mxu0 %v491
        %1285 = vmatmul.mubr.bf16.gmra.mrb[0].mxu0 %v490
        %v1286 = vpop.f32.mrb[0].mxu0
        %v1287 = vadd.f32 %v611, %v1286
        %v1288 = vpop.f32.mrb[0].mxu0
        %v1289 = vadd.f32 %v615, %v1288
        %v1290 = vpop.f32.mrb[0].mxu0
        %v1291 = vadd.f32 %v611, %v1290
        %v1292 = vpop.f32.mrb[0].mxu0
        %v1293 = vadd.f32 %v615, %v1292
        %1294 = vmatprep.mubr.bf16.mxu0 %v493
        %1295 = vmatmul.mubr.bf16.gmra.mrb[0].mxu0 %v492
        %v1296 = vpop.f32.mrb[0].mxu0
        %v1297 = vadd.f32 %v611, %v1296
        %v1298 = vpop.f32.mrb[0].mxu0
        %v1299 = vadd.f32 %v615, %v1298
        %v1300 = vpop.f32.mrb[0].mxu0
        %v1301 = vadd.f32 %v611, %v1300
        %v1302 = vpop.f32.mrb[0].mxu0
        %v1303 = vadd.f32 %v615, %v1302
        %1304 = vmatprep.mubr.bf16.mxu0 %v495
        %1305 = vmatmul.mubr.bf16.gmra.mrb[0].mxu0 %v494
        %v1306 = vpop.f32.mrb[0].mxu0
        %v1307 = vadd.f32 %v611, %v1306
        %v1308 = vpop.f32.mrb[0].mxu0
        %v1309 = vadd.f32 %v615, %v1308
        %v1310 = vpop.f32.mrb[0].mxu0
        %v1311 = vadd.f32 %v611, %v1310
        %v1312 = vpop.f32.mrb[0].mxu0
        %v1313 = vadd.f32 %v615, %v1312
        %1314 = vdwg.mxu0
        %v1315 = vpack.c.bf16 %v1135, %v1131
        %v1316 = vpack.c.bf16 %v1145, %v1141
        %v1317 = vpack.c.bf16 %v1155, %v1151
        %v1318 = vpack.c.bf16 %v1165, %v1161
        %v1319 = vpack.c.bf16 %v1208, %v1204
        %v1320 = vpack.c.bf16 %v1218, %v1214
        %v1321 = vpack.c.bf16 %v1228, %v1224
        %v1322 = vpack.c.bf16 %v1238, %v1234
        %v1323 = vpack.c.bf16 %v1281, %v1277
        %v1324 = vpack.c.bf16 %v1291, %v1287
        %v1325 = vpack.c.bf16 %v1301, %v1297
        %v1326 = vpack.c.bf16 %v1311, %v1307
        %1327 = vmatprep.subr.bf16.mxu0 0
        %1328 = vmatpush1.bf16.xpose.msra.mxu0 %v1319
        %1329 = vmatprep.subr.bf16.mxu0 0
        %1330 = vmatpush1.bf16.xpose.msra.mxu0 0
        %1331 = vmatprep.subr.bf16.mxu0 0
        %1332 = vmatpush1.bf16.xpose.msra.mxu0 0
        %1333 = vmatprep.subr.bf16.mxu0 0
        %1334 = vmatpush1.bf16.xpose.msra.mxu0 0
        %1335 = vmatprep.subr.bf16.mxu0 0
        %1336 = vmatpush1.bf16.xpose.msra.mxu0 0
        %1337 = vmatprep.subr.bf16.mxu0 0
        %1338 = vmatpush1.bf16.xpose.msra.mxu0 0
        %1339 = vmatprep.subr.bf16.mxu0 0
        %1340 = vmatpush1.bf16.xpose.msra.mxu0 0
        %1341 = vmatprep.subr.bf16.mxu0 0
        %1342 = vmatpush1.bf16.xpose.msra.mxu0 0
        %1343 = vmatprep.subr.bf16.mxu0 0
        %1344 = vmatpush1.bf16.xpose.msra.mxu0 0
        %1345 = vmatprep.subr.bf16.mxu0 0
        %1346 = vmatpush1.bf16.xpose.msra.mxu0 0
        %1347 = vmatprep.subr.bf16.mxu0 0
        %1348 = vmatpush1.bf16.xpose.msra.mxu0 0
        %1349 = vmatprep.subr.bf16.mxu0 0
        %1350 = vmatpush1.bf16.xpose.msra.mxu0 0
        %1351 = vmatprep.subr.bf16.mxu0 0
        %1352 = vmatpush1.bf16.xpose.msra.mxu0 0
        %1353 = vmatprep.subr.bf16.mxu0 0
        %1354 = vmatpush1.bf16.xpose.msra.mxu0 0
        %1355 = vmatprep.subr.bf16.mxu0 0
        %1356 = vmatpush1.bf16.xpose.msra.mxu0 0
        %1357 = vmatprep.subr.bf16.mxu0 0
        %1358 = vmatpush1.bf16.xpose.msra.mxu0 0
        %1359 = vmatprep.mubr.bf16.mxu0 0
        %1360 = vmatmul.mubr.bf16.gmra.mrb[0].mxu0 %v1315
        %v1361 = vpop.f32.mrb[0].mxu0
        %v1362 = vadd.f32 0.0, %v1361
        %v1363 = vpop.f32.mrb[0].mxu0
        %v1364 = vpop.f32.mrb[0].mxu0
        %v1365 = vadd.f32 0.0, %v1364
        %v1366 = vpop.f32.mrb[0].mxu0
        %1367 = vdwg.mxu0
        %1368 = vmatprep.subr.bf16.mxu0 0
        %1369 = vmatpush1.bf16.xpose.msra.mxu0 %v1320
        %1370 = vmatprep.subr.bf16.mxu0 0
        %1371 = vmatpush1.bf16.xpose.msra.mxu0 0
        %1372 = vmatprep.subr.bf16.mxu0 0
        %1373 = vmatpush1.bf16.xpose.msra.mxu0 0
        %1374 = vmatprep.subr.bf16.mxu0 0
        %1375 = vmatpush1.bf16.xpose.msra.mxu0 0
        %1376 = vmatprep.subr.bf16.mxu0 0
        %1377 = vmatpush1.bf16.xpose.msra.mxu0 0
        %1378 = vmatprep.subr.bf16.mxu0 0
        %1379 = vmatpush1.bf16.xpose.msra.mxu0 0
        %1380 = vmatprep.subr.bf16.mxu0 0
        %1381 = vmatpush1.bf16.xpose.msra.mxu0 0
        %1382 = vmatprep.subr.bf16.mxu0 0
        %1383 = vmatpush1.bf16.xpose.msra.mxu0 0
        %1384 = vmatprep.subr.bf16.mxu0 0
        %1385 = vmatpush1.bf16.xpose.msra.mxu0 0
        %1386 = vmatprep.subr.bf16.mxu0 0
        %1387 = vmatpush1.bf16.xpose.msra.mxu0 0
        %1388 = vmatprep.subr.bf16.mxu0 0
        %1389 = vmatpush1.bf16.xpose.msra.mxu0 0
        %1390 = vmatprep.subr.bf16.mxu0 0
        %1391 = vmatpush1.bf16.xpose.msra.mxu0 0
        %1392 = vmatprep.subr.bf16.mxu0 0
        %1393 = vmatpush1.bf16.xpose.msra.mxu0 0
        %1394 = vmatprep.subr.bf16.mxu0 0
        %1395 = vmatpush1.bf16.xpose.msra.mxu0 0
        %1396 = vmatprep.subr.bf16.mxu0 0
        %1397 = vmatpush1.bf16.xpose.msra.mxu0 0
        %1398 = vmatprep.subr.bf16.mxu0 0
        %1399 = vmatpush1.bf16.xpose.msra.mxu0 0
        %1400 = vmatprep.mubr.bf16.mxu0 0
        %1401 = vmatmul.mubr.bf16.gmra.mrb[0].mxu0 %v1316
        %v1402 = vpop.f32.mrb[0].mxu0
        %v1403 = vadd.f32 0.0, %v1402
        %v1404 = vpop.f32.mrb[0].mxu0
        %v1405 = vpop.f32.mrb[0].mxu0
        %v1406 = vadd.f32 0.0, %v1405
        %v1407 = vpop.f32.mrb[0].mxu0
        %1408 = vdwg.mxu0
        %1409 = vmatprep.subr.bf16.mxu0 0
        %1410 = vmatpush1.bf16.xpose.msra.mxu0 %v1321
        %1411 = vmatprep.subr.bf16.mxu0 0
        %1412 = vmatpush1.bf16.xpose.msra.mxu0 0
        %1413 = vmatprep.subr.bf16.mxu0 0
        %1414 = vmatpush1.bf16.xpose.msra.mxu0 0
        %1415 = vmatprep.subr.bf16.mxu0 0
        %1416 = vmatpush1.bf16.xpose.msra.mxu0 0
        %1417 = vmatprep.subr.bf16.mxu0 0
        %1418 = vmatpush1.bf16.xpose.msra.mxu0 0
        %1419 = vmatprep.subr.bf16.mxu0 0
        %1420 = vmatpush1.bf16.xpose.msra.mxu0 0
        %1421 = vmatprep.subr.bf16.mxu0 0
        %1422 = vmatpush1.bf16.xpose.msra.mxu0 0
        %1423 = vmatprep.subr.bf16.mxu0 0
        %1424 = vmatpush1.bf16.xpose.msra.mxu0 0
        %1425 = vmatprep.subr.bf16.mxu0 0
        %1426 = vmatpush1.bf16.xpose.msra.mxu0 0
        %1427 = vmatprep.subr.bf16.mxu0 0
        %1428 = vmatpush1.bf16.xpose.msra.mxu0 0
        %1429 = vmatprep.subr.bf16.mxu0 0
        %1430 = vmatpush1.bf16.xpose.msra.mxu0 0
        %1431 = vmatprep.subr.bf16.mxu0 0
        %1432 = vmatpush1.bf16.xpose.msra.mxu0 0
        %1433 = vmatprep.subr.bf16.mxu0 0
        %1434 = vmatpush1.bf16.xpose.msra.mxu0 0
        %1435 = vmatprep.subr.bf16.mxu0 0
        %1436 = vmatpush1.bf16.xpose.msra.mxu0 0
        %1437 = vmatprep.subr.bf16.mxu0 0
        %1438 = vmatpush1.bf16.xpose.msra.mxu0 0
        %1439 = vmatprep.subr.bf16.mxu0 0
        %1440 = vmatpush1.bf16.xpose.msra.mxu0 0
        %1441 = vmatprep.mubr.bf16.mxu0 0
        %1442 = vmatmul.mubr.bf16.gmra.mrb[0].mxu0 %v1317
        %v1443 = vpop.f32.mrb[0].mxu0
        %v1444 = vadd.f32 0.0, %v1443
        %v1445 = vpop.f32.mrb[0].mxu0
        %v1446 = vpop.f32.mrb[0].mxu0
        %v1447 = vadd.f32 0.0, %v1446
        %v1448 = vpop.f32.mrb[0].mxu0
        %1449 = vdwg.mxu0
        %1450 = vmatprep.subr.bf16.mxu0 0
        %1451 = vmatpush1.bf16.xpose.msra.mxu0 %v1322
        %1452 = vmatprep.subr.bf16.mxu0 0
        %1453 = vmatpush1.bf16.xpose.msra.mxu0 0
        %1454 = vmatprep.subr.bf16.mxu0 0
        %1455 = vmatpush1.bf16.xpose.msra.mxu0 0
        %1456 = vmatprep.subr.bf16.mxu0 0
        %1457 = vmatpush1.bf16.xpose.msra.mxu0 0
        %1458 = vmatprep.subr.bf16.mxu0 0
        %1459 = vmatpush1.bf16.xpose.msra.mxu0 0
        %1460 = vmatprep.subr.bf16.mxu0 0
        %1461 = vmatpush1.bf16.xpose.msra.mxu0 0
        %1462 = vmatprep.subr.bf16.mxu0 0
        %1463 = vmatpush1.bf16.xpose.msra.mxu0 0
        %1464 = vmatprep.subr.bf16.mxu0 0
        %1465 = vmatpush1.bf16.xpose.msra.mxu0 0
        %1466 = vmatprep.subr.bf16.mxu0 0
        %1467 = vmatpush1.bf16.xpose.msra.mxu0 0
        %1468 = vmatprep.subr.bf16.mxu0 0
        %1469 = vmatpush1.bf16.xpose.msra.mxu0 0
        %1470 = vmatprep.subr.bf16.mxu0 0
        %1471 = vmatpush1.bf16.xpose.msra.mxu0 0
        %1472 = vmatprep.subr.bf16.mxu0 0
        %1473 = vmatpush1.bf16.xpose.msra.mxu0 0
        %1474 = vmatprep.subr.bf16.mxu0 0
        %1475 = vmatpush1.bf16.xpose.msra.mxu0 0
        %1476 = vmatprep.subr.bf16.mxu0 0
        %1477 = vmatpush1.bf16.xpose.msra.mxu0 0
        %1478 = vmatprep.subr.bf16.mxu0 0
        %1479 = vmatpush1.bf16.xpose.msra.mxu0 0
        %1480 = vmatprep.subr.bf16.mxu0 0
        %1481 = vmatpush1.bf16.xpose.msra.mxu0 0
        %1482 = vmatprep.mubr.bf16.mxu0 0
        %1483 = vmatmul.mubr.bf16.gmra.mrb[0].mxu0 %v1318
        %v1484 = vpop.f32.mrb[0].mxu0
        %v1485 = vadd.f32 0.0, %v1484
        %v1486 = vpop.f32.mrb[0].mxu0
        %v1487 = vpop.f32.mrb[0].mxu0
        %v1488 = vadd.f32 0.0, %v1487
        %v1489 = vpop.f32.mrb[0].mxu0
        %1490 = vdwg.mxu0
        %vm1491 = vcmask 130048
        %v1492 = vsel %vm1491, %v1362, -inf
        %1493 = vmax.xlane.f32.xlu0 %v1492
        %v1494 = vpop.xlane.xlu0 %1493
        %v1495 = vsel %vm1491, %v1365, -inf
        %1496 = vmax.xlane.f32.xlu0 %v1495
        %v1497 = vpop.xlane.xlu0 %1496
        %v1498 = vsel %vm1491, %v1403, -inf
        %1499 = vmax.xlane.f32.xlu0 %v1498
        %v1500 = vpop.xlane.xlu0 %1499
        %v1501 = vsel %vm1491, %v1406, -inf
        %1502 = vmax.xlane.f32.xlu0 %v1501
        %v1503 = vpop.xlane.xlu0 %1502
        %v1504 = vsel %vm1491, %v1444, -inf
        %1505 = vmax.xlane.f32.xlu0 %v1504
        %v1506 = vpop.xlane.xlu0 %1505
        %v1507 = vsel %vm1491, %v1447, -inf
        %1508 = vmax.xlane.f32.xlu0 %v1507
        %v1509 = vpop.xlane.xlu0 %1508
        %v1510 = vsel %vm1491, %v1485, -inf
        %1511 = vmax.xlane.f32.xlu0 %v1510
        %v1512 = vpop.xlane.xlu0 %1511
        %v1513 = vsel %vm1491, %v1488, -inf
        %1514 = vmax.xlane.f32.xlu0 %v1513
        %v1515 = vpop.xlane.xlu0 %1514
        %v1516 = vsub.f32 %v1362, %v1494
        %v1517 = vsub.f32 %v1365, %v1497
        %v1518 = vsub.f32 %v1403, %v1500
        %v1519 = vsub.f32 %v1406, %v1503
        %v1520 = vsub.f32 %v1444, %v1506
        %v1521 = vsub.f32 %v1447, %v1509
        %v1522 = vsub.f32 %v1485, %v1512
        %v1523 = vsub.f32 %v1488, %v1515
        %v1524 = vmul.f32 %v1516, 1.442695
        %v1525 = vpow.pop %v1524
        %v1526 = vmul.f32 %v1517, 1.442695
        %v1527 = vpow.pop %v1526
        %v1528 = vmul.f32 %v1518, 1.442695
        %v1529 = vpow.pop %v1528
        %v1530 = vmul.f32 %v1519, 1.442695
        %v1531 = vpow.pop %v1530
        %v1532 = vmul.f32 %v1520, 1.442695
        %v1533 = vpow.pop %v1532
        %v1534 = vmul.f32 %v1521, 1.442695
        %v1535 = vpow.pop %v1534
        %v1536 = vmul.f32 %v1522, 1.442695
        %v1537 = vpow.pop %v1536
        %v1538 = vmul.f32 %v1523, 1.442695
        %v1539 = vpow.pop %v1538
        %v1540 = vsel %vm1491, %v1525, 0.0
        %1541 = vadd.xlane.f32.xlu0 %v1540
        %v1542 = vpop.xlane.xlu0 %1541
        %v1543 = vsel %vm1491, %v1527, 0.0
        %1544 = vadd.xlane.f32.xlu0 %v1543
        %v1545 = vpop.xlane.xlu0 %1544
        %v1546 = vsel %vm1491, %v1529, 0.0
        %1547 = vadd.xlane.f32.xlu0 %v1546
        %v1548 = vpop.xlane.xlu0 %1547
        %v1549 = vsel %vm1491, %v1531, 0.0
        %1550 = vadd.xlane.f32.xlu0 %v1549
        %v1551 = vpop.xlane.xlu0 %1550
        %v1552 = vsel %vm1491, %v1533, 0.0
        %1553 = vadd.xlane.f32.xlu0 %v1552
        %v1554 = vpop.xlane.xlu0 %1553
        %v1555 = vsel %vm1491, %v1535, 0.0
        %1556 = vadd.xlane.f32.xlu0 %v1555
        %v1557 = vpop.xlane.xlu0 %1556
        %v1558 = vsel %vm1491, %v1537, 0.0
        %1559 = vadd.xlane.f32.xlu0 %v1558
        %v1560 = vpop.xlane.xlu0 %1559
        %v1561 = vsel %vm1491, %v1539, 0.0
        %1562 = vadd.xlane.f32.xlu0 %v1561
        %v1563 = vpop.xlane.xlu0 %1562
        %v1564 = vrcp.pop %v1542
        %v1565 = vrcp.pop %v1545
        %v1566 = vrcp.pop %v1548
        %v1567 = vrcp.pop %v1551
        %v1568 = vrcp.pop %v1554
        %v1569 = vrcp.pop %v1557
        %v1570 = vrcp.pop %v1560
        %v1571 = vrcp.pop %v1563
        %v1572 = vmul.f32 %v1525, %v1564
        %v1573 = vmul.f32 %v1527, %v1565
        %v1574 = vmul.f32 %v1529, %v1566
        %v1575 = vmul.f32 %v1531, %v1567
        %v1576 = vmul.f32 %v1533, %v1568
        %v1577 = vmul.f32 %v1535, %v1569
        %v1578 = vmul.f32 %v1537, %v1570
        %v1579 = vmul.f32 %v1539, %v1571
        %v1580 = vpack.c.bf16 %v1573, %v1572
        %v1581 = vpack.c.bf16 %v1575, %v1574
        %v1582 = vpack.c.bf16 %v1577, %v1576
        %v1583 = vpack.c.bf16 %v1579, %v1578
        %v1585 = vsel %vm1491, %v1580, 0
        %1587 = vmatprep.subr.bf16.mxu0 0
        %1588 = vmatpush1.bf16.msra.mxu0 %v1323
        %1589 = vmatprep.subr.bf16.mxu0 0
        %1590 = vmatpush1.bf16.msra.mxu0 0
        %1591 = vmatprep.subr.bf16.mxu0 0
        %1592 = vmatpush1.bf16.msra.mxu0 0
        %1593 = vmatprep.subr.bf16.mxu0 0
        %1594 = vmatpush1.bf16.msra.mxu0 0
        %1595 = vmatprep.subr.bf16.mxu0 0
        %1596 = vmatpush1.bf16.msra.mxu0 0
        %1597 = vmatprep.subr.bf16.mxu0 0
        %1598 = vmatpush1.bf16.msra.mxu0 0
        %1599 = vmatprep.subr.bf16.mxu0 0
        %1600 = vmatpush1.bf16.msra.mxu0 0
        %1601 = vmatprep.subr.bf16.mxu0 0
        %1602 = vmatpush1.bf16.msra.mxu0 0
        %1603 = vmatprep.subr.bf16.mxu0 0
        %1604 = vmatpush1.bf16.msra.mxu0 0
        %1605 = vmatprep.subr.bf16.mxu0 0
        %1606 = vmatpush1.bf16.msra.mxu0 0
        %1607 = vmatprep.subr.bf16.mxu0 0
        %1608 = vmatpush1.bf16.msra.mxu0 0
        %1609 = vmatprep.subr.bf16.mxu0 0
        %1610 = vmatpush1.bf16.msra.mxu0 0
        %1611 = vmatprep.subr.bf16.mxu0 0
        %1612 = vmatpush1.bf16.msra.mxu0 0
        %1613 = vmatprep.subr.bf16.mxu0 0
        %1614 = vmatpush1.bf16.msra.mxu0 0
        %1615 = vmatprep.subr.bf16.mxu0 0
        %1616 = vmatpush1.bf16.msra.mxu0 0
        %1617 = vmatprep.subr.bf16.mxu0 0
        %1618 = vmatpush1.bf16.msra.mxu0 0
        %1619 = vmatprep.mubr.bf16.mxu0 0
        %1620 = vmatmul.mubr.bf16.gmra.mrb[0].mxu0 %v1585
        %v1621 = vpop.f32.mrb[0].mxu0
        %v1622 = vadd.f32 0.0, %v1621
        %v1623 = vpop.f32.mrb[0].mxu0
        %v1624 = vpop.f32.mrb[0].mxu0
        %v1625 = vadd.f32 0.0, %v1624
        %v1626 = vpop.f32.mrb[0].mxu0
        %1627 = vdwg.mxu0
        %v1629 = vsel %vm1491, %v1581, 0
        %1631 = vmatprep.subr.bf16.mxu0 0
        %1632 = vmatpush1.bf16.msra.mxu0 %v1324
        %1633 = vmatprep.subr.bf16.mxu0 0
        %1634 = vmatpush1.bf16.msra.mxu0 0
        %1635 = vmatprep.subr.bf16.mxu0 0
        %1636 = vmatpush1.bf16.msra.mxu0 0
        %1637 = vmatprep.subr.bf16.mxu0 0
        %1638 = vmatpush1.bf16.msra.mxu0 0
        %1639 = vmatprep.subr.bf16.mxu0 0
        %1640 = vmatpush1.bf16.msra.mxu0 0
        %1641 = vmatprep.subr.bf16.mxu0 0
        %1642 = vmatpush1.bf16.msra.mxu0 0
        %1643 = vmatprep.subr.bf16.mxu0 0
        %1644 = vmatpush1.bf16.msra.mxu0 0
        %1645 = vmatprep.subr.bf16.mxu0 0
        %1646 = vmatpush1.bf16.msra.mxu0 0
        %1647 = vmatprep.subr.bf16.mxu0 0
        %1648 = vmatpush1.bf16.msra.mxu0 0
        %1649 = vmatprep.subr.bf16.mxu0 0
        %1650 = vmatpush1.bf16.msra.mxu0 0
        %1651 = vmatprep.subr.bf16.mxu0 0
        %1652 = vmatpush1.bf16.msra.mxu0 0
        %1653 = vmatprep.subr.bf16.mxu0 0
        %1654 = vmatpush1.bf16.msra.mxu0 0
        %1655 = vmatprep.subr.bf16.mxu0 0
        %1656 = vmatpush1.bf16.msra.mxu0 0
        %1657 = vmatprep.subr.bf16.mxu0 0
        %1658 = vmatpush1.bf16.msra.mxu0 0
        %1659 = vmatprep.subr.bf16.mxu0 0
        %1660 = vmatpush1.bf16.msra.mxu0 0
        %1661 = vmatprep.subr.bf16.mxu0 0
        %1662 = vmatpush1.bf16.msra.mxu0 0
        %1663 = vmatprep.mubr.bf16.mxu0 0
        %1664 = vmatmul.mubr.bf16.gmra.mrb[0].mxu0 %v1629
        %v1665 = vpop.f32.mrb[0].mxu0
        %v1666 = vadd.f32 0.0, %v1665
        %v1667 = vpop.f32.mrb[0].mxu0
        %v1668 = vpop.f32.mrb[0].mxu0
        %v1669 = vadd.f32 0.0, %v1668
        %v1670 = vpop.f32.mrb[0].mxu0
        %1671 = vdwg.mxu0
        %v1673 = vsel %vm1491, %v1582, 0
        %1675 = vmatprep.subr.bf16.mxu0 0
        %1676 = vmatpush1.bf16.msra.mxu0 %v1325
        %1677 = vmatprep.subr.bf16.mxu0 0
        %1678 = vmatpush1.bf16.msra.mxu0 0
        %1679 = vmatprep.subr.bf16.mxu0 0
        %1680 = vmatpush1.bf16.msra.mxu0 0
        %1681 = vmatprep.subr.bf16.mxu0 0
        %1682 = vmatpush1.bf16.msra.mxu0 0
        %1683 = vmatprep.subr.bf16.mxu0 0
        %1684 = vmatpush1.bf16.msra.mxu0 0
        %1685 = vmatprep.subr.bf16.mxu0 0
        %1686 = vmatpush1.bf16.msra.mxu0 0
        %1687 = vmatprep.subr.bf16.mxu0 0
        %1688 = vmatpush1.bf16.msra.mxu0 0
        %1689 = vmatprep.subr.bf16.mxu0 0
        %1690 = vmatpush1.bf16.msra.mxu0 0
        %1691 = vmatprep.subr.bf16.mxu0 0
        %1692 = vmatpush1.bf16.msra.mxu0 0
        %1693 = vmatprep.subr.bf16.mxu0 0
        %1694 = vmatpush1.bf16.msra.mxu0 0
        %1695 = vmatprep.subr.bf16.mxu0 0
        %1696 = vmatpush1.bf16.msra.mxu0 0
        %1697 = vmatprep.subr.bf16.mxu0 0
        %1698 = vmatpush1.bf16.msra.mxu0 0
        %1699 = vmatprep.subr.bf16.mxu0 0
        %1700 = vmatpush1.bf16.msra.mxu0 0
        %1701 = vmatprep.subr.bf16.mxu0 0
        %1702 = vmatpush1.bf16.msra.mxu0 0
        %1703 = vmatprep.subr.bf16.mxu0 0
        %1704 = vmatpush1.bf16.msra.mxu0 0
        %1705 = vmatprep.subr.bf16.mxu0 0
        %1706 = vmatpush1.bf16.msra.mxu0 0
        %1707 = vmatprep.mubr.bf16.mxu0 0
        %1708 = vmatmul.mubr.bf16.gmra.mrb[0].mxu0 %v1673
        %v1709 = vpop.f32.mrb[0].mxu0
        %v1710 = vadd.f32 0.0, %v1709
        %v1711 = vpop.f32.mrb[0].mxu0
        %v1712 = vpop.f32.mrb[0].mxu0
        %v1713 = vadd.f32 0.0, %v1712
        %v1714 = vpop.f32.mrb[0].mxu0
        %1715 = vdwg.mxu0
        %v1717 = vsel %vm1491, %v1583, 0
        %1719 = vmatprep.subr.bf16.mxu0 0
        %1720 = vmatpush1.bf16.msra.mxu0 %v1326
        %1721 = vmatprep.subr.bf16.mxu0 0
        %1722 = vmatpush1.bf16.msra.mxu0 0
        %1723 = vmatprep.subr.bf16.mxu0 0
        %1724 = vmatpush1.bf16.msra.mxu0 0
        %1725 = vmatprep.subr.bf16.mxu0 0
        %1726 = vmatpush1.bf16.msra.mxu0 0
        %1727 = vmatprep.subr.bf16.mxu0 0
        %1728 = vmatpush1.bf16.msra.mxu0 0
        %1729 = vmatprep.subr.bf16.mxu0 0
        %1730 = vmatpush1.bf16.msra.mxu0 0
        %1731 = vmatprep.subr.bf16.mxu0 0
        %1732 = vmatpush1.bf16.msra.mxu0 0
        %1733 = vmatprep.subr.bf16.mxu0 0
        %1734 = vmatpush1.bf16.msra.mxu0 0
        %1735 = vmatprep.subr.bf16.mxu0 0
        %1736 = vmatpush1.bf16.msra.mxu0 0
        %1737 = vmatprep.subr.bf16.mxu0 0
        %1738 = vmatpush1.bf16.msra.mxu0 0
        %1739 = vmatprep.subr.bf16.mxu0 0
        %1740 = vmatpush1.bf16.msra.mxu0 0
        %1741 = vmatprep.subr.bf16.mxu0 0
        %1742 = vmatpush1.bf16.msra.mxu0 0
        %1743 = vmatprep.subr.bf16.mxu0 0
        %1744 = vmatpush1.bf16.msra.mxu0 0
        %1745 = vmatprep.subr.bf16.mxu0 0
        %1746 = vmatpush1.bf16.msra.mxu0 0
        %1747 = vmatprep.subr.bf16.mxu0 0
        %1748 = vmatpush1.bf16.msra.mxu0 0
        %1749 = vmatprep.subr.bf16.mxu0 0
        %1750 = vmatpush1.bf16.msra.mxu0 0
        %1751 = vmatprep.mubr.bf16.mxu0 0
        %1752 = vmatmul.mubr.bf16.gmra.mrb[0].mxu0 %v1717
        %v1753 = vpop.f32.mrb[0].mxu0
        %v1754 = vadd.f32 0.0, %v1753
        %v1755 = vpop.f32.mrb[0].mxu0
        %v1756 = vpop.f32.mrb[0].mxu0
        %v1757 = vadd.f32 0.0, %v1756
        %v1758 = vpop.f32.mrb[0].mxu0
        %1759 = vdwg.mxu0
        %1760 = vst [vmem:[#allocation2] sm:$0xff] %v1622
        %1761 = vst [vmem:[#allocation2 + $0x10] sm:$0xff] %v1625
        %1762 = vst [vmem:[#allocation2 + $0x20] sm:$0xff] %v1666
        %1763 = vst [vmem:[#allocation2 + $0x30] sm:$0xff] %v1669
        %1764 = vst [vmem:[#allocation2 + $0x40] sm:$0xff] %v1710
        %1765 = vst [vmem:[#allocation2 + $0x50] sm:$0xff] %v1713
        %1766 = vst [vmem:[#allocation2 + $0x60] sm:$0xff] %v1754
        %1767 = vst [vmem:[#allocation2 + $0x70] sm:$0xff] %v1757
        %v1768 = vpack.c.bf16 %v1137, %v1133
        %v1769 = vpack.c.bf16 %v1147, %v1143
        %v1770 = vpack.c.bf16 %v1157, %v1153
        %v1771 = vpack.c.bf16 %v1167, %v1163
        %v1772 = vpack.c.bf16 %v1210, %v1206
        %v1773 = vpack.c.bf16 %v1220, %v1216
        %v1774 = vpack.c.bf16 %v1230, %v1226
        %v1775 = vpack.c.bf16 %v1240, %v1236
        %v1776 = vpack.c.bf16 %v1283, %v1279
        %v1777 = vpack.c.bf16 %v1293, %v1289
        %v1778 = vpack.c.bf16 %v1303, %v1299
        %v1779 = vpack.c.bf16 %v1313, %v1309
        %1780 = vmatprep.subr.bf16.mxu0 0
        %1781 = vmatpush1.bf16.xpose.msra.mxu0 %v1772
        %1782 = vmatprep.subr.bf16.mxu0 0
        %1783 = vmatpush1.bf16.xpose.msra.mxu0 0
        %1784 = vmatprep.subr.bf16.mxu0 0
        %1785 = vmatpush1.bf16.xpose.msra.mxu0 0
        %1786 = vmatprep.subr.bf16.mxu0 0
        %1787 = vmatpush1.bf16.xpose.msra.mxu0 0
        %1788 = vmatprep.subr.bf16.mxu0 0
        %1789 = vmatpush1.bf16.xpose.msra.mxu0 0
        %1790 = vmatprep.subr.bf16.mxu0 0
        %1791 = vmatpush1.bf16.xpose.msra.mxu0 0
        %1792 = vmatprep.subr.bf16.mxu0 0
        %1793 = vmatpush1.bf16.xpose.msra.mxu0 0
        %1794 = vmatprep.subr.bf16.mxu0 0
        %1795 = vmatpush1.bf16.xpose.msra.mxu0 0
        %1796 = vmatprep.subr.bf16.mxu0 0
        %1797 = vmatpush1.bf16.xpose.msra.mxu0 0
        %1798 = vmatprep.subr.bf16.mxu0 0
        %1799 = vmatpush1.bf16.xpose.msra.mxu0 0
        %1800 = vmatprep.subr.bf16.mxu0 0
        %1801 = vmatpush1.bf16.xpose.msra.mxu0 0
        %1802 = vmatprep.subr.bf16.mxu0 0
        %1803 = vmatpush1.bf16.xpose.msra.mxu0 0
        %1804 = vmatprep.subr.bf16.mxu0 0
        %1805 = vmatpush1.bf16.xpose.msra.mxu0 0
        %1806 = vmatprep.subr.bf16.mxu0 0
        %1807 = vmatpush1.bf16.xpose.msra.mxu0 0
        %1808 = vmatprep.subr.bf16.mxu0 0
        %1809 = vmatpush1.bf16.xpose.msra.mxu0 0
        %1810 = vmatprep.subr.bf16.mxu0 0
        %1811 = vmatpush1.bf16.xpose.msra.mxu0 0
        %1812 = vmatprep.mubr.bf16.mxu0 0
        %1813 = vmatmul.mubr.bf16.gmra.mrb[0].mxu0 %v1768
        %v1814 = vpop.f32.mrb[0].mxu0
        %v1815 = vadd.f32 0.0, %v1814
        %v1816 = vpop.f32.mrb[0].mxu0
        %v1817 = vpop.f32.mrb[0].mxu0
        %v1818 = vadd.f32 0.0, %v1817
        %v1819 = vpop.f32.mrb[0].mxu0
        %1820 = vdwg.mxu0
        %1821 = vmatprep.subr.bf16.mxu0 0
        %1822 = vmatpush1.bf16.xpose.msra.mxu0 %v1773
        %1823 = vmatprep.subr.bf16.mxu0 0
        %1824 = vmatpush1.bf16.xpose.msra.mxu0 0
        %1825 = vmatprep.subr.bf16.mxu0 0
        %1826 = vmatpush1.bf16.xpose.msra.mxu0 0
        %1827 = vmatprep.subr.bf16.mxu0 0
        %1828 = vmatpush1.bf16.xpose.msra.mxu0 0
        %1829 = vmatprep.subr.bf16.mxu0 0
        %1830 = vmatpush1.bf16.xpose.msra.mxu0 0
        %1831 = vmatprep.subr.bf16.mxu0 0
        %1832 = vmatpush1.bf16.xpose.msra.mxu0 0
        %1833 = vmatprep.subr.bf16.mxu0 0
        %1834 = vmatpush1.bf16.xpose.msra.mxu0 0
        %1835 = vmatprep.subr.bf16.mxu0 0
        %1836 = vmatpush1.bf16.xpose.msra.mxu0 0
        %1837 = vmatprep.subr.bf16.mxu0 0
        %1838 = vmatpush1.bf16.xpose.msra.mxu0 0
        %1839 = vmatprep.subr.bf16.mxu0 0
        %1840 = vmatpush1.bf16.xpose.msra.mxu0 0
        %1841 = vmatprep.subr.bf16.mxu0 0
        %1842 = vmatpush1.bf16.xpose.msra.mxu0 0
        %1843 = vmatprep.subr.bf16.mxu0 0
        %1844 = vmatpush1.bf16.xpose.msra.mxu0 0
        %1845 = vmatprep.subr.bf16.mxu0 0
        %1846 = vmatpush1.bf16.xpose.msra.mxu0 0
        %1847 = vmatprep.subr.bf16.mxu0 0
        %1848 = vmatpush1.bf16.xpose.msra.mxu0 0
        %1849 = vmatprep.subr.bf16.mxu0 0
        %1850 = vmatpush1.bf16.xpose.msra.mxu0 0
        %1851 = vmatprep.subr.bf16.mxu0 0
        %1852 = vmatpush1.bf16.xpose.msra.mxu0 0
        %1853 = vmatprep.mubr.bf16.mxu0 0
        %1854 = vmatmul.mubr.bf16.gmra.mrb[0].mxu0 %v1769
        %v1855 = vpop.f32.mrb[0].mxu0
        %v1856 = vadd.f32 0.0, %v1855
        %v1857 = vpop.f32.mrb[0].mxu0
        %v1858 = vpop.f32.mrb[0].mxu0
        %v1859 = vadd.f32 0.0, %v1858
        %v1860 = vpop.f32.mrb[0].mxu0
        %1861 = vdwg.mxu0
        %1862 = vmatprep.subr.bf16.mxu0 0
        %1863 = vmatpush1.bf16.xpose.msra.mxu0 %v1774
        %1864 = vmatprep.subr.bf16.mxu0 0
        %1865 = vmatpush1.bf16.xpose.msra.mxu0 0
        %1866 = vmatprep.subr.bf16.mxu0 0
        %1867 = vmatpush1.bf16.xpose.msra.mxu0 0
        %1868 = vmatprep.subr.bf16.mxu0 0
        %1869 = vmatpush1.bf16.xpose.msra.mxu0 0
        %1870 = vmatprep.subr.bf16.mxu0 0
        %1871 = vmatpush1.bf16.xpose.msra.mxu0 0
        %1872 = vmatprep.subr.bf16.mxu0 0
        %1873 = vmatpush1.bf16.xpose.msra.mxu0 0
        %1874 = vmatprep.subr.bf16.mxu0 0
        %1875 = vmatpush1.bf16.xpose.msra.mxu0 0
        %1876 = vmatprep.subr.bf16.mxu0 0
        %1877 = vmatpush1.bf16.xpose.msra.mxu0 0
        %1878 = vmatprep.subr.bf16.mxu0 0
        %1879 = vmatpush1.bf16.xpose.msra.mxu0 0
        %1880 = vmatprep.subr.bf16.mxu0 0
        %1881 = vmatpush1.bf16.xpose.msra.mxu0 0
        %1882 = vmatprep.subr.bf16.mxu0 0
        %1883 = vmatpush1.bf16.xpose.msra.mxu0 0
        %1884 = vmatprep.subr.bf16.mxu0 0
        %1885 = vmatpush1.bf16.xpose.msra.mxu0 0
        %1886 = vmatprep.subr.bf16.mxu0 0
        %1887 = vmatpush1.bf16.xpose.msra.mxu0 0
        %1888 = vmatprep.subr.bf16.mxu0 0
        %1889 = vmatpush1.bf16.xpose.msra.mxu0 0
        %1890 = vmatprep.subr.bf16.mxu0 0
        %1891 = vmatpush1.bf16.xpose.msra.mxu0 0
        %1892 = vmatprep.subr.bf16.mxu0 0
        %1893 = vmatpush1.bf16.xpose.msra.mxu0 0
        %1894 = vmatprep.mubr.bf16.mxu0 0
        %1895 = vmatmul.mubr.bf16.gmra.mrb[0].mxu0 %v1770
        %v1896 = vpop.f32.mrb[0].mxu0
        %v1897 = vadd.f32 0.0, %v1896
        %v1898 = vpop.f32.mrb[0].mxu0
        %v1899 = vpop.f32.mrb[0].mxu0
        %v1900 = vadd.f32 0.0, %v1899
        %v1901 = vpop.f32.mrb[0].mxu0
        %1902 = vdwg.mxu0
        %1903 = vmatprep.subr.bf16.mxu0 0
        %1904 = vmatpush1.bf16.xpose.msra.mxu0 %v1775
        %1905 = vmatprep.subr.bf16.mxu0 0
        %1906 = vmatpush1.bf16.xpose.msra.mxu0 0
        %1907 = vmatprep.subr.bf16.mxu0 0
        %1908 = vmatpush1.bf16.xpose.msra.mxu0 0
        %1909 = vmatprep.subr.bf16.mxu0 0
        %1910 = vmatpush1.bf16.xpose.msra.mxu0 0
        %1911 = vmatprep.subr.bf16.mxu0 0
        %1912 = vmatpush1.bf16.xpose.msra.mxu0 0
        %1913 = vmatprep.subr.bf16.mxu0 0
        %1914 = vmatpush1.bf16.xpose.msra.mxu0 0
        %1915 = vmatprep.subr.bf16.mxu0 0
        %1916 = vmatpush1.bf16.xpose.msra.mxu0 0
        %1917 = vmatprep.subr.bf16.mxu0 0
        %1918 = vmatpush1.bf16.xpose.msra.mxu0 0
        %1919 = vmatprep.subr.bf16.mxu0 0
        %1920 = vmatpush1.bf16.xpose.msra.mxu0 0
        %1921 = vmatprep.subr.bf16.mxu0 0
        %1922 = vmatpush1.bf16.xpose.msra.mxu0 0
        %1923 = vmatprep.subr.bf16.mxu0 0
        %1924 = vmatpush1.bf16.xpose.msra.mxu0 0
        %1925 = vmatprep.subr.bf16.mxu0 0
        %1926 = vmatpush1.bf16.xpose.msra.mxu0 0
        %1927 = vmatprep.subr.bf16.mxu0 0
        %1928 = vmatpush1.bf16.xpose.msra.mxu0 0
        %1929 = vmatprep.subr.bf16.mxu0 0
        %1930 = vmatpush1.bf16.xpose.msra.mxu0 0
        %1931 = vmatprep.subr.bf16.mxu0 0
        %1932 = vmatpush1.bf16.xpose.msra.mxu0 0
        %1933 = vmatprep.subr.bf16.mxu0 0
        %1934 = vmatpush1.bf16.xpose.msra.mxu0 0
        %1935 = vmatprep.mubr.bf16.mxu0 0
        %1936 = vmatmul.mubr.bf16.gmra.mrb[0].mxu0 %v1771
        %v1937 = vpop.f32.mrb[0].mxu0
        %v1938 = vadd.f32 0.0, %v1937
        %v1939 = vpop.f32.mrb[0].mxu0
        %v1940 = vpop.f32.mrb[0].mxu0
        %v1941 = vadd.f32 0.0, %v1940
        %v1942 = vpop.f32.mrb[0].mxu0
        %1943 = vdwg.mxu0
        %v1944 = vsel %vm1491, %v1815, -inf
        %1945 = vmax.xlane.f32.xlu0 %v1944
        %v1946 = vpop.xlane.xlu0 %1945
        %v1947 = vsel %vm1491, %v1818, -inf
        %1948 = vmax.xlane.f32.xlu0 %v1947
        %v1949 = vpop.xlane.xlu0 %1948
        %v1950 = vsel %vm1491, %v1856, -inf
        %1951 = vmax.xlane.f32.xlu0 %v1950
        %v1952 = vpop.xlane.xlu0 %1951
        %v1953 = vsel %vm1491, %v1859, -inf
        %1954 = vmax.xlane.f32.xlu0 %v1953
        %v1955 = vpop.xlane.xlu0 %1954
        %v1956 = vsel %vm1491, %v1897, -inf
        %1957 = vmax.xlane.f32.xlu0 %v1956
        %v1958 = vpop.xlane.xlu0 %1957
        %v1959 = vsel %vm1491, %v1900, -inf
        %1960 = vmax.xlane.f32.xlu0 %v1959
        %v1961 = vpop.xlane.xlu0 %1960
        %v1962 = vsel %vm1491, %v1938, -inf
        %1963 = vmax.xlane.f32.xlu0 %v1962
        %v1964 = vpop.xlane.xlu0 %1963
        %v1965 = vsel %vm1491, %v1941, -inf
        %1966 = vmax.xlane.f32.xlu0 %v1965
        %v1967 = vpop.xlane.xlu0 %1966
        %v1968 = vsub.f32 %v1815, %v1946
        %v1969 = vsub.f32 %v1818, %v1949
        %v1970 = vsub.f32 %v1856, %v1952
        %v1971 = vsub.f32 %v1859, %v1955
        %v1972 = vsub.f32 %v1897, %v1958
        %v1973 = vsub.f32 %v1900, %v1961
        %v1974 = vsub.f32 %v1938, %v1964
        %v1975 = vsub.f32 %v1941, %v1967
        %v1976 = vmul.f32 %v1968, 1.442695
        %v1977 = vpow.pop %v1976
        %v1978 = vmul.f32 %v1969, 1.442695
        %v1979 = vpow.pop %v1978
        %v1980 = vmul.f32 %v1970, 1.442695
        %v1981 = vpow.pop %v1980
        %v1982 = vmul.f32 %v1971, 1.442695
        %v1983 = vpow.pop %v1982
        %v1984 = vmul.f32 %v1972, 1.442695
        %v1985 = vpow.pop %v1984
        %v1986 = vmul.f32 %v1973, 1.442695
        %v1987 = vpow.pop %v1986
        %v1988 = vmul.f32 %v1974, 1.442695
        %v1989 = vpow.pop %v1988
        %v1990 = vmul.f32 %v1975, 1.442695
        %v1991 = vpow.pop %v1990
        %v1992 = vsel %vm1491, %v1977, 0.0
        %1993 = vadd.xlane.f32.xlu0 %v1992
        %v1994 = vpop.xlane.xlu0 %1993
        %v1995 = vsel %vm1491, %v1979, 0.0
        %1996 = vadd.xlane.f32.xlu0 %v1995
        %v1997 = vpop.xlane.xlu0 %1996
        %v1998 = vsel %vm1491, %v1981, 0.0
        %1999 = vadd.xlane.f32.xlu0 %v1998
        %v2000 = vpop.xlane.xlu0 %1999
        %v2001 = vsel %vm1491, %v1983, 0.0
        %2002 = vadd.xlane.f32.xlu0 %v2001
        %v2003 = vpop.xlane.xlu0 %2002
        %v2004 = vsel %vm1491, %v1985, 0.0
        %2005 = vadd.xlane.f32.xlu0 %v2004
        %v2006 = vpop.xlane.xlu0 %2005
        %v2007 = vsel %vm1491, %v1987, 0.0
        %2008 = vadd.xlane.f32.xlu0 %v2007
        %v2009 = vpop.xlane.xlu0 %2008
        %v2010 = vsel %vm1491, %v1989, 0.0
        %2011 = vadd.xlane.f32.xlu0 %v2010
        %v2012 = vpop.xlane.xlu0 %2011
        %v2013 = vsel %vm1491, %v1991, 0.0
        %2014 = vadd.xlane.f32.xlu0 %v2013
        %v2015 = vpop.xlane.xlu0 %2014
        %v2016 = vrcp.pop %v1994
        %v2017 = vrcp.pop %v1997
        %v2018 = vrcp.pop %v2000
        %v2019 = vrcp.pop %v2003
        %v2020 = vrcp.pop %v2006
        %v2021 = vrcp.pop %v2009
        %v2022 = vrcp.pop %v2012
        %v2023 = vrcp.pop %v2015
        %v2024 = vmul.f32 %v1977, %v2016
        %v2025 = vmul.f32 %v1979, %v2017
        %v2026 = vmul.f32 %v1981, %v2018
        %v2027 = vmul.f32 %v1983, %v2019
        %v2028 = vmul.f32 %v1985, %v2020
        %v2029 = vmul.f32 %v1987, %v2021
        %v2030 = vmul.f32 %v1989, %v2022
        %v2031 = vmul.f32 %v1991, %v2023
        %v2032 = vpack.c.bf16 %v2025, %v2024
        %v2033 = vpack.c.bf16 %v2027, %v2026
        %v2034 = vpack.c.bf16 %v2029, %v2028
        %v2035 = vpack.c.bf16 %v2031, %v2030
        %v2037 = vsel %vm1491, %v2032, 0
        %2039 = vmatprep.subr.bf16.mxu0 0
        %2040 = vmatpush1.bf16.msra.mxu0 %v1776
        %2041 = vmatprep.subr.bf16.mxu0 0
        %2042 = vmatpush1.bf16.msra.mxu0 0
        %2043 = vmatprep.subr.bf16.mxu0 0
        %2044 = vmatpush1.bf16.msra.mxu0 0
        %2045 = vmatprep.subr.bf16.mxu0 0
        %2046 = vmatpush1.bf16.msra.mxu0 0
        %2047 = vmatprep.subr.bf16.mxu0 0
        %2048 = vmatpush1.bf16.msra.mxu0 0
        %2049 = vmatprep.subr.bf16.mxu0 0
        %2050 = vmatpush1.bf16.msra.mxu0 0
        %2051 = vmatprep.subr.bf16.mxu0 0
        %2052 = vmatpush1.bf16.msra.mxu0 0
        %2053 = vmatprep.subr.bf16.mxu0 0
        %2054 = vmatpush1.bf16.msra.mxu0 0
        %2055 = vmatprep.subr.bf16.mxu0 0
        %2056 = vmatpush1.bf16.msra.mxu0 0
        %2057 = vmatprep.subr.bf16.mxu0 0
        %2058 = vmatpush1.bf16.msra.mxu0 0
        %2059 = vmatprep.subr.bf16.mxu0 0
        %2060 = vmatpush1.bf16.msra.mxu0 0
        %2061 = vmatprep.subr.bf16.mxu0 0
        %2062 = vmatpush1.bf16.msra.mxu0 0
        %2063 = vmatprep.subr.bf16.mxu0 0
        %2064 = vmatpush1.bf16.msra.mxu0 0
        %2065 = vmatprep.subr.bf16.mxu0 0
        %2066 = vmatpush1.bf16.msra.mxu0 0
        %2067 = vmatprep.subr.bf16.mxu0 0
        %2068 = vmatpush1.bf16.msra.mxu0 0
        %2069 = vmatprep.subr.bf16.mxu0 0
        %2070 = vmatpush1.bf16.msra.mxu0 0
        %2071 = vmatprep.mubr.bf16.mxu0 0
        %2072 = vmatmul.mubr.bf16.gmra.mrb[0].mxu0 %v2037
        %v2073 = vpop.f32.mrb[0].mxu0
        %v2074 = vadd.f32 0.0, %v2073
        %v2075 = vpop.f32.mrb[0].mxu0
        %v2076 = vpop.f32.mrb[0].mxu0
        %v2077 = vadd.f32 0.0, %v2076
        %v2078 = vpop.f32.mrb[0].mxu0
        %2079 = vdwg.mxu0
        %v2081 = vsel %vm1491, %v2033, 0
        %2083 = vmatprep.subr.bf16.mxu0 0
        %2084 = vmatpush1.bf16.msra.mxu0 %v1777
        %2085 = vmatprep.subr.bf16.mxu0 0
        %2086 = vmatpush1.bf16.msra.mxu0 0
        %2087 = vmatprep.subr.bf16.mxu0 0
        %2088 = vmatpush1.bf16.msra.mxu0 0
        %2089 = vmatprep.subr.bf16.mxu0 0
        %2090 = vmatpush1.bf16.msra.mxu0 0
        %2091 = vmatprep.subr.bf16.mxu0 0
        %2092 = vmatpush1.bf16.msra.mxu0 0
        %2093 = vmatprep.subr.bf16.mxu0 0
        %2094 = vmatpush1.bf16.msra.mxu0 0
        %2095 = vmatprep.subr.bf16.mxu0 0
        %2096 = vmatpush1.bf16.msra.mxu0 0
        %2097 = vmatprep.subr.bf16.mxu0 0
        %2098 = vmatpush1.bf16.msra.mxu0 0
        %2099 = vmatprep.subr.bf16.mxu0 0
        %2100 = vmatpush1.bf16.msra.mxu0 0
        %2101 = vmatprep.subr.bf16.mxu0 0
        %2102 = vmatpush1.bf16.msra.mxu0 0
        %2103 = vmatprep.subr.bf16.mxu0 0
        %2104 = vmatpush1.bf16.msra.mxu0 0
        %2105 = vmatprep.subr.bf16.mxu0 0
        %2106 = vmatpush1.bf16.msra.mxu0 0
        %2107 = vmatprep.subr.bf16.mxu0 0
        %2108 = vmatpush1.bf16.msra.mxu0 0
        %2109 = vmatprep.subr.bf16.mxu0 0
        %2110 = vmatpush1.bf16.msra.mxu0 0
        %2111 = vmatprep.subr.bf16.mxu0 0
        %2112 = vmatpush1.bf16.msra.mxu0 0
        %2113 = vmatprep.subr.bf16.mxu0 0
        %2114 = vmatpush1.bf16.msra.mxu0 0
        %2115 = vmatprep.mubr.bf16.mxu0 0
        %2116 = vmatmul.mubr.bf16.gmra.mrb[0].mxu0 %v2081
        %v2117 = vpop.f32.mrb[0].mxu0
        %v2118 = vadd.f32 0.0, %v2117
        %v2119 = vpop.f32.mrb[0].mxu0
        %v2120 = vpop.f32.mrb[0].mxu0
        %v2121 = vadd.f32 0.0, %v2120
        %v2122 = vpop.f32.mrb[0].mxu0
        %2123 = vdwg.mxu0
        %v2125 = vsel %vm1491, %v2034, 0
        %2127 = vmatprep.subr.bf16.mxu0 0
        %2128 = vmatpush1.bf16.msra.mxu0 %v1778
        %2129 = vmatprep.subr.bf16.mxu0 0
        %2130 = vmatpush1.bf16.msra.mxu0 0
        %2131 = vmatprep.subr.bf16.mxu0 0
        %2132 = vmatpush1.bf16.msra.mxu0 0
        %2133 = vmatprep.subr.bf16.mxu0 0
        %2134 = vmatpush1.bf16.msra.mxu0 0
        %2135 = vmatprep.subr.bf16.mxu0 0
        %2136 = vmatpush1.bf16.msra.mxu0 0
        %2137 = vmatprep.subr.bf16.mxu0 0
        %2138 = vmatpush1.bf16.msra.mxu0 0
        %2139 = vmatprep.subr.bf16.mxu0 0
        %2140 = vmatpush1.bf16.msra.mxu0 0
        %2141 = vmatprep.subr.bf16.mxu0 0
        %2142 = vmatpush1.bf16.msra.mxu0 0
        %2143 = vmatprep.subr.bf16.mxu0 0
        %2144 = vmatpush1.bf16.msra.mxu0 0
        %2145 = vmatprep.subr.bf16.mxu0 0
        %2146 = vmatpush1.bf16.msra.mxu0 0
        %2147 = vmatprep.subr.bf16.mxu0 0
        %2148 = vmatpush1.bf16.msra.mxu0 0
        %2149 = vmatprep.subr.bf16.mxu0 0
        %2150 = vmatpush1.bf16.msra.mxu0 0
        %2151 = vmatprep.subr.bf16.mxu0 0
        %2152 = vmatpush1.bf16.msra.mxu0 0
        %2153 = vmatprep.subr.bf16.mxu0 0
        %2154 = vmatpush1.bf16.msra.mxu0 0
        %2155 = vmatprep.subr.bf16.mxu0 0
        %2156 = vmatpush1.bf16.msra.mxu0 0
        %2157 = vmatprep.subr.bf16.mxu0 0
        %2158 = vmatpush1.bf16.msra.mxu0 0
        %2159 = vmatprep.mubr.bf16.mxu0 0
        %2160 = vmatmul.mubr.bf16.gmra.mrb[0].mxu0 %v2125
        %v2161 = vpop.f32.mrb[0].mxu0
        %v2162 = vadd.f32 0.0, %v2161
        %v2163 = vpop.f32.mrb[0].mxu0
        %v2164 = vpop.f32.mrb[0].mxu0
        %v2165 = vadd.f32 0.0, %v2164
        %v2166 = vpop.f32.mrb[0].mxu0
        %2167 = vdwg.mxu0
        %v2169 = vsel %vm1491, %v2035, 0
        %2171 = vmatprep.subr.bf16.mxu0 0
        %2172 = vmatpush1.bf16.msra.mxu0 %v1779
        %2173 = vmatprep.subr.bf16.mxu0 0
        %2174 = vmatpush1.bf16.msra.mxu0 0
        %2175 = vmatprep.subr.bf16.mxu0 0
        %2176 = vmatpush1.bf16.msra.mxu0 0
        %2177 = vmatprep.subr.bf16.mxu0 0
        %2178 = vmatpush1.bf16.msra.mxu0 0
        %2179 = vmatprep.subr.bf16.mxu0 0
        %2180 = vmatpush1.bf16.msra.mxu0 0
        %2181 = vmatprep.subr.bf16.mxu0 0
        %2182 = vmatpush1.bf16.msra.mxu0 0
        %2183 = vmatprep.subr.bf16.mxu0 0
        %2184 = vmatpush1.bf16.msra.mxu0 0
        %2185 = vmatprep.subr.bf16.mxu0 0
        %2186 = vmatpush1.bf16.msra.mxu0 0
        %2187 = vmatprep.subr.bf16.mxu0 0
        %2188 = vmatpush1.bf16.msra.mxu0 0
        %2189 = vmatprep.subr.bf16.mxu0 0
        %2190 = vmatpush1.bf16.msra.mxu0 0
        %2191 = vmatprep.subr.bf16.mxu0 0
        %2192 = vmatpush1.bf16.msra.mxu0 0
        %2193 = vmatprep.subr.bf16.mxu0 0
        %2194 = vmatpush1.bf16.msra.mxu0 0
        %2195 = vmatprep.subr.bf16.mxu0 0
        %2196 = vmatpush1.bf16.msra.mxu0 0
        %2197 = vmatprep.subr.bf16.mxu0 0
        %2198 = vmatpush1.bf16.msra.mxu0 0
        %2199 = vmatprep.subr.bf16.mxu0 0
        %2200 = vmatpush1.bf16.msra.mxu0 0
        %2201 = vmatprep.subr.bf16.mxu0 0
        %2202 = vmatpush1.bf16.msra.mxu0 0
        %2203 = vmatprep.mubr.bf16.mxu0 0
        %2204 = vmatmul.mubr.bf16.gmra.mrb[0].mxu0 %v2169
        %v2205 = vpop.f32.mrb[0].mxu0
        %v2206 = vadd.f32 0.0, %v2205
        %v2207 = vpop.f32.mrb[0].mxu0
        %v2208 = vpop.f32.mrb[0].mxu0
        %v2209 = vadd.f32 0.0, %v2208
        %v2210 = vpop.f32.mrb[0].mxu0
        %2211 = vdwg.mxu0
        %2212 = vst [vmem:[#allocation2 + $0x8] sm:$0xff] %v2074
        %2213 = vst [vmem:[#allocation2 + $0x18] sm:$0xff] %v2077
        %2214 = vst [vmem:[#allocation2 + $0x28] sm:$0xff] %v2118
        %2215 = vst [vmem:[#allocation2 + $0x38] sm:$0xff] %v2121
        %2216 = vst [vmem:[#allocation2 + $0x48] sm:$0xff] %v2162
        %2217 = vst [vmem:[#allocation2 + $0x58] sm:$0xff] %v2165
        %2218 = vst [vmem:[#allocation2 + $0x68] sm:$0xff] %v2206
        %2219 = vst [vmem:[#allocation2 + $0x78] sm:$0xff] %v2209
        %v2220 = vld [vmem:[#allocation2] sm:$0xff]
        %v2221 = vld [vmem:[#allocation2 + $0x8] sm:$0xff]
        %v2222 = vld [vmem:[#allocation2 + $0x10] sm:$0xff]
        %v2223 = vld [vmem:[#allocation2 + $0x18] sm:$0xff]
        %v2224 = vld [vmem:[#allocation2 + $0x20] sm:$0xff]
        %v2225 = vld [vmem:[#allocation2 + $0x28] sm:$0xff]
        %v2226 = vld [vmem:[#allocation2 + $0x30] sm:$0xff]
        %v2227 = vld [vmem:[#allocation2 + $0x38] sm:$0xff]
        %v2228 = vld [vmem:[#allocation2 + $0x40] sm:$0xff]
        %v2229 = vld [vmem:[#allocation2 + $0x48] sm:$0xff]
        %v2230 = vld [vmem:[#allocation2 + $0x50] sm:$0xff]
        %v2231 = vld [vmem:[#allocation2 + $0x58] sm:$0xff]
        %v2232 = vld [vmem:[#allocation2 + $0x60] sm:$0xff]
        %v2233 = vld [vmem:[#allocation2 + $0x68] sm:$0xff]
        %v2234 = vld [vmem:[#allocation2 + $0x70] sm:$0xff]
        %v2235 = vld [vmem:[#allocation2 + $0x78] sm:$0xff]
        %v2236 = vpack.c.bf16 %v2222, %v2220
        %v2237 = vpack.c.bf16 %v2223, %v2221
        %v2238 = vpack.c.bf16 %v2226, %v2224
        %v2239 = vpack.c.bf16 %v2227, %v2225
        %v2240 = vpack.c.bf16 %v2230, %v2228
        %v2241 = vpack.c.bf16 %v2231, %v2229
        %v2242 = vpack.c.bf16 %v2234, %v2232
        %v2243 = vpack.c.bf16 %v2235, %v2233
        %v2244 = vld [vmem:[%s331] sm:$0xff]
        %v2245 = vld [vmem:[%s331 + $0x8] sm:$0xff]
        %v2246 = vld [vmem:[%s331 + $0x10] sm:$0xff]
        %v2247 = vld [vmem:[%s331 + $0x18] sm:$0xff]
        %v2248 = vld [vmem:[%s331 + $0x20] sm:$0xff]
        %v2249 = vld [vmem:[%s331 + $0x28] sm:$0xff]
        %v2250 = vld [vmem:[%s331 + $0x30] sm:$0xff]
        %v2251 = vld [vmem:[%s331 + $0x38] sm:$0xff]
        %v2252 = vld [vmem:[%s331 + $0x40] sm:$0xff]
        %v2253 = vld [vmem:[%s331 + $0x48] sm:$0xff]
        %v2254 = vld [vmem:[%s331 + $0x50] sm:$0xff]
        %v2255 = vld [vmem:[%s331 + $0x58] sm:$0xff]
        %v2256 = vld [vmem:[%s331 + $0x60] sm:$0xff]
        %v2257 = vld [vmem:[%s331 + $0x68] sm:$0xff]
        %v2258 = vld [vmem:[%s331 + $0x70] sm:$0xff]
        %v2259 = vld [vmem:[%s331 + $0x78] sm:$0xff]
        %v2260 = vld [vmem:[%s331 + $0x80] sm:$0xff]
        %v2261 = vld [vmem:[%s331 + $0x88] sm:$0xff]
        %v2262 = vld [vmem:[%s331 + $0x90] sm:$0xff]
        %v2263 = vld [vmem:[%s331 + $0x98] sm:$0xff]
        %v2264 = vld [vmem:[%s331 + $0xa0] sm:$0xff]
        %v2265 = vld [vmem:[%s331 + $0xa8] sm:$0xff]
        %v2266 = vld [vmem:[%s331 + $0xb0] sm:$0xff]
        %v2267 = vld [vmem:[%s331 + $0xb8] sm:$0xff]
        %v2268 = vld [vmem:[%s331 + $0xc0] sm:$0xff]
        %v2269 = vld [vmem:[%s331 + $0xc8] sm:$0xff]
        %v2270 = vld [vmem:[%s331 + $0xd0] sm:$0xff]
        %v2271 = vld [vmem:[%s331 + $0xd8] sm:$0xff]
        %v2272 = vld [vmem:[%s331 + $0xe0] sm:$0xff]
        %v2273 = vld [vmem:[%s331 + $0xe8] sm:$0xff]
        %v2274 = vld [vmem:[%s331 + $0xf0] sm:$0xff]
        %v2275 = vld [vmem:[%s331 + $0xf8] sm:$0xff]
        %v2276 = vlaneseq
        %v2277 = vshrl.u32 %v2276, 7
        %v2278 = vsub.s32 1, %v2277
        %v2279 = vrot.slane %v482, %v2278
        %v2280 = vlaneseq
        %v2281 = vshrl.u32 %v2280, 7
        %v2282 = vsub.s32 1, %v2281
        %v2283 = vrot.slane %v483, %v2282
        %v2316 = vunpack.c.l.b16 %v2244
        %v2317 = vunpack.c.h.b16 %v2244
        %v2318 = vunpack.c.l.b16 %v2245
        %v2319 = vunpack.c.h.b16 %v2245
        %v2320 = vunpack.c.l.b16 %v2246
        %v2321 = vunpack.c.h.b16 %v2246
        %v2322 = vunpack.c.l.b16 %v2247
        %v2323 = vunpack.c.h.b16 %v2247
        %v2324 = vunpack.c.l.b16 %v2248
        %v2325 = vunpack.c.h.b16 %v2248
        %v2326 = vunpack.c.l.b16 %v2249
        %v2327 = vunpack.c.h.b16 %v2249
        %v2328 = vunpack.c.l.b16 %v2250
        %v2329 = vunpack.c.h.b16 %v2250
        %v2330 = vunpack.c.l.b16 %v2251
        %v2331 = vunpack.c.h.b16 %v2251
        %v2332 = vunpack.c.l.b16 %v2252
        %v2333 = vunpack.c.h.b16 %v2252
        %v2334 = vunpack.c.l.b16 %v2253
        %v2335 = vunpack.c.h.b16 %v2253
        %v2336 = vunpack.c.l.b16 %v2254
        %v2337 = vunpack.c.h.b16 %v2254
        %v2338 = vunpack.c.l.b16 %v2255
        %v2339 = vunpack.c.h.b16 %v2255
        %v2340 = vunpack.c.l.b16 %v2256
        %v2341 = vunpack.c.h.b16 %v2256
        %v2342 = vunpack.c.l.b16 %v2257
        %v2343 = vunpack.c.h.b16 %v2257
        %v2344 = vunpack.c.l.b16 %v2258
        %v2345 = vunpack.c.h.b16 %v2258
        %v2346 = vunpack.c.l.b16 %v2259
        %v2347 = vunpack.c.h.b16 %v2259
        %v2348 = vunpack.c.l.b16 %v2260
        %v2349 = vunpack.c.h.b16 %v2260
        %v2350 = vunpack.c.l.b16 %v2261
        %v2351 = vunpack.c.h.b16 %v2261
        %v2352 = vunpack.c.l.b16 %v2262
        %v2353 = vunpack.c.h.b16 %v2262
        %v2354 = vunpack.c.l.b16 %v2263
        %v2355 = vunpack.c.h.b16 %v2263
        %v2356 = vunpack.c.l.b16 %v2264
        %v2357 = vunpack.c.h.b16 %v2264
        %v2358 = vunpack.c.l.b16 %v2265
        %v2359 = vunpack.c.h.b16 %v2265
        %v2360 = vunpack.c.l.b16 %v2266
        %v2361 = vunpack.c.h.b16 %v2266
        %v2362 = vunpack.c.l.b16 %v2267
        %v2363 = vunpack.c.h.b16 %v2267
        %v2364 = vunpack.c.l.b16 %v2268
        %v2365 = vunpack.c.h.b16 %v2268
        %v2366 = vunpack.c.l.b16 %v2269
        %v2367 = vunpack.c.h.b16 %v2269
        %v2368 = vunpack.c.l.b16 %v2270
        %v2369 = vunpack.c.h.b16 %v2270
        %v2370 = vunpack.c.l.b16 %v2271
        %v2371 = vunpack.c.h.b16 %v2271
        %v2372 = vunpack.c.l.b16 %v2272
        %v2373 = vunpack.c.h.b16 %v2272
        %v2374 = vunpack.c.l.b16 %v2273
        %v2375 = vunpack.c.h.b16 %v2273
        %v2376 = vunpack.c.l.b16 %v2274
        %v2377 = vunpack.c.h.b16 %v2274
        %v2378 = vunpack.c.l.b16 %v2275
        %v2379 = vunpack.c.h.b16 %v2275
        %v2380 = vpack.c.b16 %v2318, %v2316
        %v2381 = vpack.c.b16 %v2319, %v2317
        %v2382 = vpack.c.b16 %v2322, %v2320
        %v2383 = vpack.c.b16 %v2323, %v2321
        %v2384 = vpack.c.b16 %v2326, %v2324
        %v2385 = vpack.c.b16 %v2327, %v2325
        %v2386 = vpack.c.b16 %v2330, %v2328
        %v2387 = vpack.c.b16 %v2331, %v2329
        %v2388 = vpack.c.b16 %v2334, %v2332
        %v2389 = vpack.c.b16 %v2335, %v2333
        %v2390 = vpack.c.b16 %v2338, %v2336
        %v2391 = vpack.c.b16 %v2339, %v2337
        %v2392 = vpack.c.b16 %v2342, %v2340
        %v2393 = vpack.c.b16 %v2343, %v2341
        %v2394 = vpack.c.b16 %v2346, %v2344
        %v2395 = vpack.c.b16 %v2347, %v2345
        %v2396 = vpack.c.b16 %v2350, %v2348
        %v2397 = vpack.c.b16 %v2351, %v2349
        %v2398 = vpack.c.b16 %v2354, %v2352
        %v2399 = vpack.c.b16 %v2355, %v2353
        %v2400 = vpack.c.b16 %v2358, %v2356
        %v2401 = vpack.c.b16 %v2359, %v2357
        %v2402 = vpack.c.b16 %v2362, %v2360
        %v2403 = vpack.c.b16 %v2363, %v2361
        %v2404 = vpack.c.b16 %v2366, %v2364
        %v2405 = vpack.c.b16 %v2367, %v2365
        %v2406 = vpack.c.b16 %v2370, %v2368
        %v2407 = vpack.c.b16 %v2371, %v2369
        %v2408 = vpack.c.b16 %v2374, %v2372
        %v2409 = vpack.c.b16 %v2375, %v2373
        %v2410 = vpack.c.b16 %v2378, %v2376
        %v2411 = vpack.c.b16 %v2379, %v2377
        %2444 = vmatprep.subr.bf16.mxu0 %v2381
        %2445 = vmatpush1.bf16.msra.mxu0 %v2380
        %2446 = vmatprep.subr.bf16.mxu0 %v2383
        %2447 = vmatpush1.bf16.msra.mxu0 %v2382
        %2448 = vmatprep.subr.bf16.mxu0 %v2385
        %2449 = vmatpush1.bf16.msra.mxu0 %v2384
        %2450 = vmatprep.subr.bf16.mxu0 %v2387
        %2451 = vmatpush1.bf16.msra.mxu0 %v2386
        %2452 = vmatprep.subr.bf16.mxu0 %v2389
        %2453 = vmatpush1.bf16.msra.mxu0 %v2388
        %2454 = vmatprep.subr.bf16.mxu0 %v2391
        %2455 = vmatpush1.bf16.msra.mxu0 %v2390
        %2456 = vmatprep.subr.bf16.mxu0 %v2393
        %2457 = vmatpush1.bf16.msra.mxu0 %v2392
        %2458 = vmatprep.subr.bf16.mxu0 %v2395
        %2459 = vmatpush1.bf16.msra.mxu0 %v2394
        %2460 = vmatprep.subr.bf16.mxu0 %v2397
        %2461 = vmatpush1.bf16.msra.mxu0 %v2396
        %2462 = vmatprep.subr.bf16.mxu0 %v2399
        %2463 = vmatpush1.bf16.msra.mxu0 %v2398
        %2464 = vmatprep.subr.bf16.mxu0 %v2401
        %2465 = vmatpush1.bf16.msra.mxu0 %v2400
        %2466 = vmatprep.subr.bf16.mxu0 %v2403
        %2467 = vmatpush1.bf16.msra.mxu0 %v2402
        %2468 = vmatprep.subr.bf16.mxu0 %v2405
        %2469 = vmatpush1.bf16.msra.mxu0 %v2404
        %2470 = vmatprep.subr.bf16.mxu0 %v2407
        %2471 = vmatpush1.bf16.msra.mxu0 %v2406
        %2472 = vmatprep.subr.bf16.mxu0 %v2409
        %2473 = vmatpush1.bf16.msra.mxu0 %v2408
        %2474 = vmatprep.subr.bf16.mxu0 %v2411
        %2475 = vmatpush1.bf16.msra.mxu0 %v2410
        %2476 = vmatprep.mubr.bf16.mxu0 %v2237
        %2477 = vmatmul.mubr.bf16.gmra.mrb[0].mxu0 %v2236
        %v2478 = vpop.f32.mrb[0].mxu0
        %v2479 = vadd.f32 %v2279, %v2478
        %v2480 = vpop.f32.mrb[0].mxu0
        %v2481 = vadd.f32 %v2283, %v2480
        %v2482 = vpop.f32.mrb[0].mxu0
        %v2483 = vadd.f32 %v2279, %v2482
        %v2484 = vpop.f32.mrb[0].mxu0
        %v2485 = vadd.f32 %v2283, %v2484
        %2486 = vmatprep.mubr.bf16.mxu0 %v2239
        %2487 = vmatmul.mubr.bf16.gmra.mrb[0].mxu0 %v2238
        %v2488 = vpop.f32.mrb[0].mxu0
        %v2489 = vadd.f32 %v2279, %v2488
        %v2490 = vpop.f32.mrb[0].mxu0
        %v2491 = vadd.f32 %v2283, %v2490
        %v2492 = vpop.f32.mrb[0].mxu0
        %v2493 = vadd.f32 %v2279, %v2492
        %v2494 = vpop.f32.mrb[0].mxu0
        %v2495 = vadd.f32 %v2283, %v2494
        %2496 = vmatprep.mubr.bf16.mxu0 %v2241
        %2497 = vmatmul.mubr.bf16.gmra.mrb[0].mxu0 %v2240
        %v2498 = vpop.f32.mrb[0].mxu0
        %v2499 = vadd.f32 %v2279, %v2498
        %v2500 = vpop.f32.mrb[0].mxu0
        %v2501 = vadd.f32 %v2283, %v2500
        %v2502 = vpop.f32.mrb[0].mxu0
        %v2503 = vadd.f32 %v2279, %v2502
        %v2504 = vpop.f32.mrb[0].mxu0
        %v2505 = vadd.f32 %v2283, %v2504
        %2506 = vmatprep.mubr.bf16.mxu0 %v2243
        %2507 = vmatmul.mubr.bf16.gmra.mrb[0].mxu0 %v2242
        %v2508 = vpop.f32.mrb[0].mxu0
        %v2509 = vadd.f32 %v2279, %v2508
        %v2510 = vpop.f32.mrb[0].mxu0
        %v2511 = vadd.f32 %v2283, %v2510
        %v2512 = vpop.f32.mrb[0].mxu0
        %v2513 = vadd.f32 %v2279, %v2512
        %v2514 = vpop.f32.mrb[0].mxu0
        %v2515 = vadd.f32 %v2283, %v2514
        %2516 = vdwg.mxu0
        %v2517 = vadd.f32 %v466, %v2479
        %v2518 = vadd.f32 %v467, %v2481
        %v2519 = vadd.f32 %v468, %v2483
        %v2520 = vadd.f32 %v469, %v2485
        %v2521 = vadd.f32 %v470, %v2489
        %v2522 = vadd.f32 %v471, %v2491
        %v2523 = vadd.f32 %v472, %v2493
        %v2524 = vadd.f32 %v473, %v2495
        %v2525 = vadd.f32 %v474, %v2499
        %v2526 = vadd.f32 %v475, %v2501
        %v2527 = vadd.f32 %v476, %v2503
        %v2528 = vadd.f32 %v477, %v2505
        %v2529 = vadd.f32 %v478, %v2509
        %v2530 = vadd.f32 %v479, %v2511
        %v2531 = vadd.f32 %v480, %v2513
        %v2532 = vadd.f32 %v481, %v2515
        %v2533 = vadd.f32 %v2517, %v2518
        %2534 = vadd.xlane.f32.xlu0 %v2533
        %v2535 = vpop.xlane.xlu0 %2534
        %v2536 = vadd.f32 %v2519, %v2520
        %2537 = vadd.xlane.f32.xlu0 %v2536
        %v2538 = vpop.xlane.xlu0 %2537
        %v2539 = vadd.f32 %v2521, %v2522
        %2540 = vadd.xlane.f32.xlu0 %v2539
        %v2541 = vpop.xlane.xlu0 %2540
        %v2542 = vadd.f32 %v2523, %v2524
        %2543 = vadd.xlane.f32.xlu0 %v2542
        %v2544 = vpop.xlane.xlu0 %2543
        %v2545 = vadd.f32 %v2525, %v2526
        %2546 = vadd.xlane.f32.xlu0 %v2545
        %v2547 = vpop.xlane.xlu0 %2546
        %v2548 = vadd.f32 %v2527, %v2528
        %2549 = vadd.xlane.f32.xlu0 %v2548
        %v2550 = vpop.xlane.xlu0 %2549
        %v2551 = vadd.f32 %v2529, %v2530
        %2552 = vadd.xlane.f32.xlu0 %v2551
        %v2553 = vpop.xlane.xlu0 %2552
        %v2554 = vadd.f32 %v2531, %v2532
        %2555 = vadd.xlane.f32.xlu0 %v2554
        %v2556 = vpop.xlane.xlu0 %2555
        %v2557 = vrcp.pop 256.0
        %v2558 = vmul.f32 %v2535, %v2557
        %v2559 = vmul.f32 %v2538, %v2557
        %v2560 = vmul.f32 %v2541, %v2557
        %v2561 = vmul.f32 %v2544, %v2557
        %v2562 = vmul.f32 %v2547, %v2557
        %v2563 = vmul.f32 %v2550, %v2557
        %v2564 = vmul.f32 %v2553, %v2557
        %v2565 = vmul.f32 %v2556, %v2557
        %v2566 = vsub.f32 %v2517, %v2558
        %v2567 = vsub.f32 %v2518, %v2558
        %v2568 = vsub.f32 %v2519, %v2559
        %v2569 = vsub.f32 %v2520, %v2559
        %v2570 = vsub.f32 %v2521, %v2560
        %v2571 = vsub.f32 %v2522, %v2560
        %v2572 = vsub.f32 %v2523, %v2561
        %v2573 = vsub.f32 %v2524, %v2561
        %v2574 = vsub.f32 %v2525, %v2562
        %v2575 = vsub.f32 %v2526, %v2562
        %v2576 = vsub.f32 %v2527, %v2563
        %v2577 = vsub.f32 %v2528, %v2563
        %v2578 = vsub.f32 %v2529, %v2564
        %v2579 = vsub.f32 %v2530, %v2564
        %v2580 = vsub.f32 %v2531, %v2565
        %v2581 = vsub.f32 %v2532, %v2565
        %v2582 = vmul.f32 %v2566, %v2566
        %v2583 = vmul.f32 %v2567, %v2567
        %v2584 = vmul.f32 %v2568, %v2568
        %v2585 = vmul.f32 %v2569, %v2569
        %v2586 = vmul.f32 %v2570, %v2570
        %v2587 = vmul.f32 %v2571, %v2571
        %v2588 = vmul.f32 %v2572, %v2572
        %v2589 = vmul.f32 %v2573, %v2573
        %v2590 = vmul.f32 %v2574, %v2574
        %v2591 = vmul.f32 %v2575, %v2575
        %v2592 = vmul.f32 %v2576, %v2576
        %v2593 = vmul.f32 %v2577, %v2577
        %v2594 = vmul.f32 %v2578, %v2578
        %v2595 = vmul.f32 %v2579, %v2579
        %v2596 = vmul.f32 %v2580, %v2580
        %v2597 = vmul.f32 %v2581, %v2581
        %v2598 = vadd.f32 %v2582, %v2583
        %2599 = vadd.xlane.f32.xlu0 %v2598
        %v2600 = vpop.xlane.xlu0 %2599
        %v2601 = vadd.f32 %v2584, %v2585
        %2602 = vadd.xlane.f32.xlu0 %v2601
        %v2603 = vpop.xlane.xlu0 %2602
        %v2604 = vadd.f32 %v2586, %v2587
        %2605 = vadd.xlane.f32.xlu0 %v2604
        %v2606 = vpop.xlane.xlu0 %2605
        %v2607 = vadd.f32 %v2588, %v2589
        %2608 = vadd.xlane.f32.xlu0 %v2607
        %v2609 = vpop.xlane.xlu0 %2608
        %v2610 = vadd.f32 %v2590, %v2591
        %2611 = vadd.xlane.f32.xlu0 %v2610
        %v2612 = vpop.xlane.xlu0 %2611
        %v2613 = vadd.f32 %v2592, %v2593
        %2614 = vadd.xlane.f32.xlu0 %v2613
        %v2615 = vpop.xlane.xlu0 %2614
        %v2616 = vadd.f32 %v2594, %v2595
        %2617 = vadd.xlane.f32.xlu0 %v2616
        %v2618 = vpop.xlane.xlu0 %2617
        %v2619 = vadd.f32 %v2596, %v2597
        %2620 = vadd.xlane.f32.xlu0 %v2619
        %v2621 = vpop.xlane.xlu0 %2620
        %v2622 = vmul.f32 %v2600, %v2557
        %v2623 = vmul.f32 %v2603, %v2557
        %v2624 = vmul.f32 %v2606, %v2557
        %v2625 = vmul.f32 %v2609, %v2557
        %v2626 = vmul.f32 %v2612, %v2557
        %v2627 = vmul.f32 %v2615, %v2557
        %v2628 = vmul.f32 %v2618, %v2557
        %v2629 = vmul.f32 %v2621, %v2557
        %v2630 = vadd.f32 %v2622, 1e-05
        %v2631 = vadd.f32 %v2623, 1e-05
        %v2632 = vadd.f32 %v2624, 1e-05
        %v2633 = vadd.f32 %v2625, 1e-05
        %v2634 = vadd.f32 %v2626, 1e-05
        %v2635 = vadd.f32 %v2627, 1e-05
        %v2636 = vadd.f32 %v2628, 1e-05
        %v2637 = vadd.f32 %v2629, 1e-05
        %v2638 = vrsqrt.pop %v2630
        %v2639 = vrsqrt.pop %v2631
        %v2640 = vrsqrt.pop %v2632
        %v2641 = vrsqrt.pop %v2633
        %v2642 = vrsqrt.pop %v2634
        %v2643 = vrsqrt.pop %v2635
        %v2644 = vrsqrt.pop %v2636
        %v2645 = vrsqrt.pop %v2637
        %v2646 = vmul.f32 %v2566, %v2638
        %v2647 = vmul.f32 %v2567, %v2638
        %v2648 = vmul.f32 %v2568, %v2639
        %v2649 = vmul.f32 %v2569, %v2639
        %v2650 = vmul.f32 %v2570, %v2640
        %v2651 = vmul.f32 %v2571, %v2640
        %v2652 = vmul.f32 %v2572, %v2641
        %v2653 = vmul.f32 %v2573, %v2641
        %v2654 = vmul.f32 %v2574, %v2642
        %v2655 = vmul.f32 %v2575, %v2642
        %v2656 = vmul.f32 %v2576, %v2643
        %v2657 = vmul.f32 %v2577, %v2643
        %v2658 = vmul.f32 %v2578, %v2644
        %v2659 = vmul.f32 %v2579, %v2644
        %v2660 = vmul.f32 %v2580, %v2645
        %v2661 = vmul.f32 %v2581, %v2645
        %v2662 = vlaneseq
        %v2663 = vshrl.u32 %v2662, 7
        %v2664 = vsub.s32 2, %v2663
        %v2665 = vrot.slane %v482, %v2664
        %v2666 = vlaneseq
        %v2667 = vshrl.u32 %v2666, 7
        %v2668 = vsub.s32 2, %v2667
        %v2669 = vrot.slane %v483, %v2668
        %v2670 = vmul.f32 %v2646, %v2665
        %v2671 = vmul.f32 %v2647, %v2669
        %v2672 = vmul.f32 %v2648, %v2665
        %v2673 = vmul.f32 %v2649, %v2669
        %v2674 = vmul.f32 %v2650, %v2665
        %v2675 = vmul.f32 %v2651, %v2669
        %v2676 = vmul.f32 %v2652, %v2665
        %v2677 = vmul.f32 %v2653, %v2669
        %v2678 = vmul.f32 %v2654, %v2665
        %v2679 = vmul.f32 %v2655, %v2669
        %v2680 = vmul.f32 %v2656, %v2665
        %v2681 = vmul.f32 %v2657, %v2669
        %v2682 = vmul.f32 %v2658, %v2665
        %v2683 = vmul.f32 %v2659, %v2669
        %v2684 = vmul.f32 %v2660, %v2665
        %v2685 = vmul.f32 %v2661, %v2669
        %v2686 = vlaneseq
        %v2687 = vshrl.u32 %v2686, 7
        %v2688 = vsub.s32 3, %v2687
        %v2689 = vrot.slane %v482, %v2688
        %v2690 = vlaneseq
        %v2691 = vshrl.u32 %v2690, 7
        %v2692 = vsub.s32 3, %v2691
        %v2693 = vrot.slane %v483, %v2692
        %v2694 = vadd.f32 %v2670, %v2689
        %v2695 = vadd.f32 %v2671, %v2693
        %v2696 = vadd.f32 %v2672, %v2689
        %v2697 = vadd.f32 %v2673, %v2693
        %v2698 = vadd.f32 %v2674, %v2689
        %v2699 = vadd.f32 %v2675, %v2693
        %v2700 = vadd.f32 %v2676, %v2689
        %v2701 = vadd.f32 %v2677, %v2693
        %v2702 = vadd.f32 %v2678, %v2689
        %v2703 = vadd.f32 %v2679, %v2693
        %v2704 = vadd.f32 %v2680, %v2689
        %v2705 = vadd.f32 %v2681, %v2693
        %v2706 = vadd.f32 %v2682, %v2689
        %v2707 = vadd.f32 %v2683, %v2693
        %v2708 = vadd.f32 %v2684, %v2689
        %v2709 = vadd.f32 %v2685, %v2693
        %v2710 = vpack.c.bf16 %v2696, %v2694
        %v2711 = vpack.c.bf16 %v2697, %v2695
        %v2712 = vpack.c.bf16 %v2700, %v2698
        %v2713 = vpack.c.bf16 %v2701, %v2699
        %v2714 = vpack.c.bf16 %v2704, %v2702
        %v2715 = vpack.c.bf16 %v2705, %v2703
        %v2716 = vpack.c.bf16 %v2708, %v2706
        %v2717 = vpack.c.bf16 %v2709, %v2707
        %v2718 = vld [vmem:[%s340] sm:$0xff]
        %v2719 = vld [vmem:[%s340 + $0x8] sm:$0xff]
        %v2720 = vld [vmem:[%s340 + $0x10] sm:$0xff]
        %v2721 = vld [vmem:[%s340 + $0x18] sm:$0xff]
        %v2722 = vld [vmem:[%s340 + $0x20] sm:$0xff]
        %v2723 = vld [vmem:[%s340 + $0x28] sm:$0xff]
        %v2724 = vld [vmem:[%s340 + $0x30] sm:$0xff]
        %v2725 = vld [vmem:[%s340 + $0x38] sm:$0xff]
        %v2726 = vld [vmem:[%s340 + $0x40] sm:$0xff]
        %v2727 = vld [vmem:[%s340 + $0x48] sm:$0xff]
        %v2728 = vld [vmem:[%s340 + $0x50] sm:$0xff]
        %v2729 = vld [vmem:[%s340 + $0x58] sm:$0xff]
        %v2730 = vld [vmem:[%s340 + $0x60] sm:$0xff]
        %v2731 = vld [vmem:[%s340 + $0x68] sm:$0xff]
        %v2732 = vld [vmem:[%s340 + $0x70] sm:$0xff]
        %v2733 = vld [vmem:[%s340 + $0x78] sm:$0xff]
        %v2734 = vld [vmem:[%s340 + $0x80] sm:$0xff]
        %v2735 = vld [vmem:[%s340 + $0x88] sm:$0xff]
        %v2736 = vld [vmem:[%s340 + $0x90] sm:$0xff]
        %v2737 = vld [vmem:[%s340 + $0x98] sm:$0xff]
        %v2738 = vld [vmem:[%s340 + $0xa0] sm:$0xff]
        %v2739 = vld [vmem:[%s340 + $0xa8] sm:$0xff]
        %v2740 = vld [vmem:[%s340 + $0xb0] sm:$0xff]
        %v2741 = vld [vmem:[%s340 + $0xb8] sm:$0xff]
        %v2742 = vld [vmem:[%s340 + $0xc0] sm:$0xff]
        %v2743 = vld [vmem:[%s340 + $0xc8] sm:$0xff]
        %v2744 = vld [vmem:[%s340 + $0xd0] sm:$0xff]
        %v2745 = vld [vmem:[%s340 + $0xd8] sm:$0xff]
        %v2746 = vld [vmem:[%s340 + $0xe0] sm:$0xff]
        %v2747 = vld [vmem:[%s340 + $0xe8] sm:$0xff]
        %v2748 = vld [vmem:[%s340 + $0xf0] sm:$0xff]
        %v2749 = vld [vmem:[%s340 + $0xf8] sm:$0xff]
        %v2750 = vld [vmem:[%s340 + $0x100] sm:$0xff]
        %v2751 = vld [vmem:[%s340 + $0x108] sm:$0xff]
        %v2752 = vld [vmem:[%s340 + $0x110] sm:$0xff]
        %v2753 = vld [vmem:[%s340 + $0x118] sm:$0xff]
        %v2754 = vld [vmem:[%s340 + $0x120] sm:$0xff]
        %v2755 = vld [vmem:[%s340 + $0x128] sm:$0xff]
        %v2756 = vld [vmem:[%s340 + $0x130] sm:$0xff]
        %v2757 = vld [vmem:[%s340 + $0x138] sm:$0xff]
        %v2758 = vld [vmem:[%s340 + $0x140] sm:$0xff]
        %v2759 = vld [vmem:[%s340 + $0x148] sm:$0xff]
        %v2760 = vld [vmem:[%s340 + $0x150] sm:$0xff]
        %v2761 = vld [vmem:[%s340 + $0x158] sm:$0xff]
        %v2762 = vld [vmem:[%s340 + $0x160] sm:$0xff]
        %v2763 = vld [vmem:[%s340 + $0x168] sm:$0xff]
        %v2764 = vld [vmem:[%s340 + $0x170] sm:$0xff]
        %v2765 = vld [vmem:[%s340 + $0x178] sm:$0xff]
        %v2766 = vld [vmem:[%s340 + $0x180] sm:$0xff]
        %v2767 = vld [vmem:[%s340 + $0x188] sm:$0xff]
        %v2768 = vld [vmem:[%s340 + $0x190] sm:$0xff]
        %v2769 = vld [vmem:[%s340 + $0x198] sm:$0xff]
        %v2770 = vld [vmem:[%s340 + $0x1a0] sm:$0xff]
        %v2771 = vld [vmem:[%s340 + $0x1a8] sm:$0xff]
        %v2772 = vld [vmem:[%s340 + $0x1b0] sm:$0xff]
        %v2773 = vld [vmem:[%s340 + $0x1b8] sm:$0xff]
        %v2774 = vld [vmem:[%s340 + $0x1c0] sm:$0xff]
        %v2775 = vld [vmem:[%s340 + $0x1c8] sm:$0xff]
        %v2776 = vld [vmem:[%s340 + $0x1d0] sm:$0xff]
        %v2777 = vld [vmem:[%s340 + $0x1d8] sm:$0xff]
        %v2778 = vld [vmem:[%s340 + $0x1e0] sm:$0xff]
        %v2779 = vld [vmem:[%s340 + $0x1e8] sm:$0xff]
        %v2780 = vld [vmem:[%s340 + $0x1f0] sm:$0xff]
        %v2781 = vld [vmem:[%s340 + $0x1f8] sm:$0xff]
        %v2782 = vlaneseq
        %v2783 = vshrl.u32 %v2782, 7
        %v2784 = vsub.s32 4, %v2783
        %v2785 = vrot.slane %v482, %v2784
        %v2786 = vlaneseq
        %v2787 = vshrl.u32 %v2786, 7
        %v2788 = vsub.s32 4, %v2787
        %v2789 = vrot.slane %v483, %v2788
        %v2790 = vlaneseq
        %v2791 = vshrl.u32 %v2790, 7
        %v2792 = vsub.s32 4, %v2791
        %v2793 = vrot.slane %v484, %v2792
        %v2794 = vlaneseq
        %v2795 = vshrl.u32 %v2794, 7
        %v2796 = vsub.s32 4, %v2795
        %v2797 = vrot.slane %v485, %v2796
        %v2862 = vunpack.c.l.b16 %v2718
        %v2863 = vunpack.c.h.b16 %v2718
        %v2864 = vunpack.c.l.b16 %v2719
        %v2865 = vunpack.c.h.b16 %v2719
        %v2866 = vunpack.c.l.b16 %v2720
        %v2867 = vunpack.c.h.b16 %v2720
        %v2868 = vunpack.c.l.b16 %v2721
        %v2869 = vunpack.c.h.b16 %v2721
        %v2870 = vunpack.c.l.b16 %v2722
        %v2871 = vunpack.c.h.b16 %v2722
        %v2872 = vunpack.c.l.b16 %v2723
        %v2873 = vunpack.c.h.b16 %v2723
        %v2874 = vunpack.c.l.b16 %v2724
        %v2875 = vunpack.c.h.b16 %v2724
        %v2876 = vunpack.c.l.b16 %v2725
        %v2877 = vunpack.c.h.b16 %v2725
        %v2878 = vunpack.c.l.b16 %v2726
        %v2879 = vunpack.c.h.b16 %v2726
        %v2880 = vunpack.c.l.b16 %v2727
        %v2881 = vunpack.c.h.b16 %v2727
        %v2882 = vunpack.c.l.b16 %v2728
        %v2883 = vunpack.c.h.b16 %v2728
        %v2884 = vunpack.c.l.b16 %v2729
        %v2885 = vunpack.c.h.b16 %v2729
        %v2886 = vunpack.c.l.b16 %v2730
        %v2887 = vunpack.c.h.b16 %v2730
        %v2888 = vunpack.c.l.b16 %v2731
        %v2889 = vunpack.c.h.b16 %v2731
        %v2890 = vunpack.c.l.b16 %v2732
        %v2891 = vunpack.c.h.b16 %v2732
        %v2892 = vunpack.c.l.b16 %v2733
        %v2893 = vunpack.c.h.b16 %v2733
        %v2894 = vunpack.c.l.b16 %v2734
        %v2895 = vunpack.c.h.b16 %v2734
        %v2896 = vunpack.c.l.b16 %v2735
        %v2897 = vunpack.c.h.b16 %v2735
        %v2898 = vunpack.c.l.b16 %v2736
        %v2899 = vunpack.c.h.b16 %v2736
        %v2900 = vunpack.c.l.b16 %v2737
        %v2901 = vunpack.c.h.b16 %v2737
        %v2902 = vunpack.c.l.b16 %v2738
        %v2903 = vunpack.c.h.b16 %v2738
        %v2904 = vunpack.c.l.b16 %v2739
        %v2905 = vunpack.c.h.b16 %v2739
        %v2906 = vunpack.c.l.b16 %v2740
        %v2907 = vunpack.c.h.b16 %v2740
        %v2908 = vunpack.c.l.b16 %v2741
        %v2909 = vunpack.c.h.b16 %v2741
        %v2910 = vunpack.c.l.b16 %v2742
        %v2911 = vunpack.c.h.b16 %v2742
        %v2912 = vunpack.c.l.b16 %v2743
        %v2913 = vunpack.c.h.b16 %v2743
        %v2914 = vunpack.c.l.b16 %v2744
        %v2915 = vunpack.c.h.b16 %v2744
        %v2916 = vunpack.c.l.b16 %v2745
        %v2917 = vunpack.c.h.b16 %v2745
        %v2918 = vunpack.c.l.b16 %v2746
        %v2919 = vunpack.c.h.b16 %v2746
        %v2920 = vunpack.c.l.b16 %v2747
        %v2921 = vunpack.c.h.b16 %v2747
        %v2922 = vunpack.c.l.b16 %v2748
        %v2923 = vunpack.c.h.b16 %v2748
        %v2924 = vunpack.c.l.b16 %v2749
        %v2925 = vunpack.c.h.b16 %v2749
        %v2926 = vunpack.c.l.b16 %v2750
        %v2927 = vunpack.c.h.b16 %v2750
        %v2928 = vunpack.c.l.b16 %v2751
        %v2929 = vunpack.c.h.b16 %v2751
        %v2930 = vunpack.c.l.b16 %v2752
        %v2931 = vunpack.c.h.b16 %v2752
        %v2932 = vunpack.c.l.b16 %v2753
        %v2933 = vunpack.c.h.b16 %v2753
        %v2934 = vunpack.c.l.b16 %v2754
        %v2935 = vunpack.c.h.b16 %v2754
        %v2936 = vunpack.c.l.b16 %v2755
        %v2937 = vunpack.c.h.b16 %v2755
        %v2938 = vunpack.c.l.b16 %v2756
        %v2939 = vunpack.c.h.b16 %v2756
        %v2940 = vunpack.c.l.b16 %v2757
        %v2941 = vunpack.c.h.b16 %v2757
        %v2942 = vunpack.c.l.b16 %v2758
        %v2943 = vunpack.c.h.b16 %v2758
        %v2944 = vunpack.c.l.b16 %v2759
        %v2945 = vunpack.c.h.b16 %v2759
        %v2946 = vunpack.c.l.b16 %v2760
        %v2947 = vunpack.c.h.b16 %v2760
        %v2948 = vunpack.c.l.b16 %v2761
        %v2949 = vunpack.c.h.b16 %v2761
        %v2950 = vunpack.c.l.b16 %v2762
        %v2951 = vunpack.c.h.b16 %v2762
        %v2952 = vunpack.c.l.b16 %v2763
        %v2953 = vunpack.c.h.b16 %v2763
        %v2954 = vunpack.c.l.b16 %v2764
        %v2955 = vunpack.c.h.b16 %v2764
        %v2956 = vunpack.c.l.b16 %v2765
        %v2957 = vunpack.c.h.b16 %v2765
        %v2958 = vunpack.c.l.b16 %v2766
        %v2959 = vunpack.c.h.b16 %v2766
        %v2960 = vunpack.c.l.b16 %v2767
        %v2961 = vunpack.c.h.b16 %v2767
        %v2962 = vunpack.c.l.b16 %v2768
        %v2963 = vunpack.c.h.b16 %v2768
        %v2964 = vunpack.c.l.b16 %v2769
        %v2965 = vunpack.c.h.b16 %v2769
        %v2966 = vunpack.c.l.b16 %v2770
        %v2967 = vunpack.c.h.b16 %v2770
        %v2968 = vunpack.c.l.b16 %v2771
        %v2969 = vunpack.c.h.b16 %v2771
        %v2970 = vunpack.c.l.b16 %v2772
        %v2971 = vunpack.c.h.b16 %v2772
        %v2972 = vunpack.c.l.b16 %v2773
        %v2973 = vunpack.c.h.b16 %v2773
        %v2974 = vunpack.c.l.b16 %v2774
        %v2975 = vunpack.c.h.b16 %v2774
        %v2976 = vunpack.c.l.b16 %v2775
        %v2977 = vunpack.c.h.b16 %v2775
        %v2978 = vunpack.c.l.b16 %v2776
        %v2979 = vunpack.c.h.b16 %v2776
        %v2980 = vunpack.c.l.b16 %v2777
        %v2981 = vunpack.c.h.b16 %v2777
        %v2982 = vunpack.c.l.b16 %v2778
        %v2983 = vunpack.c.h.b16 %v2778
        %v2984 = vunpack.c.l.b16 %v2779
        %v2985 = vunpack.c.h.b16 %v2779
        %v2986 = vunpack.c.l.b16 %v2780
        %v2987 = vunpack.c.h.b16 %v2780
        %v2988 = vunpack.c.l.b16 %v2781
        %v2989 = vunpack.c.h.b16 %v2781
        %v2990 = vpack.c.b16 %v2866, %v2862
        %v2991 = vpack.c.b16 %v2867, %v2863
        %v2992 = vpack.c.b16 %v2868, %v2864
        %v2993 = vpack.c.b16 %v2869, %v2865
        %v2994 = vpack.c.b16 %v2874, %v2870
        %v2995 = vpack.c.b16 %v2875, %v2871
        %v2996 = vpack.c.b16 %v2876, %v2872
        %v2997 = vpack.c.b16 %v2877, %v2873
        %v2998 = vpack.c.b16 %v2882, %v2878
        %v2999 = vpack.c.b16 %v2883, %v2879
        %v3000 = vpack.c.b16 %v2884, %v2880
        %v3001 = vpack.c.b16 %v2885, %v2881
        %v3002 = vpack.c.b16 %v2890, %v2886
        %v3003 = vpack.c.b16 %v2891, %v2887
        %v3004 = vpack.c.b16 %v2892, %v2888
        %v3005 = vpack.c.b16 %v2893, %v2889
        %v3006 = vpack.c.b16 %v2898, %v2894
        %v3007 = vpack.c.b16 %v2899, %v2895
        %v3008 = vpack.c.b16 %v2900, %v2896
        %v3009 = vpack.c.b16 %v2901, %v2897
        %v3010 = vpack.c.b16 %v2906, %v2902
        %v3011 = vpack.c.b16 %v2907, %v2903
        %v3012 = vpack.c.b16 %v2908, %v2904
        %v3013 = vpack.c.b16 %v2909, %v2905
        %v3014 = vpack.c.b16 %v2914, %v2910
        %v3015 = vpack.c.b16 %v2915, %v2911
        %v3016 = vpack.c.b16 %v2916, %v2912
        %v3017 = vpack.c.b16 %v2917, %v2913
        %v3018 = vpack.c.b16 %v2922, %v2918
        %v3019 = vpack.c.b16 %v2923, %v2919
        %v3020 = vpack.c.b16 %v2924, %v2920
        %v3021 = vpack.c.b16 %v2925, %v2921
        %v3022 = vpack.c.b16 %v2930, %v2926
        %v3023 = vpack.c.b16 %v2931, %v2927
        %v3024 = vpack.c.b16 %v2932, %v2928
        %v3025 = vpack.c.b16 %v2933, %v2929
        %v3026 = vpack.c.b16 %v2938, %v2934
        %v3027 = vpack.c.b16 %v2939, %v2935
        %v3028 = vpack.c.b16 %v2940, %v2936
        %v3029 = vpack.c.b16 %v2941, %v2937
        %v3030 = vpack.c.b16 %v2946, %v2942
        %v3031 = vpack.c.b16 %v2947, %v2943
        %v3032 = vpack.c.b16 %v2948, %v2944
        %v3033 = vpack.c.b16 %v2949, %v2945
        %v3034 = vpack.c.b16 %v2954, %v2950
        %v3035 = vpack.c.b16 %v2955, %v2951
        %v3036 = vpack.c.b16 %v2956, %v2952
        %v3037 = vpack.c.b16 %v2957, %v2953
        %v3038 = vpack.c.b16 %v2962, %v2958
        %v3039 = vpack.c.b16 %v2963, %v2959
        %v3040 = vpack.c.b16 %v2964, %v2960
        %v3041 = vpack.c.b16 %v2965, %v2961
        %v3042 = vpack.c.b16 %v2970, %v2966
        %v3043 = vpack.c.b16 %v2971, %v2967
        %v3044 = vpack.c.b16 %v2972, %v2968
        %v3045 = vpack.c.b16 %v2973, %v2969
        %v3046 = vpack.c.b16 %v2978, %v2974
        %v3047 = vpack.c.b16 %v2979, %v2975
        %v3048 = vpack.c.b16 %v2980, %v2976
        %v3049 = vpack.c.b16 %v2981, %v2977
        %v3050 = vpack.c.b16 %v2986, %v2982
        %v3051 = vpack.c.b16 %v2987, %v2983
        %v3052 = vpack.c.b16 %v2988, %v2984
        %v3053 = vpack.c.b16 %v2989, %v2985
        %3118 = vmatprep.subr.bf16.mxu0 %v2991
        %3119 = vmatpush1.bf16.msra.mxu0 %v2990
        %3120 = vmatprep.subr.bf16.mxu0 %v2995
        %3121 = vmatpush1.bf16.msra.mxu0 %v2994
        %3122 = vmatprep.subr.bf16.mxu0 %v2999
        %3123 = vmatpush1.bf16.msra.mxu0 %v2998
        %3124 = vmatprep.subr.bf16.mxu0 %v3003
        %3125 = vmatpush1.bf16.msra.mxu0 %v3002
        %3126 = vmatprep.subr.bf16.mxu0 %v3007
        %3127 = vmatpush1.bf16.msra.mxu0 %v3006
        %3128 = vmatprep.subr.bf16.mxu0 %v3011
        %3129 = vmatpush1.bf16.msra.mxu0 %v3010
        %3130 = vmatprep.subr.bf16.mxu0 %v3015
        %3131 = vmatpush1.bf16.msra.mxu0 %v3014
        %3132 = vmatprep.subr.bf16.mxu0 %v3019
        %3133 = vmatpush1.bf16.msra.mxu0 %v3018
        %3134 = vmatprep.subr.bf16.mxu0 %v3023
        %3135 = vmatpush1.bf16.msra.mxu0 %v3022
        %3136 = vmatprep.subr.bf16.mxu0 %v3027
        %3137 = vmatpush1.bf16.msra.mxu0 %v3026
        %3138 = vmatprep.subr.bf16.mxu0 %v3031
        %3139 = vmatpush1.bf16.msra.mxu0 %v3030
        %3140 = vmatprep.subr.bf16.mxu0 %v3035
        %3141 = vmatpush1.bf16.msra.mxu0 %v3034
        %3142 = vmatprep.subr.bf16.mxu0 %v3039
        %3143 = vmatpush1.bf16.msra.mxu0 %v3038
        %3144 = vmatprep.subr.bf16.mxu0 %v3043
        %3145 = vmatpush1.bf16.msra.mxu0 %v3042
        %3146 = vmatprep.subr.bf16.mxu0 %v3047
        %3147 = vmatpush1.bf16.msra.mxu0 %v3046
        %3148 = vmatprep.subr.bf16.mxu0 %v3051
        %3149 = vmatpush1.bf16.msra.mxu0 %v3050
        %3150 = vmatprep.mubr.bf16.mxu0 %v2711
        %3151 = vmatmul.mubr.bf16.gmra.mrb[0].mxu0 %v2710
        %v3152 = vpop.f32.mrb[0].mxu0
        %v3153 = vadd.f32 %v2785, %v3152
        %v3154 = vpop.f32.mrb[0].mxu0
        %v3155 = vadd.f32 %v2789, %v3154
        %v3156 = vpop.f32.mrb[0].mxu0
        %v3157 = vadd.f32 %v2785, %v3156
        %v3158 = vpop.f32.mrb[0].mxu0
        %v3159 = vadd.f32 %v2789, %v3158
        %3160 = vmatprep.mubr.bf16.mxu0 %v2713
        %3161 = vmatmul.mubr.bf16.gmra.mrb[0].mxu0 %v2712
        %v3162 = vpop.f32.mrb[0].mxu0
        %v3163 = vadd.f32 %v2785, %v3162
        %v3164 = vpop.f32.mrb[0].mxu0
        %v3165 = vadd.f32 %v2789, %v3164
        %v3166 = vpop.f32.mrb[0].mxu0
        %v3167 = vadd.f32 %v2785, %v3166
        %v3168 = vpop.f32.mrb[0].mxu0
        %v3169 = vadd.f32 %v2789, %v3168
        %3170 = vmatprep.mubr.bf16.mxu0 %v2715
        %3171 = vmatmul.mubr.bf16.gmra.mrb[0].mxu0 %v2714
        %v3172 = vpop.f32.mrb[0].mxu0
        %v3173 = vadd.f32 %v2785, %v3172
        %v3174 = vpop.f32.mrb[0].mxu0
        %v3175 = vadd.f32 %v2789, %v3174
        %v3176 = vpop.f32.mrb[0].mxu0
        %v3177 = vadd.f32 %v2785, %v3176
        %v3178 = vpop.f32.mrb[0].mxu0
        %v3179 = vadd.f32 %v2789, %v3178
        %3180 = vmatprep.mubr.bf16.mxu0 %v2717
        %3181 = vmatmul.mubr.bf16.gmra.mrb[0].mxu0 %v2716
        %v3182 = vpop.f32.mrb[0].mxu0
        %v3183 = vadd.f32 %v2785, %v3182
        %v3184 = vpop.f32.mrb[0].mxu0
        %v3185 = vadd.f32 %v2789, %v3184
        %v3186 = vpop.f32.mrb[0].mxu0
        %v3187 = vadd.f32 %v2785, %v3186
        %v3188 = vpop.f32.mrb[0].mxu0
        %v3189 = vadd.f32 %v2789, %v3188
        %3190 = vdwg.mxu0
        %3191 = vmatprep.subr.bf16.mxu0 %v2993
        %3192 = vmatpush1.bf16.msra.mxu0 %v2992
        %3193 = vmatprep.subr.bf16.mxu0 %v2997
        %3194 = vmatpush1.bf16.msra.mxu0 %v2996
        %3195 = vmatprep.subr.bf16.mxu0 %v3001
        %3196 = vmatpush1.bf16.msra.mxu0 %v3000
        %3197 = vmatprep.subr.bf16.mxu0 %v3005
        %3198 = vmatpush1.bf16.msra.mxu0 %v3004
        %3199 = vmatprep.subr.bf16.mxu0 %v3009
        %3200 = vmatpush1.bf16.msra.mxu0 %v3008
        %3201 = vmatprep.subr.bf16.mxu0 %v3013
        %3202 = vmatpush1.bf16.msra.mxu0 %v3012
        %3203 = vmatprep.subr.bf16.mxu0 %v3017
        %3204 = vmatpush1.bf16.msra.mxu0 %v3016
        %3205 = vmatprep.subr.bf16.mxu0 %v3021
        %3206 = vmatpush1.bf16.msra.mxu0 %v3020
        %3207 = vmatprep.subr.bf16.mxu0 %v3025
        %3208 = vmatpush1.bf16.msra.mxu0 %v3024
        %3209 = vmatprep.subr.bf16.mxu0 %v3029
        %3210 = vmatpush1.bf16.msra.mxu0 %v3028
        %3211 = vmatprep.subr.bf16.mxu0 %v3033
        %3212 = vmatpush1.bf16.msra.mxu0 %v3032
        %3213 = vmatprep.subr.bf16.mxu0 %v3037
        %3214 = vmatpush1.bf16.msra.mxu0 %v3036
        %3215 = vmatprep.subr.bf16.mxu0 %v3041
        %3216 = vmatpush1.bf16.msra.mxu0 %v3040
        %3217 = vmatprep.subr.bf16.mxu0 %v3045
        %3218 = vmatpush1.bf16.msra.mxu0 %v3044
        %3219 = vmatprep.subr.bf16.mxu0 %v3049
        %3220 = vmatpush1.bf16.msra.mxu0 %v3048
        %3221 = vmatprep.subr.bf16.mxu0 %v3053
        %3222 = vmatpush1.bf16.msra.mxu0 %v3052
        %3223 = vmatprep.mubr.bf16.mxu0 %v2711
        %3224 = vmatmul.mubr.bf16.gmra.mrb[0].mxu0 %v2710
        %v3225 = vpop.f32.mrb[0].mxu0
        %v3226 = vadd.f32 %v2793, %v3225
        %v3227 = vpop.f32.mrb[0].mxu0
        %v3228 = vadd.f32 %v2797, %v3227
        %v3229 = vpop.f32.mrb[0].mxu0
        %v3230 = vadd.f32 %v2793, %v3229
        %v3231 = vpop.f32.mrb[0].mxu0
        %v3232 = vadd.f32 %v2797, %v3231
        %3233 = vmatprep.mubr.bf16.mxu0 %v2713
        %3234 = vmatmul.mubr.bf16.gmra.mrb[0].mxu0 %v2712
        %v3235 = vpop.f32.mrb[0].mxu0
        %v3236 = vadd.f32 %v2793, %v3235
        %v3237 = vpop.f32.mrb[0].mxu0
        %v3238 = vadd.f32 %v2797, %v3237
        %v3239 = vpop.f32.mrb[0].mxu0
        %v3240 = vadd.f32 %v2793, %v3239
        %v3241 = vpop.f32.mrb[0].mxu0
        %v3242 = vadd.f32 %v2797, %v3241
        %3243 = vmatprep.mubr.bf16.mxu0 %v2715
        %3244 = vmatmul.mubr.bf16.gmra.mrb[0].mxu0 %v2714
        %v3245 = vpop.f32.mrb[0].mxu0
        %v3246 = vadd.f32 %v2793, %v3245
        %v3247 = vpop.f32.mrb[0].mxu0
        %v3248 = vadd.f32 %v2797, %v3247
        %v3249 = vpop.f32.mrb[0].mxu0
        %v3250 = vadd.f32 %v2793, %v3249
        %v3251 = vpop.f32.mrb[0].mxu0
        %v3252 = vadd.f32 %v2797, %v3251
        %3253 = vmatprep.mubr.bf16.mxu0 %v2717
        %3254 = vmatmul.mubr.bf16.gmra.mrb[0].mxu0 %v2716
        %v3255 = vpop.f32.mrb[0].mxu0
        %v3256 = vadd.f32 %v2793, %v3255
        %v3257 = vpop.f32.mrb[0].mxu0
        %v3258 = vadd.f32 %v2797, %v3257
        %v3259 = vpop.f32.mrb[0].mxu0
        %v3260 = vadd.f32 %v2793, %v3259
        %v3261 = vpop.f32.mrb[0].mxu0
        %v3262 = vadd.f32 %v2797, %v3261
        %3263 = vdwg.mxu0
        %v3264 = vmax.f32 %v3153, 0.0
        %v3265 = vmax.f32 %v3155, 0.0
        %v3266 = vmax.f32 %v3226, 0.0
        %v3267 = vmax.f32 %v3228, 0.0
        %v3268 = vmax.f32 %v3157, 0.0
        %v3269 = vmax.f32 %v3159, 0.0
        %v3270 = vmax.f32 %v3230, 0.0
        %v3271 = vmax.f32 %v3232, 0.0
        %v3272 = vmax.f32 %v3163, 0.0
        %v3273 = vmax.f32 %v3165, 0.0
        %v3274 = vmax.f32 %v3236, 0.0
        %v3275 = vmax.f32 %v3238, 0.0
        %v3276 = vmax.f32 %v3167, 0.0
        %v3277 = vmax.f32 %v3169, 0.0
        %v3278 = vmax.f32 %v3240, 0.0
        %v3279 = vmax.f32 %v3242, 0.0
        %v3280 = vmax.f32 %v3173, 0.0
        %v3281 = vmax.f32 %v3175, 0.0
        %v3282 = vmax.f32 %v3246, 0.0
        %v3283 = vmax.f32 %v3248, 0.0
        %v3284 = vmax.f32 %v3177, 0.0
        %v3285 = vmax.f32 %v3179, 0.0
        %v3286 = vmax.f32 %v3250, 0.0
        %v3287 = vmax.f32 %v3252, 0.0
        %v3288 = vmax.f32 %v3183, 0.0
        %v3289 = vmax.f32 %v3185, 0.0
        %v3290 = vmax.f32 %v3256, 0.0
        %v3291 = vmax.f32 %v3258, 0.0
        %v3292 = vmax.f32 %v3187, 0.0
        %v3293 = vmax.f32 %v3189, 0.0
        %v3294 = vmax.f32 %v3260, 0.0
        %v3295 = vmax.f32 %v3262, 0.0
        %v3296 = vpack.c.bf16 %v3268, %v3264
        %v3297 = vpack.c.bf16 %v3269, %v3265
        %v3298 = vpack.c.bf16 %v3270, %v3266
        %v3299 = vpack.c.bf16 %v3271, %v3267
        %v3300 = vpack.c.bf16 %v3276, %v3272
        %v3301 = vpack.c.bf16 %v3277, %v3273
        %v3302 = vpack.c.bf16 %v3278, %v3274
        %v3303 = vpack.c.bf16 %v3279, %v3275
        %v3304 = vpack.c.bf16 %v3284, %v3280
        %v3305 = vpack.c.bf16 %v3285, %v3281
        %v3306 = vpack.c.bf16 %v3286, %v3282
        %v3307 = vpack.c.bf16 %v3287, %v3283
        %v3308 = vpack.c.bf16 %v3292, %v3288
        %v3309 = vpack.c.bf16 %v3293, %v3289
        %v3310 = vpack.c.bf16 %v3294, %v3290
        %v3311 = vpack.c.bf16 %v3295, %v3291
        %v3312 = vld [vmem:[%s349] sm:$0xff]
        %v3313 = vld [vmem:[%s349 + $0x8] sm:$0xff]
        %v3314 = vld [vmem:[%s349 + $0x10] sm:$0xff]
        %v3315 = vld [vmem:[%s349 + $0x18] sm:$0xff]
        %v3316 = vld [vmem:[%s349 + $0x20] sm:$0xff]
        %v3317 = vld [vmem:[%s349 + $0x28] sm:$0xff]
        %v3318 = vld [vmem:[%s349 + $0x30] sm:$0xff]
        %v3319 = vld [vmem:[%s349 + $0x38] sm:$0xff]
        %v3320 = vld [vmem:[%s349 + $0x40] sm:$0xff]
        %v3321 = vld [vmem:[%s349 + $0x48] sm:$0xff]
        %v3322 = vld [vmem:[%s349 + $0x50] sm:$0xff]
        %v3323 = vld [vmem:[%s349 + $0x58] sm:$0xff]
        %v3324 = vld [vmem:[%s349 + $0x60] sm:$0xff]
        %v3325 = vld [vmem:[%s349 + $0x68] sm:$0xff]
        %v3326 = vld [vmem:[%s349 + $0x70] sm:$0xff]
        %v3327 = vld [vmem:[%s349 + $0x78] sm:$0xff]
        %v3328 = vld [vmem:[%s349 + $0x80] sm:$0xff]
        %v3329 = vld [vmem:[%s349 + $0x88] sm:$0xff]
        %v3330 = vld [vmem:[%s349 + $0x90] sm:$0xff]
        %v3331 = vld [vmem:[%s349 + $0x98] sm:$0xff]
        %v3332 = vld [vmem:[%s349 + $0xa0] sm:$0xff]
        %v3333 = vld [vmem:[%s349 + $0xa8] sm:$0xff]
        %v3334 = vld [vmem:[%s349 + $0xb0] sm:$0xff]
        %v3335 = vld [vmem:[%s349 + $0xb8] sm:$0xff]
        %v3336 = vld [vmem:[%s349 + $0xc0] sm:$0xff]
        %v3337 = vld [vmem:[%s349 + $0xc8] sm:$0xff]
        %v3338 = vld [vmem:[%s349 + $0xd0] sm:$0xff]
        %v3339 = vld [vmem:[%s349 + $0xd8] sm:$0xff]
        %v3340 = vld [vmem:[%s349 + $0xe0] sm:$0xff]
        %v3341 = vld [vmem:[%s349 + $0xe8] sm:$0xff]
        %v3342 = vld [vmem:[%s349 + $0xf0] sm:$0xff]
        %v3343 = vld [vmem:[%s349 + $0xf8] sm:$0xff]
        %v3344 = vld [vmem:[%s349 + $0x100] sm:$0xff]
        %v3345 = vld [vmem:[%s349 + $0x108] sm:$0xff]
        %v3346 = vld [vmem:[%s349 + $0x110] sm:$0xff]
        %v3347 = vld [vmem:[%s349 + $0x118] sm:$0xff]
        %v3348 = vld [vmem:[%s349 + $0x120] sm:$0xff]
        %v3349 = vld [vmem:[%s349 + $0x128] sm:$0xff]
        %v3350 = vld [vmem:[%s349 + $0x130] sm:$0xff]
        %v3351 = vld [vmem:[%s349 + $0x138] sm:$0xff]
        %v3352 = vld [vmem:[%s349 + $0x140] sm:$0xff]
        %v3353 = vld [vmem:[%s349 + $0x148] sm:$0xff]
        %v3354 = vld [vmem:[%s349 + $0x150] sm:$0xff]
        %v3355 = vld [vmem:[%s349 + $0x158] sm:$0xff]
        %v3356 = vld [vmem:[%s349 + $0x160] sm:$0xff]
        %v3357 = vld [vmem:[%s349 + $0x168] sm:$0xff]
        %v3358 = vld [vmem:[%s349 + $0x170] sm:$0xff]
        %v3359 = vld [vmem:[%s349 + $0x178] sm:$0xff]
        %v3360 = vld [vmem:[%s349 + $0x180] sm:$0xff]
        %v3361 = vld [vmem:[%s349 + $0x188] sm:$0xff]
        %v3362 = vld [vmem:[%s349 + $0x190] sm:$0xff]
        %v3363 = vld [vmem:[%s349 + $0x198] sm:$0xff]
        %v3364 = vld [vmem:[%s349 + $0x1a0] sm:$0xff]
        %v3365 = vld [vmem:[%s349 + $0x1a8] sm:$0xff]
        %v3366 = vld [vmem:[%s349 + $0x1b0] sm:$0xff]
        %v3367 = vld [vmem:[%s349 + $0x1b8] sm:$0xff]
        %v3368 = vld [vmem:[%s349 + $0x1c0] sm:$0xff]
        %v3369 = vld [vmem:[%s349 + $0x1c8] sm:$0xff]
        %v3370 = vld [vmem:[%s349 + $0x1d0] sm:$0xff]
        %v3371 = vld [vmem:[%s349 + $0x1d8] sm:$0xff]
        %v3372 = vld [vmem:[%s349 + $0x1e0] sm:$0xff]
        %v3373 = vld [vmem:[%s349 + $0x1e8] sm:$0xff]
        %v3374 = vld [vmem:[%s349 + $0x1f0] sm:$0xff]
        %v3375 = vld [vmem:[%s349 + $0x1f8] sm:$0xff]
        %v3376 = vlaneseq
        %v3377 = vshrl.u32 %v3376, 7
        %v3378 = vsub.s32 5, %v3377
        %v3379 = vrot.slane %v482, %v3378
        %v3380 = vlaneseq
        %v3381 = vshrl.u32 %v3380, 7
        %v3382 = vsub.s32 5, %v3381
        %v3383 = vrot.slane %v483, %v3382
        %v3448 = vunpack.c.l.b16 %v3312
        %v3449 = vunpack.c.h.b16 %v3312
        %v3450 = vunpack.c.l.b16 %v3313
        %v3451 = vunpack.c.h.b16 %v3313
        %v3452 = vunpack.c.l.b16 %v3314
        %v3453 = vunpack.c.h.b16 %v3314
        %v3454 = vunpack.c.l.b16 %v3315
        %v3455 = vunpack.c.h.b16 %v3315
        %v3456 = vunpack.c.l.b16 %v3316
        %v3457 = vunpack.c.h.b16 %v3316
        %v3458 = vunpack.c.l.b16 %v3317
        %v3459 = vunpack.c.h.b16 %v3317
        %v3460 = vunpack.c.l.b16 %v3318
        %v3461 = vunpack.c.h.b16 %v3318
        %v3462 = vunpack.c.l.b16 %v3319
        %v3463 = vunpack.c.h.b16 %v3319
        %v3464 = vunpack.c.l.b16 %v3320
        %v3465 = vunpack.c.h.b16 %v3320
        %v3466 = vunpack.c.l.b16 %v3321
        %v3467 = vunpack.c.h.b16 %v3321
        %v3468 = vunpack.c.l.b16 %v3322
        %v3469 = vunpack.c.h.b16 %v3322
        %v3470 = vunpack.c.l.b16 %v3323
        %v3471 = vunpack.c.h.b16 %v3323
        %v3472 = vunpack.c.l.b16 %v3324
        %v3473 = vunpack.c.h.b16 %v3324
        %v3474 = vunpack.c.l.b16 %v3325
        %v3475 = vunpack.c.h.b16 %v3325
        %v3476 = vunpack.c.l.b16 %v3326
        %v3477 = vunpack.c.h.b16 %v3326
        %v3478 = vunpack.c.l.b16 %v3327
        %v3479 = vunpack.c.h.b16 %v3327
        %v3480 = vunpack.c.l.b16 %v3328
        %v3481 = vunpack.c.h.b16 %v3328
        %v3482 = vunpack.c.l.b16 %v3329
        %v3483 = vunpack.c.h.b16 %v3329
        %v3484 = vunpack.c.l.b16 %v3330
        %v3485 = vunpack.c.h.b16 %v3330
        %v3486 = vunpack.c.l.b16 %v3331
        %v3487 = vunpack.c.h.b16 %v3331
        %v3488 = vunpack.c.l.b16 %v3332
        %v3489 = vunpack.c.h.b16 %v3332
        %v3490 = vunpack.c.l.b16 %v3333
        %v3491 = vunpack.c.h.b16 %v3333
        %v3492 = vunpack.c.l.b16 %v3334
        %v3493 = vunpack.c.h.b16 %v3334
        %v3494 = vunpack.c.l.b16 %v3335
        %v3495 = vunpack.c.h.b16 %v3335
        %v3496 = vunpack.c.l.b16 %v3336
        %v3497 = vunpack.c.h.b16 %v3336
        %v3498 = vunpack.c.l.b16 %v3337
        %v3499 = vunpack.c.h.b16 %v3337
        %v3500 = vunpack.c.l.b16 %v3338
        %v3501 = vunpack.c.h.b16 %v3338
        %v3502 = vunpack.c.l.b16 %v3339
        %v3503 = vunpack.c.h.b16 %v3339
        %v3504 = vunpack.c.l.b16 %v3340
        %v3505 = vunpack.c.h.b16 %v3340
        %v3506 = vunpack.c.l.b16 %v3341
        %v3507 = vunpack.c.h.b16 %v3341
        %v3508 = vunpack.c.l.b16 %v3342
        %v3509 = vunpack.c.h.b16 %v3342
        %v3510 = vunpack.c.l.b16 %v3343
        %v3511 = vunpack.c.h.b16 %v3343
        %v3512 = vunpack.c.l.b16 %v3344
        %v3513 = vunpack.c.h.b16 %v3344
        %v3514 = vunpack.c.l.b16 %v3345
        %v3515 = vunpack.c.h.b16 %v3345
        %v3516 = vunpack.c.l.b16 %v3346
        %v3517 = vunpack.c.h.b16 %v3346
        %v3518 = vunpack.c.l.b16 %v3347
        %v3519 = vunpack.c.h.b16 %v3347
        %v3520 = vunpack.c.l.b16 %v3348
        %v3521 = vunpack.c.h.b16 %v3348
        %v3522 = vunpack.c.l.b16 %v3349
        %v3523 = vunpack.c.h.b16 %v3349
        %v3524 = vunpack.c.l.b16 %v3350
        %v3525 = vunpack.c.h.b16 %v3350
        %v3526 = vunpack.c.l.b16 %v3351
        %v3527 = vunpack.c.h.b16 %v3351
        %v3528 = vunpack.c.l.b16 %v3352
        %v3529 = vunpack.c.h.b16 %v3352
        %v3530 = vunpack.c.l.b16 %v3353
        %v3531 = vunpack.c.h.b16 %v3353
        %v3532 = vunpack.c.l.b16 %v3354
        %v3533 = vunpack.c.h.b16 %v3354
        %v3534 = vunpack.c.l.b16 %v3355
        %v3535 = vunpack.c.h.b16 %v3355
        %v3536 = vunpack.c.l.b16 %v3356
        %v3537 = vunpack.c.h.b16 %v3356
        %v3538 = vunpack.c.l.b16 %v3357
        %v3539 = vunpack.c.h.b16 %v3357
        %v3540 = vunpack.c.l.b16 %v3358
        %v3541 = vunpack.c.h.b16 %v3358
        %v3542 = vunpack.c.l.b16 %v3359
        %v3543 = vunpack.c.h.b16 %v3359
        %v3544 = vunpack.c.l.b16 %v3360
        %v3545 = vunpack.c.h.b16 %v3360
        %v3546 = vunpack.c.l.b16 %v3361
        %v3547 = vunpack.c.h.b16 %v3361
        %v3548 = vunpack.c.l.b16 %v3362
        %v3549 = vunpack.c.h.b16 %v3362
        %v3550 = vunpack.c.l.b16 %v3363
        %v3551 = vunpack.c.h.b16 %v3363
        %v3552 = vunpack.c.l.b16 %v3364
        %v3553 = vunpack.c.h.b16 %v3364
        %v3554 = vunpack.c.l.b16 %v3365
        %v3555 = vunpack.c.h.b16 %v3365
        %v3556 = vunpack.c.l.b16 %v3366
        %v3557 = vunpack.c.h.b16 %v3366
        %v3558 = vunpack.c.l.b16 %v3367
        %v3559 = vunpack.c.h.b16 %v3367
        %v3560 = vunpack.c.l.b16 %v3368
        %v3561 = vunpack.c.h.b16 %v3368
        %v3562 = vunpack.c.l.b16 %v3369
        %v3563 = vunpack.c.h.b16 %v3369
        %v3564 = vunpack.c.l.b16 %v3370
        %v3565 = vunpack.c.h.b16 %v3370
        %v3566 = vunpack.c.l.b16 %v3371
        %v3567 = vunpack.c.h.b16 %v3371
        %v3568 = vunpack.c.l.b16 %v3372
        %v3569 = vunpack.c.h.b16 %v3372
        %v3570 = vunpack.c.l.b16 %v3373
        %v3571 = vunpack.c.h.b16 %v3373
        %v3572 = vunpack.c.l.b16 %v3374
        %v3573 = vunpack.c.h.b16 %v3374
        %v3574 = vunpack.c.l.b16 %v3375
        %v3575 = vunpack.c.h.b16 %v3375
        %v3576 = vpack.c.b16 %v3450, %v3448
        %v3577 = vpack.c.b16 %v3451, %v3449
        %v3578 = vpack.c.b16 %v3454, %v3452
        %v3579 = vpack.c.b16 %v3455, %v3453
        %v3580 = vpack.c.b16 %v3458, %v3456
        %v3581 = vpack.c.b16 %v3459, %v3457
        %v3582 = vpack.c.b16 %v3462, %v3460
        %v3583 = vpack.c.b16 %v3463, %v3461
        %v3584 = vpack.c.b16 %v3466, %v3464
        %v3585 = vpack.c.b16 %v3467, %v3465
        %v3586 = vpack.c.b16 %v3470, %v3468
        %v3587 = vpack.c.b16 %v3471, %v3469
        %v3588 = vpack.c.b16 %v3474, %v3472
        %v3589 = vpack.c.b16 %v3475, %v3473
        %v3590 = vpack.c.b16 %v3478, %v3476
        %v3591 = vpack.c.b16 %v3479, %v3477
        %v3592 = vpack.c.b16 %v3482, %v3480
        %v3593 = vpack.c.b16 %v3483, %v3481
        %v3594 = vpack.c.b16 %v3486, %v3484
        %v3595 = vpack.c.b16 %v3487, %v3485
        %v3596 = vpack.c.b16 %v3490, %v3488
        %v3597 = vpack.c.b16 %v3491, %v3489
        %v3598 = vpack.c.b16 %v3494, %v3492
        %v3599 = vpack.c.b16 %v3495, %v3493
        %v3600 = vpack.c.b16 %v3498, %v3496
        %v3601 = vpack.c.b16 %v3499, %v3497
        %v3602 = vpack.c.b16 %v3502, %v3500
        %v3603 = vpack.c.b16 %v3503, %v3501
        %v3604 = vpack.c.b16 %v3506, %v3504
        %v3605 = vpack.c.b16 %v3507, %v3505
        %v3606 = vpack.c.b16 %v3510, %v3508
        %v3607 = vpack.c.b16 %v3511, %v3509
        %v3608 = vpack.c.b16 %v3514, %v3512
        %v3609 = vpack.c.b16 %v3515, %v3513
        %v3610 = vpack.c.b16 %v3518, %v3516
        %v3611 = vpack.c.b16 %v3519, %v3517
        %v3612 = vpack.c.b16 %v3522, %v3520
        %v3613 = vpack.c.b16 %v3523, %v3521
        %v3614 = vpack.c.b16 %v3526, %v3524
        %v3615 = vpack.c.b16 %v3527, %v3525
        %v3616 = vpack.c.b16 %v3530, %v3528
        %v3617 = vpack.c.b16 %v3531, %v3529
        %v3618 = vpack.c.b16 %v3534, %v3532
        %v3619 = vpack.c.b16 %v3535, %v3533
        %v3620 = vpack.c.b16 %v3538, %v3536
        %v3621 = vpack.c.b16 %v3539, %v3537
        %v3622 = vpack.c.b16 %v3542, %v3540
        %v3623 = vpack.c.b16 %v3543, %v3541
        %v3624 = vpack.c.b16 %v3546, %v3544
        %v3625 = vpack.c.b16 %v3547, %v3545
        %v3626 = vpack.c.b16 %v3550, %v3548
        %v3627 = vpack.c.b16 %v3551, %v3549
        %v3628 = vpack.c.b16 %v3554, %v3552
        %v3629 = vpack.c.b16 %v3555, %v3553
        %v3630 = vpack.c.b16 %v3558, %v3556
        %v3631 = vpack.c.b16 %v3559, %v3557
        %v3632 = vpack.c.b16 %v3562, %v3560
        %v3633 = vpack.c.b16 %v3563, %v3561
        %v3634 = vpack.c.b16 %v3566, %v3564
        %v3635 = vpack.c.b16 %v3567, %v3565
        %v3636 = vpack.c.b16 %v3570, %v3568
        %v3637 = vpack.c.b16 %v3571, %v3569
        %v3638 = vpack.c.b16 %v3574, %v3572
        %v3639 = vpack.c.b16 %v3575, %v3573
        %3704 = vmatprep.subr.bf16.mxu0 %v3577
        %3705 = vmatpush1.bf16.msra.mxu0 %v3576
        %3706 = vmatprep.subr.bf16.mxu0 %v3579
        %3707 = vmatpush1.bf16.msra.mxu0 %v3578
        %3708 = vmatprep.subr.bf16.mxu0 %v3581
        %3709 = vmatpush1.bf16.msra.mxu0 %v3580
        %3710 = vmatprep.subr.bf16.mxu0 %v3583
        %3711 = vmatpush1.bf16.msra.mxu0 %v3582
        %3712 = vmatprep.subr.bf16.mxu0 %v3585
        %3713 = vmatpush1.bf16.msra.mxu0 %v3584
        %3714 = vmatprep.subr.bf16.mxu0 %v3587
        %3715 = vmatpush1.bf16.msra.mxu0 %v3586
        %3716 = vmatprep.subr.bf16.mxu0 %v3589
        %3717 = vmatpush1.bf16.msra.mxu0 %v3588
        %3718 = vmatprep.subr.bf16.mxu0 %v3591
        %3719 = vmatpush1.bf16.msra.mxu0 %v3590
        %3720 = vmatprep.subr.bf16.mxu0 %v3593
        %3721 = vmatpush1.bf16.msra.mxu0 %v3592
        %3722 = vmatprep.subr.bf16.mxu0 %v3595
        %3723 = vmatpush1.bf16.msra.mxu0 %v3594
        %3724 = vmatprep.subr.bf16.mxu0 %v3597
        %3725 = vmatpush1.bf16.msra.mxu0 %v3596
        %3726 = vmatprep.subr.bf16.mxu0 %v3599
        %3727 = vmatpush1.bf16.msra.mxu0 %v3598
        %3728 = vmatprep.subr.bf16.mxu0 %v3601
        %3729 = vmatpush1.bf16.msra.mxu0 %v3600
        %3730 = vmatprep.subr.bf16.mxu0 %v3603
        %3731 = vmatpush1.bf16.msra.mxu0 %v3602
        %3732 = vmatprep.subr.bf16.mxu0 %v3605
        %3733 = vmatpush1.bf16.msra.mxu0 %v3604
        %3734 = vmatprep.subr.bf16.mxu0 %v3607
        %3735 = vmatpush1.bf16.msra.mxu0 %v3606
        %3736 = vmatprep.mubr.bf16.mxu0 %v3297
        %3737 = vmatmul.mubr.bf16.gmra.mrb[0].mxu0 %v3296
        %v3738 = vpop.f32.mrb[0].mxu0
        %v3739 = vadd.f32 %v3379, %v3738
        %v3740 = vpop.f32.mrb[0].mxu0
        %v3741 = vadd.f32 %v3383, %v3740
        %v3742 = vpop.f32.mrb[0].mxu0
        %v3743 = vadd.f32 %v3379, %v3742
        %v3744 = vpop.f32.mrb[0].mxu0
        %v3745 = vadd.f32 %v3383, %v3744
        %3746 = vmatprep.mubr.bf16.mxu0 %v3301
        %3747 = vmatmul.mubr.bf16.gmra.mrb[0].mxu0 %v3300
        %v3748 = vpop.f32.mrb[0].mxu0
        %v3749 = vadd.f32 %v3379, %v3748
        %v3750 = vpop.f32.mrb[0].mxu0
        %v3751 = vadd.f32 %v3383, %v3750
        %v3752 = vpop.f32.mrb[0].mxu0
        %v3753 = vadd.f32 %v3379, %v3752
        %v3754 = vpop.f32.mrb[0].mxu0
        %v3755 = vadd.f32 %v3383, %v3754
        %3756 = vmatprep.mubr.bf16.mxu0 %v3305
        %3757 = vmatmul.mubr.bf16.gmra.mrb[0].mxu0 %v3304
        %v3758 = vpop.f32.mrb[0].mxu0
        %v3759 = vadd.f32 %v3379, %v3758
        %v3760 = vpop.f32.mrb[0].mxu0
        %v3761 = vadd.f32 %v3383, %v3760
        %v3762 = vpop.f32.mrb[0].mxu0
        %v3763 = vadd.f32 %v3379, %v3762
        %v3764 = vpop.f32.mrb[0].mxu0
        %v3765 = vadd.f32 %v3383, %v3764
        %3766 = vmatprep.mubr.bf16.mxu0 %v3309
        %3767 = vmatmul.mubr.bf16.gmra.mrb[0].mxu0 %v3308
        %v3768 = vpop.f32.mrb[0].mxu0
        %v3769 = vadd.f32 %v3379, %v3768
        %v3770 = vpop.f32.mrb[0].mxu0
        %v3771 = vadd.f32 %v3383, %v3770
        %v3772 = vpop.f32.mrb[0].mxu0
        %v3773 = vadd.f32 %v3379, %v3772
        %v3774 = vpop.f32.mrb[0].mxu0
        %v3775 = vadd.f32 %v3383, %v3774
        %3776 = vdwg.mxu0
        %3777 = vmatprep.subr.bf16.mxu0 %v3609
        %3778 = vmatpush1.bf16.msra.mxu0 %v3608
        %3779 = vmatprep.subr.bf16.mxu0 %v3611
        %3780 = vmatpush1.bf16.msra.mxu0 %v3610
        %3781 = vmatprep.subr.bf16.mxu0 %v3613
        %3782 = vmatpush1.bf16.msra.mxu0 %v3612
        %3783 = vmatprep.subr.bf16.mxu0 %v3615
        %3784 = vmatpush1.bf16.msra.mxu0 %v3614
        %3785 = vmatprep.subr.bf16.mxu0 %v3617
        %3786 = vmatpush1.bf16.msra.mxu0 %v3616
        %3787 = vmatprep.subr.bf16.mxu0 %v3619
        %3788 = vmatpush1.bf16.msra.mxu0 %v3618
        %3789 = vmatprep.subr.bf16.mxu0 %v3621
        %3790 = vmatpush1.bf16.msra.mxu0 %v3620
        %3791 = vmatprep.subr.bf16.mxu0 %v3623
        %3792 = vmatpush1.bf16.msra.mxu0 %v3622
        %3793 = vmatprep.subr.bf16.mxu0 %v3625
        %3794 = vmatpush1.bf16.msra.mxu0 %v3624
        %3795 = vmatprep.subr.bf16.mxu0 %v3627
        %3796 = vmatpush1.bf16.msra.mxu0 %v3626
        %3797 = vmatprep.subr.bf16.mxu0 %v3629
        %3798 = vmatpush1.bf16.msra.mxu0 %v3628
        %3799 = vmatprep.subr.bf16.mxu0 %v3631
        %3800 = vmatpush1.bf16.msra.mxu0 %v3630
        %3801 = vmatprep.subr.bf16.mxu0 %v3633
        %3802 = vmatpush1.bf16.msra.mxu0 %v3632
        %3803 = vmatprep.subr.bf16.mxu0 %v3635
        %3804 = vmatpush1.bf16.msra.mxu0 %v3634
        %3805 = vmatprep.subr.bf16.mxu0 %v3637
        %3806 = vmatpush1.bf16.msra.mxu0 %v3636
        %3807 = vmatprep.subr.bf16.mxu0 %v3639
        %3808 = vmatpush1.bf16.msra.mxu0 %v3638
        %3809 = vmatprep.mubr.bf16.mxu0 %v3299
        %3810 = vmatmul.mubr.bf16.gmra.mrb[0].mxu0 %v3298
        %v3811 = vpop.f32.mrb[0].mxu0
        %v3812 = vadd.f32 %v3739, %v3811
        %v3813 = vpop.f32.mrb[0].mxu0
        %v3814 = vadd.f32 %v3741, %v3813
        %v3815 = vpop.f32.mrb[0].mxu0
        %v3816 = vadd.f32 %v3743, %v3815
        %v3817 = vpop.f32.mrb[0].mxu0
        %v3818 = vadd.f32 %v3745, %v3817
        %3819 = vmatprep.mubr.bf16.mxu0 %v3303
        %3820 = vmatmul.mubr.bf16.gmra.mrb[0].mxu0 %v3302
        %v3821 = vpop.f32.mrb[0].mxu0
        %v3822 = vadd.f32 %v3749, %v3821
        %v3823 = vpop.f32.mrb[0].mxu0
        %v3824 = vadd.f32 %v3751, %v3823
        %v3825 = vpop.f32.mrb[0].mxu0
        %v3826 = vadd.f32 %v3753, %v3825
        %v3827 = vpop.f32.mrb[0].mxu0
        %v3828 = vadd.f32 %v3755, %v3827
        %3829 = vmatprep.mubr.bf16.mxu0 %v3307
        %3830 = vmatmul.mubr.bf16.gmra.mrb[0].mxu0 %v3306
        %v3831 = vpop.f32.mrb[0].mxu0
        %v3832 = vadd.f32 %v3759, %v3831
        %v3833 = vpop.f32.mrb[0].mxu0
        %v3834 = vadd.f32 %v3761, %v3833
        %v3835 = vpop.f32.mrb[0].mxu0
        %v3836 = vadd.f32 %v3763, %v3835
        %v3837 = vpop.f32.mrb[0].mxu0
        %v3838 = vadd.f32 %v3765, %v3837
        %3839 = vmatprep.mubr.bf16.mxu0 %v3311
        %3840 = vmatmul.mubr.bf16.gmra.mrb[0].mxu0 %v3310
        %v3841 = vpop.f32.mrb[0].mxu0
        %v3842 = vadd.f32 %v3769, %v3841
        %v3843 = vpop.f32.mrb[0].mxu0
        %v3844 = vadd.f32 %v3771, %v3843
        %v3845 = vpop.f32.mrb[0].mxu0
        %v3846 = vadd.f32 %v3773, %v3845
        %v3847 = vpop.f32.mrb[0].mxu0
        %v3848 = vadd.f32 %v3775, %v3847
        %3849 = vdwg.mxu0
        %v3850 = vadd.f32 %v2694, %v3812
        %v3851 = vadd.f32 %v2695, %v3814
        %v3852 = vadd.f32 %v2696, %v3816
        %v3853 = vadd.f32 %v2697, %v3818
        %v3854 = vadd.f32 %v2698, %v3822
        %v3855 = vadd.f32 %v2699, %v3824
        %v3856 = vadd.f32 %v2700, %v3826
        %v3857 = vadd.f32 %v2701, %v3828
        %v3858 = vadd.f32 %v2702, %v3832
        %v3859 = vadd.f32 %v2703, %v3834
        %v3860 = vadd.f32 %v2704, %v3836
        %v3861 = vadd.f32 %v2705, %v3838
        %v3862 = vadd.f32 %v2706, %v3842
        %v3863 = vadd.f32 %v2707, %v3844
        %v3864 = vadd.f32 %v2708, %v3846
        %v3865 = vadd.f32 %v2709, %v3848
        %v3866 = vadd.f32 %v3850, %v3851
        %3867 = vadd.xlane.f32.xlu0 %v3866
        %v3868 = vpop.xlane.xlu0 %3867
        %v3869 = vadd.f32 %v3852, %v3853
        %3870 = vadd.xlane.f32.xlu0 %v3869
        %v3871 = vpop.xlane.xlu0 %3870
        %v3872 = vadd.f32 %v3854, %v3855
        %3873 = vadd.xlane.f32.xlu0 %v3872
        %v3874 = vpop.xlane.xlu0 %3873
        %v3875 = vadd.f32 %v3856, %v3857
        %3876 = vadd.xlane.f32.xlu0 %v3875
        %v3877 = vpop.xlane.xlu0 %3876
        %v3878 = vadd.f32 %v3858, %v3859
        %3879 = vadd.xlane.f32.xlu0 %v3878
        %v3880 = vpop.xlane.xlu0 %3879
        %v3881 = vadd.f32 %v3860, %v3861
        %3882 = vadd.xlane.f32.xlu0 %v3881
        %v3883 = vpop.xlane.xlu0 %3882
        %v3884 = vadd.f32 %v3862, %v3863
        %3885 = vadd.xlane.f32.xlu0 %v3884
        %v3886 = vpop.xlane.xlu0 %3885
        %v3887 = vadd.f32 %v3864, %v3865
        %3888 = vadd.xlane.f32.xlu0 %v3887
        %v3889 = vpop.xlane.xlu0 %3888
        %v3890 = vmul.f32 %v3868, %v2557
        %v3891 = vmul.f32 %v3871, %v2557
        %v3892 = vmul.f32 %v3874, %v2557
        %v3893 = vmul.f32 %v3877, %v2557
        %v3894 = vmul.f32 %v3880, %v2557
        %v3895 = vmul.f32 %v3883, %v2557
        %v3896 = vmul.f32 %v3886, %v2557
        %v3897 = vmul.f32 %v3889, %v2557
        %v3898 = vsub.f32 %v3850, %v3890
        %v3899 = vsub.f32 %v3851, %v3890
        %v3900 = vsub.f32 %v3852, %v3891
        %v3901 = vsub.f32 %v3853, %v3891
        %v3902 = vsub.f32 %v3854, %v3892
        %v3903 = vsub.f32 %v3855, %v3892
        %v3904 = vsub.f32 %v3856, %v3893
        %v3905 = vsub.f32 %v3857, %v3893
        %v3906 = vsub.f32 %v3858, %v3894
        %v3907 = vsub.f32 %v3859, %v3894
        %v3908 = vsub.f32 %v3860, %v3895
        %v3909 = vsub.f32 %v3861, %v3895
        %v3910 = vsub.f32 %v3862, %v3896
        %v3911 = vsub.f32 %v3863, %v3896
        %v3912 = vsub.f32 %v3864, %v3897
        %v3913 = vsub.f32 %v3865, %v3897
        %v3914 = vmul.f32 %v3898, %v3898
        %v3915 = vmul.f32 %v3899, %v3899
        %v3916 = vmul.f32 %v3900, %v3900
        %v3917 = vmul.f32 %v3901, %v3901
        %v3918 = vmul.f32 %v3902, %v3902
        %v3919 = vmul.f32 %v3903, %v3903
        %v3920 = vmul.f32 %v3904, %v3904
        %v3921 = vmul.f32 %v3905, %v3905
        %v3922 = vmul.f32 %v3906, %v3906
        %v3923 = vmul.f32 %v3907, %v3907
        %v3924 = vmul.f32 %v3908, %v3908
        %v3925 = vmul.f32 %v3909, %v3909
        %v3926 = vmul.f32 %v3910, %v3910
        %v3927 = vmul.f32 %v3911, %v3911
        %v3928 = vmul.f32 %v3912, %v3912
        %v3929 = vmul.f32 %v3913, %v3913
        %v3930 = vadd.f32 %v3914, %v3915
        %3931 = vadd.xlane.f32.xlu0 %v3930
        %v3932 = vpop.xlane.xlu0 %3931
        %v3933 = vadd.f32 %v3916, %v3917
        %3934 = vadd.xlane.f32.xlu0 %v3933
        %v3935 = vpop.xlane.xlu0 %3934
        %v3936 = vadd.f32 %v3918, %v3919
        %3937 = vadd.xlane.f32.xlu0 %v3936
        %v3938 = vpop.xlane.xlu0 %3937
        %v3939 = vadd.f32 %v3920, %v3921
        %3940 = vadd.xlane.f32.xlu0 %v3939
        %v3941 = vpop.xlane.xlu0 %3940
        %v3942 = vadd.f32 %v3922, %v3923
        %3943 = vadd.xlane.f32.xlu0 %v3942
        %v3944 = vpop.xlane.xlu0 %3943
        %v3945 = vadd.f32 %v3924, %v3925
        %3946 = vadd.xlane.f32.xlu0 %v3945
        %v3947 = vpop.xlane.xlu0 %3946
        %v3948 = vadd.f32 %v3926, %v3927
        %3949 = vadd.xlane.f32.xlu0 %v3948
        %v3950 = vpop.xlane.xlu0 %3949
        %v3951 = vadd.f32 %v3928, %v3929
        %3952 = vadd.xlane.f32.xlu0 %v3951
        %v3953 = vpop.xlane.xlu0 %3952
        %v3954 = vmul.f32 %v3932, %v2557
        %v3955 = vmul.f32 %v3935, %v2557
        %v3956 = vmul.f32 %v3938, %v2557
        %v3957 = vmul.f32 %v3941, %v2557
        %v3958 = vmul.f32 %v3944, %v2557
        %v3959 = vmul.f32 %v3947, %v2557
        %v3960 = vmul.f32 %v3950, %v2557
        %v3961 = vmul.f32 %v3953, %v2557
        %v3962 = vadd.f32 %v3954, 1e-05
        %v3963 = vadd.f32 %v3955, 1e-05
        %v3964 = vadd.f32 %v3956, 1e-05
        %v3965 = vadd.f32 %v3957, 1e-05
        %v3966 = vadd.f32 %v3958, 1e-05
        %v3967 = vadd.f32 %v3959, 1e-05
        %v3968 = vadd.f32 %v3960, 1e-05
        %v3969 = vadd.f32 %v3961, 1e-05
        %v3970 = vrsqrt.pop %v3962
        %v3971 = vrsqrt.pop %v3963
        %v3972 = vrsqrt.pop %v3964
        %v3973 = vrsqrt.pop %v3965
        %v3974 = vrsqrt.pop %v3966
        %v3975 = vrsqrt.pop %v3967
        %v3976 = vrsqrt.pop %v3968
        %v3977 = vrsqrt.pop %v3969
        %v3978 = vmul.f32 %v3898, %v3970
        %v3979 = vmul.f32 %v3899, %v3970
        %v3980 = vmul.f32 %v3900, %v3971
        %v3981 = vmul.f32 %v3901, %v3971
        %v3982 = vmul.f32 %v3902, %v3972
        %v3983 = vmul.f32 %v3903, %v3972
        %v3984 = vmul.f32 %v3904, %v3973
        %v3985 = vmul.f32 %v3905, %v3973
        %v3986 = vmul.f32 %v3906, %v3974
        %v3987 = vmul.f32 %v3907, %v3974
        %v3988 = vmul.f32 %v3908, %v3975
        %v3989 = vmul.f32 %v3909, %v3975
        %v3990 = vmul.f32 %v3910, %v3976
        %v3991 = vmul.f32 %v3911, %v3976
        %v3992 = vmul.f32 %v3912, %v3977
        %v3993 = vmul.f32 %v3913, %v3977
        %v3994 = vlaneseq
        %v3995 = vshrl.u32 %v3994, 7
        %v3996 = vsub.s32 6, %v3995
        %v3997 = vrot.slane %v482, %v3996
        %v3998 = vlaneseq
        %v3999 = vshrl.u32 %v3998, 7
        %v4000 = vsub.s32 6, %v3999
        %v4001 = vrot.slane %v483, %v4000
        %v4002 = vmul.f32 %v3978, %v3997
        %v4003 = vmul.f32 %v3979, %v4001
        %v4004 = vmul.f32 %v3980, %v3997
        %v4005 = vmul.f32 %v3981, %v4001
        %v4006 = vmul.f32 %v3982, %v3997
        %v4007 = vmul.f32 %v3983, %v4001
        %v4008 = vmul.f32 %v3984, %v3997
        %v4009 = vmul.f32 %v3985, %v4001
        %v4010 = vmul.f32 %v3986, %v3997
        %v4011 = vmul.f32 %v3987, %v4001
        %v4012 = vmul.f32 %v3988, %v3997
        %v4013 = vmul.f32 %v3989, %v4001
        %v4014 = vmul.f32 %v3990, %v3997
        %v4015 = vmul.f32 %v3991, %v4001
        %v4016 = vmul.f32 %v3992, %v3997
        %v4017 = vmul.f32 %v3993, %v4001
        %v4018 = vlaneseq
        %v4019 = vshrl.u32 %v4018, 7
        %v4020 = vsub.s32 7, %v4019
        %v4021 = vrot.slane %v482, %v4020
        %v4022 = vlaneseq
        %v4023 = vshrl.u32 %v4022, 7
        %v4024 = vsub.s32 7, %v4023
        %v4025 = vrot.slane %v483, %v4024
        %v4026 = vadd.f32 %v4002, %v4021
        %v4027 = vadd.f32 %v4003, %v4025
        %v4028 = vadd.f32 %v4004, %v4021
        %v4029 = vadd.f32 %v4005, %v4025
        %v4030 = vadd.f32 %v4006, %v4021
        %v4031 = vadd.f32 %v4007, %v4025
        %v4032 = vadd.f32 %v4008, %v4021
        %v4033 = vadd.f32 %v4009, %v4025
        %v4034 = vadd.f32 %v4010, %v4021
        %v4035 = vadd.f32 %v4011, %v4025
        %v4036 = vadd.f32 %v4012, %v4021
        %v4037 = vadd.f32 %v4013, %v4025
        %v4038 = vadd.f32 %v4014, %v4021
        %v4039 = vadd.f32 %v4015, %v4025
        %v4040 = vadd.f32 %v4016, %v4021
        %v4041 = vadd.f32 %v4017, %v4025
        %4042 = vst [vmem:[%s427] sm:$0xff] %v4026
        %4043 = vst [vmem:[%s427 + $0x8] sm:$0xff] %v4027
        %4044 = vst [vmem:[%s427 + $0x10] sm:$0xff] %v4028
        %4045 = vst [vmem:[%s427 + $0x18] sm:$0xff] %v4029
        %4046 = vst [vmem:[%s427 + $0x20] sm:$0xff] %v4030
        %4047 = vst [vmem:[%s427 + $0x28] sm:$0xff] %v4031
        %4048 = vst [vmem:[%s427 + $0x30] sm:$0xff] %v4032
        %4049 = vst [vmem:[%s427 + $0x38] sm:$0xff] %v4033
        %4050 = vst [vmem:[%s427 + $0x40] sm:$0xff] %v4034
        %4051 = vst [vmem:[%s427 + $0x48] sm:$0xff] %v4035
        %4052 = vst [vmem:[%s427 + $0x50] sm:$0xff] %v4036
        %4053 = vst [vmem:[%s427 + $0x58] sm:$0xff] %v4037
        %4054 = vst [vmem:[%s427 + $0x60] sm:$0xff] %v4038
        %4055 = vst [vmem:[%s427 + $0x68] sm:$0xff] %v4039
        %4056 = vst [vmem:[%s427 + $0x70] sm:$0xff] %v4040
        %4057 = vst [vmem:[%s427 + $0x78] sm:$0xff] %v4041
        %s4058 = smul.u32 4, %s27
        %p4059 = scmp.lt.s32.totalorder %s4058, 3
        %s4060 = scalar_select %p4059, %s4058, 3
        %s4061 = smul.addr %s4060, 4
        %s4062 = smul.addr %s4061, 8
        %s4063 = scalar_lea.vmem %s6, %s4062
        // Predicated region
        $region61: #{transformer_forward.2} parent=43 // pred_check
          %p4064 = pneg %p209
        $region62: #{transformer_forward.2} parent=43 // pred_check_branch
          %4066 = sbr.rel (%p4064) target = $region64
        $region63: #{transformer_forward.2} parent=43 // pred_region
          %s4067 = smul.u32 4, %s27
        $region64: #{transformer_forward.2} parent=43 // pred_fallthru
          _
        // Predicated region
        $region65: #{transformer_forward.2} parent=43 // pred_check
          %p4068 = pneg %p209
        $region66: #{transformer_forward.2} parent=43 // pred_check_branch
          %4070 = sbr.rel (%p4068) target = $region68
        $region67: #{transformer_forward.2} parent=43 // pred_region
          %s4071 = smul.u32 4, %s27
          %p4072 = scmp.lt.s32.totalorder %s4071, 3
          %s4073 = scalar_select %p4072, %s4071, 3
          %s4074 = smul.addr %s4073, 4
          %s4075 = smul.addr %s4074, 8
          %s4076 = scalar_lea.vmem %s6, %s4075
        $region68: #{transformer_forward.2} parent=43 // pred_fallthru
          _
      $region44: #{transformer_forward.2} parent=5 // pred_fallthru
        _
      %p4077 = scmp.le.s32.totalorder 2, %s18
      // Predicated region
      $region69: #{transformer_forward.2} parent=5 // pred_check
        %p4078 = pneg %p4077
      $region70: #{transformer_forward.2} parent=5 // pred_check_branch
        %4080 = sbr.rel (%p4078) target = $region72
      $region71: #{transformer_forward.2} parent=5 // pred_region
        %s4081 = ssub.s32 %s18, 2
      $region72: #{transformer_forward.2} parent=5 // pred_fallthru
        _
    $region6: #{transformer_forward.2} parent=1 // loop_footer
      %s22 = sadd.s32 1, %s18
    $region7: #{transformer_forward.2} parent=1 // loop_footer_branch
      %17 = sbr.rel target = $region3
    $region8: #{transformer_forward.2} parent=1 // loop_exit
      _
    %4082 = vsyncpa [#allocation4], 1
    %s4083 = scalar_lea.sflag [#allocation4], 1
    %4084 = vsyncpa %s4083, 1
    %4085 = vsyncpa [#allocation6], 1
    %s4086 = scalar_lea.sflag [#allocation6], 1
    %4087 = vsyncpa %s4086, 1

</llo_original>
